<compile_context>
chip_gen: v5e
topology: v5e:2x2
jax: 0.10.0
libtpu: 0.0.40
codegen_flags: <defaults>
</compile_context>

<pallas_src>
import functools

import jax
import jax.numpy as jnp
from jax.experimental import pallas as pl
from jax.experimental.pallas import tpu as pltpu

LANE = 128          # TPU lane width; channel padding target
MAX_TILE_M = 256    # cap on flattened output rows per grid step


def _round_up(x, m):
    return (x + m - 1) // m * m


def _pick_co_tile(cout_p):
    # 256-wide N fills the v6e/v7x MXU; 128 already saturates v5e's 4x128x128.
    if cout_p <= 256:
        return cout_p
    return 256 if cout_p % 256 == 0 else LANE


def _choose_tile_m(mfull):
    k = -(-mfull // MAX_TILE_M)            # number of M tiles
    return _round_up(-(-mfull // k), 8)    # multiple of 8, minimal padding


# ----------------------------------------------------------------------------
# Flattened phase-plane construction + static conv geometry
# ----------------------------------------------------------------------------
def _build_planes(x, kh, kw, stride, padding):
    """x: (N,H,W,Cp) NHWC, channels already padded to a LANE multiple.
    Returns (planes, geom):
      planes: (N, s*s, lflat_p, Cp) bf16 phase-split, flattened, zero-padded.
      geom:   static conv geometry + per-(phase, tap-row) load groups."""
    n, h, w, cp = x.shape
    s = stride
    ho = (h + 2 * padding - kh) // s + 1
    wo = (w + 2 * padding - kw) // s + 1
    ow = (kw - 1) // s
    wq = wo + ow                          # output row stride incl. spill cols
    mfull = ho * wq                       # valid flattened output rows
    tile_m = _choose_tile_m(mfull)
    mfull_p = _round_up(mfull, tile_m)

    # tap table grouped by (phase, tap-row): one 8-aligned bf16 row window per
    # group, one MXU matmul + static f32 shift per tap inside the group.
    by_group = {}
    for t, (di, dj) in enumerate((i, j) for i in range(kh) for j in range(kw)):
        phase = (di % s) * s + (dj % s)
        by_group.setdefault((phase, di // s), []).append((t, dj // s))
    groups = []
    lflat_need = mfull_p
    for (phase, dr), taps in sorted(by_group.items()):
        row_base = dr * wq
        base = row_base // 8 * 8          # 8-aligned static part of the start
        rem = row_base - base
        ow_g = max(c for _, c in taps)
        row_cnt = _round_up(rem + tile_m + ow_g, 8)
        groups.append((phase, base, row_cnt,
                       tuple((t, rem + c) for t, c in taps)))
        lflat_need = max(lflat_need, (mfull_p - tile_m) + base + row_cnt)
    lflat_p = _round_up(lflat_need, 8)

    xp = jnp.pad(x, ((0, 0), (padding, padding), (padding, padding), (0, 0)))

    def to_plane(sub):
        ww = sub.shape[2]
        if ww > wq:
            sub = sub[:, :, :wq, :]
        else:
            sub = jnp.pad(sub, ((0, 0), (0, 0), (0, wq - ww), (0, 0)))
        flat = sub.reshape(n, sub.shape[1] * wq, cp)
        length = flat.shape[1]
        if length >= lflat_p:
            return flat[:, :lflat_p, :]
        return jnp.pad(flat, ((0, 0), (0, lflat_p - length), (0, 0)))

    if s == 1:                                            # no phase gather
        planes = to_plane(xp)[:, None]
    else:
        planes = jnp.stack([to_plane(xp[:, pi::s, pj::s, :])
                            for pi in range(s) for pj in range(s)], axis=1)
    planes = planes.astype(jnp.bfloat16)

    geom = dict(ho=ho, wo=wo, wq=wq, mfull=mfull, mfull_p=mfull_p,
                tile_m=tile_m, lflat_p=lflat_p, n_phase=s * s,
                groups=tuple(groups), cin_p=cp)
    return planes, geom


def _fold_bn(weight, bn, cin_p, cout_p, eps=1e-5):
    """Fold (inference) BatchNorm into the conv weight; return bf16 weight
    reshaped to (kh*kw, cin_p, cout_p) and an f32 (1, cout_p) bias."""
    gamma, beta, mean, var = bn
    scale = gamma * jax.lax.rsqrt(var + eps)
    kh, kw, cin, cout = weight.shape
    wf = weight * scale[None, None, None, :]
    wf = jnp.pad(wf, ((0, 0), (0, 0), (0, cin_p - cin), (0, cout_p - cout)))
    wf = wf.reshape(kh * kw, cin_p, cout_p).astype(jnp.bfloat16)
    bias = jnp.pad(beta - mean * scale, (0, cout_p - cout))
    return wf, bias.reshape(1, cout_p).astype(jnp.float32)


# ----------------------------------------------------------------------------
# Pallas kernel: conv (shifted sub-matmuls) + folded-BN bias
#                [+ fused 1x1-conv / identity shortcut] [+ ReLU]
# ----------------------------------------------------------------------------
def _conv_kernel(*refs, groups, tile_m, apply_relu, sc_mode, sc_slice):
    if sc_mode == "matmul":
        x_ref, w_ref, b_ref, scp_ref, scw_ref, o_ref, acc_ref = refs
    elif sc_mode == "add":
        x_ref, w_ref, b_ref, scp_ref, o_ref, acc_ref = refs
        scw_ref = None
    else:
        x_ref, w_ref, b_ref, o_ref, acc_ref = refs
        scp_ref = scw_ref = None

    m0 = pl.multiple_of(pl.program_id(2) * tile_m, 8)

    # conv taps: one 8-aligned bf16 row window per (phase, tap-row) group, one
    # MXU matmul + static f32 shift per tap, accumulated in VMEM scratch.
    for g_idx, (phase, base, row_cnt, taps) in enumerate(groups):
        x_rows = x_ref[0, phase, pl.ds(m0 + base, row_cnt), :]
        part = None
        for t, shift in taps:
            prod = jnp.dot(x_rows, w_ref[t], preferred_element_type=jnp.float32)
            prod = prod[shift:shift + tile_m, :]
            part = prod if part is None else part + prod
        if g_idx == 0:
            acc_ref[...] = part
        else:
            acc_ref[...] += part

    out = acc_ref[...] + b_ref[...]                       # folded-BN bias

    if sc_mode is not None:                               # fused shortcut
        sc_base, sc_rem, sc_rows = sc_slice
        sc_x = scp_ref[0, 0, pl.ds(m0 + sc_base, sc_rows), :]
        if sc_mode == "matmul":                           # 1x1-conv + BN branch
            sc = jnp.dot(sc_x, scw_ref[0], preferred_element_type=jnp.float32)
        else:                                             # identity residual
            sc = sc_x.astype(jnp.float32)
        out = out + sc[sc_rem:sc_rem + tile_m, :]

    if apply_relu:
        out = jnp.maximum(out, 0.0)
    o_ref[0] = out.astype(o_ref.dtype)


# ----------------------------------------------------------------------------
# Wrapper: one fused conv + BN [+ shortcut] [+ ReLU] pallas_call
# ----------------------------------------------------------------------------
def conv_bn_act(planes, geom, weight, bn, *, apply_relu, out_dtype,
                shortcut=None):
    """planes/geom from _build_planes.  shortcut:
         None
         | ("matmul", sc_planes, sc_weight, sc_bn, flat_offset)   # fused 1x1+BN
         | ("add", sc_planes, flat_offset)                        # identity
       Returns (n, mfull_p, cout_p) in out_dtype (flat layout, row stride wq)."""
    n = planes.shape[0]
    cin_p = geom["cin_p"]
    kh, kw, _, cout = weight.shape
    cout_p = _round_up(cout, LANE)
    co_tile = _pick_co_tile(cout_p)
    tile_m, mfull_p = geom["tile_m"], geom["mfull_p"]

    wf, bias = _fold_bn(weight, bn, cin_p, cout_p)

    inputs = [planes, wf, bias]
    in_specs = [
        pl.BlockSpec((1, geom["n_phase"], geom["lflat_p"], cin_p),
                     lambda b, c, m: (b, 0, 0, 0)),
        # block index is grid-invariant across b/m (and c when one tile covers
        # cout) -> the weight tile is DMA'd only when its index changes.
        pl.BlockSpec((kh * kw, cin_p, co_tile), lambda b, c, m: (0, 0, c)),
        pl.BlockSpec((1, co_tile), lambda b, c, m: (0, c)),
    ]

    sc_mode, sc_slice = None, None
    if shortcut is not None:
        sc_mode = shortcut[0]
        if sc_mode == "matmul":
            _, scp, sc_w, sc_bn, sc_off = shortcut
            scw_f, sc_bias = _fold_bn(sc_w, sc_bn, scp.shape[-1], cout_p)
            bias = bias + sc_bias           # relu(conv2 + b2 + sc + bs)
            inputs[2] = bias
        else:
            _, scp, sc_off = shortcut
            assert scp.shape[-1] == cout_p
        sc_base = sc_off // 8 * 8
        sc_rem = sc_off - sc_base
        sc_rows = _round_up(sc_rem + tile_m, 8)
        sc_slice = (sc_base, sc_rem, sc_rows)
        need = (mfull_p - tile_m) + sc_base + sc_rows
        if scp.shape[2] < need:             # keep the sliding window in bounds
            scp = jnp.pad(scp, ((0, 0), (0, 0), (0, need - scp.shape[2]),
                                (0, 0)))
        sc_len, sc_ch = scp.shape[2], scp.shape[3]
        inputs.append(scp)
        if sc_mode == "matmul":
            in_specs.append(pl.BlockSpec((1, 1, sc_len, sc_ch),
                                         lambda b, c, m: (b, 0, 0, 0)))
            inputs.append(scw_f)
            in_specs.append(pl.BlockSpec((1, sc_ch, co_tile),
                                         lambda b, c, m: (0, 0, c)))
        else:
            in_specs.append(pl.BlockSpec((1, 1, sc_len, co_tile),
                                         lambda b, c, m: (b, 0, 0, c)))

    kernel = functools.partial(
        _conv_kernel, groups=geom["groups"], tile_m=tile_m,
        apply_relu=apply_relu, sc_mode=sc_mode, sc_slice=sc_slice)

    return pl.pallas_call(
        kernel,
        grid=(n, cout_p // co_tile, mfull_p // tile_m),
        in_specs=in_specs,
        out_specs=pl.BlockSpec((1, tile_m, co_tile), lambda b, c, m: (b, m, c)),
        out_shape=jax.ShapeDtypeStruct((n, mfull_p, cout_p), out_dtype),
        scratch_shapes=[pltpu.VMEM((tile_m, co_tile), jnp.float32)],
        compiler_params=pltpu.CompilerParams(
            dimension_semantics=("parallel", "parallel", "parallel"),
            # M-tiling keeps the per-step working set small; 32 MiB also fits
            # v7x's 64 MiB/TC physical VMEM with headroom.
            vmem_limit_bytes=32 * 1024 * 1024),
    )(*inputs)


# ----------------------------------------------------------------------------
# ResBlock forward (NCHW in / NCHW out, like the PyTorch module)
# ----------------------------------------------------------------------------
def resblock_forward(x_nchw, params, *, stride):
    n, c_in, h, w = x_nchw.shape
    c_out = params["w1"].shape[-1]
    cin_p = _round_up(c_in, LANE)
    cout_p = _round_up(c_out, LANE)

    x = jnp.transpose(x_nchw, (0, 2, 3, 1))                      # NCHW -> NHWC
    x = jnp.pad(x, ((0, 0), (0, 0), (0, 0), (0, cin_p - c_in)))  # lane-dense C

    # left branch conv1: 3x3(stride) + BN + ReLU   (bf16: feeds the next MXU)
    planes1, g1 = _build_planes(x, 3, 3, stride, 1)
    h1_flat = conv_bn_act(planes1, g1, params["w1"], params["bn1"],
                          apply_relu=True, out_dtype=jnp.bfloat16)
    h1 = h1_flat[:, :g1["mfull"], :].reshape(n, g1["ho"], g1["wq"], cout_p)
    h1 = h1[:, :, :g1["wo"], :]

    # conv2 geometry (3x3, stride 1, pad 1) over h1
    planes2, g2 = _build_planes(h1, 3, 3, 1, 1)

    # shortcut branch, fused into conv2's kernel
    if "ws" in params:
        if stride == 1:
            # x (padded by 1) already lives inside conv1's plane at a constant
            # flat offset -> reuse it as the 1x1-shortcut input (no extra HBM)
            assert g1["wq"] == g2["wq"] and g1["mfull_p"] == g2["mfull_p"]
            shortcut = ("matmul", planes1, params["ws"], params["bns"],
                        g2["wq"] + 1)
        else:
            # strided 1x1 conv: subsampled input laid out directly in conv2's
            # flattened output layout (row stride g2.wq), bf16
            x_sub = x[:, ::stride, ::stride, :]
            sc_plane = jnp.pad(
                x_sub, ((0, 0), (0, 0), (0, g2["wq"] - x_sub.shape[2]), (0, 0)))
            sc_plane = sc_plane.reshape(n, -1, cin_p)
            sc_plane = jnp.pad(
                sc_plane, ((0, 0), (0, g2["mfull_p"] - sc_plane.shape[1]),
                           (0, 0)))
            sc_plane = sc_plane.astype(jnp.bfloat16)[:, None]
            shortcut = ("matmul", sc_plane, params["ws"], params["bns"], 0)
    else:
        # identity residual: x itself lives inside conv1's plane at offset wq+1
        assert g1["wq"] == g2["wq"] and g1["mfull_p"] == g2["mfull_p"]
        shortcut = ("add", planes1, g2["wq"] + 1)

    # left branch conv2: 3x3(1) + BN, fused shortcut add + final ReLU
    out_flat = conv_bn_act(planes2, g2, params["w2"], params["bn2"],
                           apply_relu=True, out_dtype=jnp.float32,
                           shortcut=shortcut)
    out = out_flat[:, :g2["mfull"], :].reshape(n, g2["ho"], g2["wq"], cout_p)
    out = out[:, :, :g2["wo"], :c_out]
    return jnp.transpose(out, (0, 3, 1, 2))                      # NHWC -> NCHW


# ----------------------------------------------------------------------------
# Deterministic parameter construction + pure-JAX reference for validation
# ----------------------------------------------------------------------------
def make_params(key, c_in, c_out, stride):
    ks = jax.random.split(key, 6)

    def bn_params(k):
        k1, k2, k3, k4 = jax.random.split(k, 4)
        gamma = 1.0 + 0.1 * jax.random.normal(k1, (c_out,), jnp.float32)
        beta = 0.1 * jax.random.normal(k2, (c_out,), jnp.float32)
        mean = 0.1 * jax.random.normal(k3, (c_out,), jnp.float32)
        var = jax.random.uniform(k4, (c_out,), jnp.float32, 0.5, 1.5)
        return (gamma, beta, mean, var)

    params = {
        "w1": 0.2 * jax.random.normal(ks[0], (3, 3, c_in, c_out), jnp.float32),
        "bn1": bn_params(ks[1]),
        "w2": 0.2 * jax.random.normal(ks[2], (3, 3, c_out, c_out), jnp.float32),
        "bn2": bn_params(ks[3]),
    }
    if stride != 1 or c_in != c_out:
        params["ws"] = 0.2 * jax.random.normal(ks[4], (1, 1, c_in, c_out),
                                               jnp.float32)
        params["bns"] = bn_params(ks[5])
    return params


def _ref_conv(x, w, stride, padding):
    return jax.lax.conv_general_dilated(
        x, w, (stride, stride), [(padding, padding), (padding, padding)],
        dimension_numbers=("NHWC", "HWIO", "NHWC"))


def _ref_bn(y, bn, eps=1e-5):
    gamma, beta, mean, var = bn
    return (y - mean) * gamma * jax.lax.rsqrt(var + eps) + beta


def resblock_reference(x_nchw, params, *, stride):
    x = jnp.transpose(x_nchw, (0, 2, 3, 1))
    h = jax.nn.relu(_ref_bn(_ref_conv(x, params["w1"], stride, 1), params["bn1"]))
    left = _ref_bn(_ref_conv(h, params["w2"], 1, 1), params["bn2"])
    if "ws" in params:
        sc = _ref_bn(_ref_conv(x, params["ws"], stride, 0), params["bns"])
    else:
        sc = x
    out = jax.nn.relu(left + sc)
    return jnp.transpose(out, (0, 3, 1, 2))


def _check(x, params, stride, expected_shape):
    out = jax.block_until_ready(
        jax.jit(functools.partial(resblock_forward, stride=stride))(x, params))
    ref = jax.block_until_ready(resblock_reference(x, params, stride=stride))
    assert out.shape == expected_shape, out.shape
    # bf16 MXU operands / bf16 residual with f32 accumulation -> loose tolerance
    assert jnp.allclose(out, ref, rtol=5e-2, atol=5e-2), \
        float(jnp.max(jnp.abs(out - ref)))


if __name__ == "__main__":
    key = jax.random.PRNGKey(0)
    kx1, kp1, kx2, kp2, kx3, kp3 = jax.random.split(key, 6)

    # case 1: projection shortcut, stride 2, c_in != c_out (the spec example)
    N, C_IN, H, W, C_OUT = 2, 4, 16, 16, 8
    x1 = jax.random.normal(kx1, (N, C_IN, H, W), jnp.float32)
    _check(x1, make_params(kp1, C_IN, C_OUT, 2), 2, (N, C_OUT, H // 2, W // 2))

    # case 2: identity shortcut, stride 1, c_in == c_out
    x2 = jax.random.normal(kx2, (N, C_IN, H, W), jnp.float32)
    _check(x2, make_params(kp2, C_IN, C_IN, 1), 1, (N, C_IN, H, W))

    # case 3: projection shortcut, stride 1, c_in != c_out
    x3 = jax.random.normal(kx3, (N, C_IN, H, W), jnp.float32)
    _check(x3, make_params(kp3, C_IN, C_OUT, 1), 1, (N, C_OUT, H, W))

    print("KERNEL_OK")
</pallas_src>

<mosaic_0001>
module attributes {stable_mosaic.version = 11 : i64} {
  func.func @_conv_kernel(%arg0: i32, %arg1: i32, %arg2: i32, %arg3: memref<1x4x88x128xbf16, #tpu.memory_space<vmem>>, %arg4: memref<9x128x128xbf16, #tpu.memory_space<vmem>>, %arg5: memref<1x128xf32, #tpu.memory_space<vmem>>, %arg6: memref<1x72x128xbf16, #tpu.memory_space<vmem>>, %arg7: memref<72x128xf32, #tpu.memory_space<vmem>>) attributes {dimension_semantics = [#tpu.dimension_semantics<parallel>, #tpu.dimension_semantics<parallel>, #tpu.dimension_semantics<parallel>], iteration_bounds = array<i64: 2, 1, 1>, scalar_prefetch = 0 : i64, scratch_operands = 1 : i64, tpu.core_type = #tpu.core_type<tc>, window_params = [{transform_indices = @transform_0, window_bounds = array<i64: 1, 4, 88, 128>}, {transform_indices = @transform_1, window_bounds = array<i64: 9, 128, 128>}, {transform_indices = @transform_2, window_bounds = array<i64: 1, 128>}, {transform_indices = @transform_3, window_bounds = array<i64: 1, 72, 128>}]} {
    %c72_i32 = arith.constant 72 : i32
    %0 = arith.muli %arg2, %c72_i32 : i32
    %1 = tpu.assume_multiple %0, 8 : i32
    %c0_i32 = arith.constant 0 : i32
    %2 = arith.addi %1, %c0_i32 : i32
    %c0 = arith.constant 0 : index
    %c0_0 = arith.constant 0 : index
    %3 = arith.index_cast %2 : i32 to index
    %c0_1 = arith.constant 0 : index
    %4 = vector.load %arg3[%c0, %c0_0, %3, %c0_1] : memref<1x4x88x128xbf16, #tpu.memory_space<vmem>>, vector<1x1x80x128xbf16>
    %5 = vector.shape_cast %4 : vector<1x1x80x128xbf16> to vector<80x128xbf16>
    %c0_2 = arith.constant 0 : index
    %c0_3 = arith.constant 0 : index
    %c0_4 = arith.constant 0 : index
    %6 = vector.load %arg4[%c0_2, %c0_3, %c0_4] : memref<9x128x128xbf16, #tpu.memory_space<vmem>>, vector<1x128x128xbf16>
    %7 = vector.shape_cast %6 : vector<1x128x128xbf16> to vector<128x128xbf16>
    %cst = arith.constant dense<0.000000e+00> : vector<80x128xf32>
    %8 = tpu.matmul %5, %7, %cst {dimension_numbers = #tpu.dot_dimension_numbers<[1], [0], [0], [1], [0, 0, 1, 1], [], []>} : vector<80x128xbf16>, vector<128x128xbf16>, vector<80x128xf32> -> vector<80x128xf32>
    %9 = vector.extract_strided_slice %8 {offsets = [0, 0], sizes = [72, 128], strides = [1, 1]} : vector<80x128xf32> to vector<72x128xf32>
    %c2 = arith.constant 2 : index
    %c0_5 = arith.constant 0 : index
    %c0_6 = arith.constant 0 : index
    %10 = vector.load %arg4[%c2, %c0_5, %c0_6] : memref<9x128x128xbf16, #tpu.memory_space<vmem>>, vector<1x128x128xbf16>
    %11 = vector.shape_cast %10 : vector<1x128x128xbf16> to vector<128x128xbf16>
    %cst_7 = arith.constant dense<0.000000e+00> : vector<80x128xf32>
    %12 = tpu.matmul %5, %11, %cst_7 {dimension_numbers = #tpu.dot_dimension_numbers<[1], [0], [0], [1], [0, 0, 1, 1], [], []>} : vector<80x128xbf16>, vector<128x128xbf16>, vector<80x128xf32> -> vector<80x128xf32>
    %13 = vector.extract_strided_slice %12 {offsets = [1, 0], sizes = [72, 128], strides = [1, 1]} : vector<80x128xf32> to vector<72x128xf32>
    %14 = arith.addf %9, %13 : vector<72x128xf32>
    %c0_8 = arith.constant 0 : index
    %c0_9 = arith.constant 0 : index
    %15 = vector.load %arg7[%c0_8, %c0_9] : memref<72x128xf32, #tpu.memory_space<vmem>>, vector<72x128xf32>
    tpu.vector_store %arg7[%c0_8, %c0_9], %14 {strides = array<i32>} : memref<72x128xf32, #tpu.memory_space<vmem>>, vector<72x128xf32>,
    %c8_i32 = arith.constant 8 : i32
    %16 = arith.addi %1, %c8_i32 : i32
    %c0_10 = arith.constant 0 : index
    %c0_11 = arith.constant 0 : index
    %17 = arith.index_cast %16 : i32 to index
    %c0_12 = arith.constant 0 : index
    %18 = vector.load %arg3[%c0_10, %c0_11, %17, %c0_12] : memref<1x4x88x128xbf16, #tpu.memory_space<vmem>>, vector<1x1x80x128xbf16>
    %19 = vector.shape_cast %18 : vector<1x1x80x128xbf16> to vector<80x128xbf16>
    %c6 = arith.constant 6 : index
    %c0_13 = arith.constant 0 : index
    %c0_14 = arith.constant 0 : index
    %20 = vector.load %arg4[%c6, %c0_13, %c0_14] : memref<9x128x128xbf16, #tpu.memory_space<vmem>>, vector<1x128x128xbf16>
    %21 = vector.shape_cast %20 : vector<1x128x128xbf16> to vector<128x128xbf16>
    %cst_15 = arith.constant dense<0.000000e+00> : vector<80x128xf32>
    %22 = tpu.matmul %19, %21, %cst_15 {dimension_numbers = #tpu.dot_dimension_numbers<[1], [0], [0], [1], [0, 0, 1, 1], [], []>} : vector<80x128xbf16>, vector<128x128xbf16>, vector<80x128xf32> -> vector<80x128xf32>
    %23 = vector.extract_strided_slice %22 {offsets = [1, 0], sizes = [72, 128], strides = [1, 1]} : vector<80x128xf32> to vector<72x128xf32>
    %c8 = arith.constant 8 : index
    %c0_16 = arith.constant 0 : index
    %c0_17 = arith.constant 0 : index
    %24 = vector.load %arg4[%c8, %c0_16, %c0_17] : memref<9x128x128xbf16, #tpu.memory_space<vmem>>, vector<1x128x128xbf16>
    %25 = vector.shape_cast %24 : vector<1x128x128xbf16> to vector<128x128xbf16>
    %cst_18 = arith.constant dense<0.000000e+00> : vector<80x128xf32>
    %26 = tpu.matmul %19, %25, %cst_18 {dimension_numbers = #tpu.dot_dimension_numbers<[1], [0], [0], [1], [0, 0, 1, 1], [], []>} : vector<80x128xbf16>, vector<128x128xbf16>, vector<80x128xf32> -> vector<80x128xf32>
    %27 = vector.extract_strided_slice %26 {offsets = [2, 0], sizes = [72, 128], strides = [1, 1]} : vector<80x128xf32> to vector<72x128xf32>
    %28 = arith.addf %23, %27 : vector<72x128xf32>
    %c0_19 = arith.constant 0 : index
    %c0_20 = arith.constant 0 : index
    %29 = vector.load %arg7[%c0_19, %c0_20] : memref<72x128xf32, #tpu.memory_space<vmem>>, vector<72x128xf32>
    %30 = arith.addf %29, %28 : vector<72x128xf32>
    %c0_21 = arith.constant 0 : index
    %c0_22 = arith.constant 0 : index
    %31 = vector.load %arg7[%c0_21, %c0_22] : memref<72x128xf32, #tpu.memory_space<vmem>>, vector<72x128xf32>
    tpu.vector_store %arg7[%c0_21, %c0_22], %30 {strides = array<i32>} : memref<72x128xf32, #tpu.memory_space<vmem>>, vector<72x128xf32>,
    %c0_i32_23 = arith.constant 0 : i32
    %32 = arith.addi %1, %c0_i32_23 : i32
    %c0_24 = arith.constant 0 : index
    %c1 = arith.constant 1 : index
    %33 = arith.index_cast %32 : i32 to index
    %c0_25 = arith.constant 0 : index
    %34 = vector.load %arg3[%c0_24, %c1, %33, %c0_25] : memref<1x4x88x128xbf16, #tpu.memory_space<vmem>>, vector<1x1x72x128xbf16>
    %35 = vector.shape_cast %34 : vector<1x1x72x128xbf16> to vector<72x128xbf16>
    %c1_26 = arith.constant 1 : index
    %c0_27 = arith.constant 0 : index
    %c0_28 = arith.constant 0 : index
    %36 = vector.load %arg4[%c1_26, %c0_27, %c0_28] : memref<9x128x128xbf16, #tpu.memory_space<vmem>>, vector<1x128x128xbf16>
    %37 = vector.shape_cast %36 : vector<1x128x128xbf16> to vector<128x128xbf16>
    %cst_29 = arith.constant dense<0.000000e+00> : vector<72x128xf32>
    %38 = tpu.matmul %35, %37, %cst_29 {dimension_numbers = #tpu.dot_dimension_numbers<[1], [0], [0], [1], [0, 0, 1, 1], [], []>} : vector<72x128xbf16>, vector<128x128xbf16>, vector<72x128xf32> -> vector<72x128xf32>
    %c0_30 = arith.constant 0 : index
    %c0_31 = arith.constant 0 : index
    %39 = vector.load %arg7[%c0_30, %c0_31] : memref<72x128xf32, #tpu.memory_space<vmem>>, vector<72x128xf32>
    %40 = arith.addf %39, %38 : vector<72x128xf32>
    %c0_32 = arith.constant 0 : index
    %c0_33 = arith.constant 0 : index
    %41 = vector.load %arg7[%c0_32, %c0_33] : memref<72x128xf32, #tpu.memory_space<vmem>>, vector<72x128xf32>
    tpu.vector_store %arg7[%c0_32, %c0_33], %40 {strides = array<i32>} : memref<72x128xf32, #tpu.memory_space<vmem>>, vector<72x128xf32>,
    %c8_i32_34 = arith.constant 8 : i32
    %42 = arith.addi %1, %c8_i32_34 : i32
    %c0_35 = arith.constant 0 : index
    %c1_36 = arith.constant 1 : index
    %43 = arith.index_cast %42 : i32 to index
    %c0_37 = arith.constant 0 : index
    %44 = vector.load %arg3[%c0_35, %c1_36, %43, %c0_37] : memref<1x4x88x128xbf16, #tpu.memory_space<vmem>>, vector<1x1x80x128xbf16>
    %45 = vector.shape_cast %44 : vector<1x1x80x128xbf16> to vector<80x128xbf16>
    %c7 = arith.constant 7 : index
    %c0_38 = arith.constant 0 : index
    %c0_39 = arith.constant 0 : index
    %46 = vector.load %arg4[%c7, %c0_38, %c0_39] : memref<9x128x128xbf16, #tpu.memory_space<vmem>>, vector<1x128x128xbf16>
    %47 = vector.shape_cast %46 : vector<1x128x128xbf16> to vector<128x128xbf16>
    %cst_40 = arith.constant dense<0.000000e+00> : vector<80x128xf32>
    %48 = tpu.matmul %45, %47, %cst_40 {dimension_numbers = #tpu.dot_dimension_numbers<[1], [0], [0], [1], [0, 0, 1, 1], [], []>} : vector<80x128xbf16>, vector<128x128xbf16>, vector<80x128xf32> -> vector<80x128xf32>
    %49 = vector.extract_strided_slice %48 {offsets = [1, 0], sizes = [72, 128], strides = [1, 1]} : vector<80x128xf32> to vector<72x128xf32>
    %c0_41 = arith.constant 0 : index
    %c0_42 = arith.constant 0 : index
    %50 = vector.load %arg7[%c0_41, %c0_42] : memref<72x128xf32, #tpu.memory_space<vmem>>, vector<72x128xf32>
    %51 = arith.addf %50, %49 : vector<72x128xf32>
    %c0_43 = arith.constant 0 : index
    %c0_44 = arith.constant 0 : index
    %52 = vector.load %arg7[%c0_43, %c0_44] : memref<72x128xf32, #tpu.memory_space<vmem>>, vector<72x128xf32>
    tpu.vector_store %arg7[%c0_43, %c0_44], %51 {strides = array<i32>} : memref<72x128xf32, #tpu.memory_space<vmem>>, vector<72x128xf32>,
    %c0_i32_45 = arith.constant 0 : i32
    %53 = arith.addi %1, %c0_i32_45 : i32
    %c0_46 = arith.constant 0 : index
    %c2_47 = arith.constant 2 : index
    %54 = arith.index_cast %53 : i32 to index
    %c0_48 = arith.constant 0 : index
    %55 = vector.load %arg3[%c0_46, %c2_47, %54, %c0_48] : memref<1x4x88x128xbf16, #tpu.memory_space<vmem>>, vector<1x1x80x128xbf16>
    %56 = vector.shape_cast %55 : vector<1x1x80x128xbf16> to vector<80x128xbf16>
    %c3 = arith.constant 3 : index
    %c0_49 = arith.constant 0 : index
    %c0_50 = arith.constant 0 : index
    %57 = vector.load %arg4[%c3, %c0_49, %c0_50] : memref<9x128x128xbf16, #tpu.memory_space<vmem>>, vector<1x128x128xbf16>
    %58 = vector.shape_cast %57 : vector<1x128x128xbf16> to vector<128x128xbf16>
    %cst_51 = arith.constant dense<0.000000e+00> : vector<80x128xf32>
    %59 = tpu.matmul %56, %58, %cst_51 {dimension_numbers = #tpu.dot_dimension_numbers<[1], [0], [0], [1], [0, 0, 1, 1], [], []>} : vector<80x128xbf16>, vector<128x128xbf16>, vector<80x128xf32> -> vector<80x128xf32>
    %60 = vector.extract_strided_slice %59 {offsets = [0, 0], sizes = [72, 128], strides = [1, 1]} : vector<80x128xf32> to vector<72x128xf32>
    %c5 = arith.constant 5 : index
    %c0_52 = arith.constant 0 : index
    %c0_53 = arith.constant 0 : index
    %61 = vector.load %arg4[%c5, %c0_52, %c0_53] : memref<9x128x128xbf16, #tpu.memory_space<vmem>>, vector<1x128x128xbf16>
    %62 = vector.shape_cast %61 : vector<1x128x128xbf16> to vector<128x128xbf16>
    %cst_54 = arith.constant dense<0.000000e+00> : vector<80x128xf32>
    %63 = tpu.matmul %56, %62, %cst_54 {dimension_numbers = #tpu.dot_dimension_numbers<[1], [0], [0], [1], [0, 0, 1, 1], [], []>} : vector<80x128xbf16>, vector<128x128xbf16>, vector<80x128xf32> -> vector<80x128xf32>
    %64 = vector.extract_strided_slice %63 {offsets = [1, 0], sizes = [72, 128], strides = [1, 1]} : vector<80x128xf32> to vector<72x128xf32>
    %65 = arith.addf %60, %64 : vector<72x128xf32>
    %c0_55 = arith.constant 0 : index
    %c0_56 = arith.constant 0 : index
    %66 = vector.load %arg7[%c0_55, %c0_56] : memref<72x128xf32, #tpu.memory_space<vmem>>, vector<72x128xf32>
    %67 = arith.addf %66, %65 : vector<72x128xf32>
    %c0_57 = arith.constant 0 : index
    %c0_58 = arith.constant 0 : index
    %68 = vector.load %arg7[%c0_57, %c0_58] : memref<72x128xf32, #tpu.memory_space<vmem>>, vector<72x128xf32>
    tpu.vector_store %arg7[%c0_57, %c0_58], %67 {strides = array<i32>} : memref<72x128xf32, #tpu.memory_space<vmem>>, vector<72x128xf32>,
    %c0_i32_59 = arith.constant 0 : i32
    %69 = arith.addi %1, %c0_i32_59 : i32
    %c0_60 = arith.constant 0 : index
    %c3_61 = arith.constant 3 : index
    %70 = arith.index_cast %69 : i32 to index
    %c0_62 = arith.constant 0 : index
    %71 = vector.load %arg3[%c0_60, %c3_61, %70, %c0_62] : memref<1x4x88x128xbf16, #tpu.memory_space<vmem>>, vector<1x1x72x128xbf16>
    %72 = vector.shape_cast %71 : vector<1x1x72x128xbf16> to vector<72x128xbf16>
    %c4 = arith.constant 4 : index
    %c0_63 = arith.constant 0 : index
    %c0_64 = arith.constant 0 : index
    %73 = vector.load %arg4[%c4, %c0_63, %c0_64] : memref<9x128x128xbf16, #tpu.memory_space<vmem>>, vector<1x128x128xbf16>
    %74 = vector.shape_cast %73 : vector<1x128x128xbf16> to vector<128x128xbf16>
    %cst_65 = arith.constant dense<0.000000e+00> : vector<72x128xf32>
    %75 = tpu.matmul %72, %74, %cst_65 {dimension_numbers = #tpu.dot_dimension_numbers<[1], [0], [0], [1], [0, 0, 1, 1], [], []>} : vector<72x128xbf16>, vector<128x128xbf16>, vector<72x128xf32> -> vector<72x128xf32>
    %c0_66 = arith.constant 0 : index
    %c0_67 = arith.constant 0 : index
    %76 = vector.load %arg7[%c0_66, %c0_67] : memref<72x128xf32, #tpu.memory_space<vmem>>, vector<72x128xf32>
    %77 = arith.addf %76, %75 : vector<72x128xf32>
    %c0_68 = arith.constant 0 : index
    %c0_69 = arith.constant 0 : index
    %78 = vector.load %arg7[%c0_68, %c0_69] : memref<72x128xf32, #tpu.memory_space<vmem>>, vector<72x128xf32>
    tpu.vector_store %arg7[%c0_68, %c0_69], %77 {strides = array<i32>} : memref<72x128xf32, #tpu.memory_space<vmem>>, vector<72x128xf32>,
    %c0_70 = arith.constant 0 : index
    %c0_71 = arith.constant 0 : index
    %79 = vector.load %arg7[%c0_70, %c0_71] : memref<72x128xf32, #tpu.memory_space<vmem>>, vector<72x128xf32>
    %c0_72 = arith.constant 0 : index
    %c0_73 = arith.constant 0 : index
    %80 = vector.load %arg5[%c0_72, %c0_73] : memref<1x128xf32, #tpu.memory_space<vmem>>, vector<1x128xf32>
    %81 = vector.broadcast %80 : vector<1x128xf32> to vector<72x128xf32>
    %82 = arith.addf %79, %81 : vector<72x128xf32>
    %cst_74 = arith.constant 0.000000e+00 : f32
    %83 = vector.broadcast %cst_74 : f32 to vector<72x128xf32>
    %84 = arith.maximumf %82, %83 : vector<72x128xf32>
    %85 = arith.truncf %84 : vector<72x128xf32> to vector<72x128xbf16>
    %c0_75 = arith.constant 0 : index
    %c0_76 = arith.constant 0 : index
    %c0_77 = arith.constant 0 : index
    %86 = vector.load %arg6[%c0_75, %c0_76, %c0_77] : memref<1x72x128xbf16, #tpu.memory_space<vmem>>, vector<1x72x128xbf16>
    %87 = vector.shape_cast %86 : vector<1x72x128xbf16> to vector<72x128xbf16>
    %88 = vector.shape_cast %85 : vector<72x128xbf16> to vector<1x72x128xbf16>
    tpu.vector_store %arg6[%c0_75, %c0_76, %c0_77], %88 {strides = array<i32>} : memref<1x72x128xbf16, #tpu.memory_space<vmem>>, vector<1x72x128xbf16>,
    return
  }
  func.func @transform_0(%arg0: i32, %arg1: i32, %arg2: i32) -> (i32, i32, i32, i32) {
    %c0_i32 = arith.constant 0 : i32
    %c0_i32_0 = arith.constant 0 : i32
    %c0_i32_1 = arith.constant 0 : i32
    %c0_i32_2 = arith.constant 0 : i32
    return %arg0, %c0_i32, %c0_i32_0, %c0_i32_1 : i32, i32, i32, i32
  }
  func.func @transform_1(%arg0: i32, %arg1: i32, %arg2: i32) -> (i32, i32, i32) {
    %c0_i32 = arith.constant 0 : i32
    %c0_i32_0 = arith.constant 0 : i32
    %c0_i32_1 = arith.constant 0 : i32
    return %c0_i32, %c0_i32_0, %arg1 : i32, i32, i32
  }
  func.func @transform_2(%arg0: i32, %arg1: i32, %arg2: i32) -> (i32, i32) {
    %c0_i32 = arith.constant 0 : i32
    %c0_i32_0 = arith.constant 0 : i32
    return %c0_i32, %arg1 : i32, i32
  }
  func.func @transform_3(%arg0: i32, %arg1: i32, %arg2: i32) -> (i32, i32, i32) {
    %c0_i32 = arith.constant 0 : i32
    return %arg0, %arg2, %arg1 : i32, i32, i32
  }
}

module attributes {stable_mosaic.version = 11 : i64} {
  func.func @_conv_kernel(%arg0: i32, %arg1: i32, %arg2: i32, %arg3: memref<1x1x104x128xbf16, #tpu.memory_space<vmem>>, %arg4: memref<9x128x128xbf16, #tpu.memory_space<vmem>>, %arg5: memref<1x128xf32, #tpu.memory_space<vmem>>, %arg6: memref<1x1x80x128xbf16, #tpu.memory_space<vmem>>, %arg7: memref<1x128x128xbf16, #tpu.memory_space<vmem>>, %arg8: memref<1x80x128xf32, #tpu.memory_space<vmem>>, %arg9: memref<80x128xf32, #tpu.memory_space<vmem>>) attributes {dimension_semantics = [#tpu.dimension_semantics<parallel>, #tpu.dimension_semantics<parallel>, #tpu.dimension_semantics<parallel>], iteration_bounds = array<i64: 2, 1, 1>, scalar_prefetch = 0 : i64, scratch_operands = 1 : i64, tpu.core_type = #tpu.core_type<tc>, window_params = [{transform_indices = @transform_0, window_bounds = array<i64: 1, 1, 104, 128>}, {transform_indices = @transform_1, window_bounds = array<i64: 9, 128, 128>}, {transform_indices = @transform_2, window_bounds = array<i64: 1, 128>}, {transform_indices = @transform_3, window_bounds = array<i64: 1, 1, 80, 128>}, {transform_indices = @transform_4, window_bounds = array<i64: 1, 128, 128>}, {transform_indices = @transform_5, window_bounds = array<i64: 1, 80, 128>}]} {
    %c80_i32 = arith.constant 80 : i32
    %0 = arith.muli %arg2, %c80_i32 : i32
    %1 = tpu.assume_multiple %0, 8 : i32
    %c0_i32 = arith.constant 0 : i32
    %2 = arith.addi %1, %c0_i32 : i32
    %c0 = arith.constant 0 : index
    %c0_0 = arith.constant 0 : index
    %3 = arith.index_cast %2 : i32 to index
    %c0_1 = arith.constant 0 : index
    %4 = vector.load %arg3[%c0, %c0_0, %3, %c0_1] : memref<1x1x104x128xbf16, #tpu.memory_space<vmem>>, vector<1x1x88x128xbf16>
    %5 = vector.shape_cast %4 : vector<1x1x88x128xbf16> to vector<88x128xbf16>
    %c0_2 = arith.constant 0 : index
    %c0_3 = arith.constant 0 : index
    %c0_4 = arith.constant 0 : index
    %6 = vector.load %arg4[%c0_2, %c0_3, %c0_4] : memref<9x128x128xbf16, #tpu.memory_space<vmem>>, vector<1x128x128xbf16>
    %7 = vector.shape_cast %6 : vector<1x128x128xbf16> to vector<128x128xbf16>
    %cst = arith.constant dense<0.000000e+00> : vector<88x128xf32>
    %8 = tpu.matmul %5, %7, %cst {dimension_numbers = #tpu.dot_dimension_numbers<[1], [0], [0], [1], [0, 0, 1, 1], [], []>} : vector<88x128xbf16>, vector<128x128xbf16>, vector<88x128xf32> -> vector<88x128xf32>
    %9 = vector.extract_strided_slice %8 {offsets = [0, 0], sizes = [80, 128], strides = [1, 1]} : vector<88x128xf32> to vector<80x128xf32>
    %c1 = arith.constant 1 : index
    %c0_5 = arith.constant 0 : index
    %c0_6 = arith.constant 0 : index
    %10 = vector.load %arg4[%c1, %c0_5, %c0_6] : memref<9x128x128xbf16, #tpu.memory_space<vmem>>, vector<1x128x128xbf16>
    %11 = vector.shape_cast %10 : vector<1x128x128xbf16> to vector<128x128xbf16>
    %cst_7 = arith.constant dense<0.000000e+00> : vector<88x128xf32>
    %12 = tpu.matmul %5, %11, %cst_7 {dimension_numbers = #tpu.dot_dimension_numbers<[1], [0], [0], [1], [0, 0, 1, 1], [], []>} : vector<88x128xbf16>, vector<128x128xbf16>, vector<88x128xf32> -> vector<88x128xf32>
    %13 = vector.extract_strided_slice %12 {offsets = [1, 0], sizes = [80, 128], strides = [1, 1]} : vector<88x128xf32> to vector<80x128xf32>
    %14 = arith.addf %9, %13 : vector<80x128xf32>
    %c2 = arith.constant 2 : index
    %c0_8 = arith.constant 0 : index
    %c0_9 = arith.constant 0 : index
    %15 = vector.load %arg4[%c2, %c0_8, %c0_9] : memref<9x128x128xbf16, #tpu.memory_space<vmem>>, vector<1x128x128xbf16>
    %16 = vector.shape_cast %15 : vector<1x128x128xbf16> to vector<128x128xbf16>
    %cst_10 = arith.constant dense<0.000000e+00> : vector<88x128xf32>
    %17 = tpu.matmul %5, %16, %cst_10 {dimension_numbers = #tpu.dot_dimension_numbers<[1], [0], [0], [1], [0, 0, 1, 1], [], []>} : vector<88x128xbf16>, vector<128x128xbf16>, vector<88x128xf32> -> vector<88x128xf32>
    %18 = vector.extract_strided_slice %17 {offsets = [2, 0], sizes = [80, 128], strides = [1, 1]} : vector<88x128xf32> to vector<80x128xf32>
    %19 = arith.addf %14, %18 : vector<80x128xf32>
    %c0_11 = arith.constant 0 : index
    %c0_12 = arith.constant 0 : index
    %20 = vector.load %arg9[%c0_11, %c0_12] : memref<80x128xf32, #tpu.memory_space<vmem>>, vector<80x128xf32>
    tpu.vector_store %arg9[%c0_11, %c0_12], %19 {strides = array<i32>} : memref<80x128xf32, #tpu.memory_space<vmem>>, vector<80x128xf32>,
    %c8_i32 = arith.constant 8 : i32
    %21 = arith.addi %1, %c8_i32 : i32
    %c0_13 = arith.constant 0 : index
    %c0_14 = arith.constant 0 : index
    %22 = arith.index_cast %21 : i32 to index
    %c0_15 = arith.constant 0 : index
    %23 = vector.load %arg3[%c0_13, %c0_14, %22, %c0_15] : memref<1x1x104x128xbf16, #tpu.memory_space<vmem>>, vector<1x1x88x128xbf16>
    %24 = vector.shape_cast %23 : vector<1x1x88x128xbf16> to vector<88x128xbf16>
    %c3 = arith.constant 3 : index
    %c0_16 = arith.constant 0 : index
    %c0_17 = arith.constant 0 : index
    %25 = vector.load %arg4[%c3, %c0_16, %c0_17] : memref<9x128x128xbf16, #tpu.memory_space<vmem>>, vector<1x128x128xbf16>
    %26 = vector.shape_cast %25 : vector<1x128x128xbf16> to vector<128x128xbf16>
    %cst_18 = arith.constant dense<0.000000e+00> : vector<88x128xf32>
    %27 = tpu.matmul %24, %26, %cst_18 {dimension_numbers = #tpu.dot_dimension_numbers<[1], [0], [0], [1], [0, 0, 1, 1], [], []>} : vector<88x128xbf16>, vector<128x128xbf16>, vector<88x128xf32> -> vector<88x128xf32>
    %28 = vector.extract_strided_slice %27 {offsets = [2, 0], sizes = [80, 128], strides = [1, 1]} : vector<88x128xf32> to vector<80x128xf32>
    %c4 = arith.constant 4 : index
    %c0_19 = arith.constant 0 : index
    %c0_20 = arith.constant 0 : index
    %29 = vector.load %arg4[%c4, %c0_19, %c0_20] : memref<9x128x128xbf16, #tpu.memory_space<vmem>>, vector<1x128x128xbf16>
    %30 = vector.shape_cast %29 : vector<1x128x128xbf16> to vector<128x128xbf16>
    %cst_21 = arith.constant dense<0.000000e+00> : vector<88x128xf32>
    %31 = tpu.matmul %24, %30, %cst_21 {dimension_numbers = #tpu.dot_dimension_numbers<[1], [0], [0], [1], [0, 0, 1, 1], [], []>} : vector<88x128xbf16>, vector<128x128xbf16>, vector<88x128xf32> -> vector<88x128xf32>
    %32 = vector.extract_strided_slice %31 {offsets = [3, 0], sizes = [80, 128], strides = [1, 1]} : vector<88x128xf32> to vector<80x128xf32>
    %33 = arith.addf %28, %32 : vector<80x128xf32>
    %c5 = arith.constant 5 : index
    %c0_22 = arith.constant 0 : index
    %c0_23 = arith.constant 0 : index
    %34 = vector.load %arg4[%c5, %c0_22, %c0_23] : memref<9x128x128xbf16, #tpu.memory_space<vmem>>, vector<1x128x128xbf16>
    %35 = vector.shape_cast %34 : vector<1x128x128xbf16> to vector<128x128xbf16>
    %cst_24 = arith.constant dense<0.000000e+00> : vector<88x128xf32>
    %36 = tpu.matmul %24, %35, %cst_24 {dimension_numbers = #tpu.dot_dimension_numbers<[1], [0], [0], [1], [0, 0, 1, 1], [], []>} : vector<88x128xbf16>, vector<128x128xbf16>, vector<88x128xf32> -> vector<88x128xf32>
    %37 = vector.extract_strided_slice %36 {offsets = [4, 0], sizes = [80, 128], strides = [1, 1]} : vector<88x128xf32> to vector<80x128xf32>
    %38 = arith.addf %33, %37 : vector<80x128xf32>
    %c0_25 = arith.constant 0 : index
    %c0_26 = arith.constant 0 : index
    %39 = vector.load %arg9[%c0_25, %c0_26] : memref<80x128xf32, #tpu.memory_space<vmem>>, vector<80x128xf32>
    %40 = arith.addf %39, %38 : vector<80x128xf32>
    %c0_27 = arith.constant 0 : index
    %c0_28 = arith.constant 0 : index
    %41 = vector.load %arg9[%c0_27, %c0_28] : memref<80x128xf32, #tpu.memory_space<vmem>>, vector<80x128xf32>
    tpu.vector_store %arg9[%c0_27, %c0_28], %40 {strides = array<i32>} : memref<80x128xf32, #tpu.memory_space<vmem>>, vector<80x128xf32>,
    %c16_i32 = arith.constant 16 : i32
    %42 = arith.addi %1, %c16_i32 : i32
    %c0_29 = arith.constant 0 : index
    %c0_30 = arith.constant 0 : index
    %43 = arith.index_cast %42 : i32 to index
    %c0_31 = arith.constant 0 : index
    %44 = vector.load %arg3[%c0_29, %c0_30, %43, %c0_31] : memref<1x1x104x128xbf16, #tpu.memory_space<vmem>>, vector<1x1x88x128xbf16>
    %45 = vector.shape_cast %44 : vector<1x1x88x128xbf16> to vector<88x128xbf16>
    %c6 = arith.constant 6 : index
    %c0_32 = arith.constant 0 : index
    %c0_33 = arith.constant 0 : index
    %46 = vector.load %arg4[%c6, %c0_32, %c0_33] : memref<9x128x128xbf16, #tpu.memory_space<vmem>>, vector<1x128x128xbf16>
    %47 = vector.shape_cast %46 : vector<1x128x128xbf16> to vector<128x128xbf16>
    %cst_34 = arith.constant dense<0.000000e+00> : vector<88x128xf32>
    %48 = tpu.matmul %45, %47, %cst_34 {dimension_numbers = #tpu.dot_dimension_numbers<[1], [0], [0], [1], [0, 0, 1, 1], [], []>} : vector<88x128xbf16>, vector<128x128xbf16>, vector<88x128xf32> -> vector<88x128xf32>
    %49 = vector.extract_strided_slice %48 {offsets = [4, 0], sizes = [80, 128], strides = [1, 1]} : vector<88x128xf32> to vector<80x128xf32>
    %c7 = arith.constant 7 : index
    %c0_35 = arith.constant 0 : index
    %c0_36 = arith.constant 0 : index
    %50 = vector.load %arg4[%c7, %c0_35, %c0_36] : memref<9x128x128xbf16, #tpu.memory_space<vmem>>, vector<1x128x128xbf16>
    %51 = vector.shape_cast %50 : vector<1x128x128xbf16> to vector<128x128xbf16>
    %cst_37 = arith.constant dense<0.000000e+00> : vector<88x128xf32>
    %52 = tpu.matmul %45, %51, %cst_37 {dimension_numbers = #tpu.dot_dimension_numbers<[1], [0], [0], [1], [0, 0, 1, 1], [], []>} : vector<88x128xbf16>, vector<128x128xbf16>, vector<88x128xf32> -> vector<88x128xf32>
    %53 = vector.extract_strided_slice %52 {offsets = [5, 0], sizes = [80, 128], strides = [1, 1]} : vector<88x128xf32> to vector<80x128xf32>
    %54 = arith.addf %49, %53 : vector<80x128xf32>
    %c8 = arith.constant 8 : index
    %c0_38 = arith.constant 0 : index
    %c0_39 = arith.constant 0 : index
    %55 = vector.load %arg4[%c8, %c0_38, %c0_39] : memref<9x128x128xbf16, #tpu.memory_space<vmem>>, vector<1x128x128xbf16>
    %56 = vector.shape_cast %55 : vector<1x128x128xbf16> to vector<128x128xbf16>
    %cst_40 = arith.constant dense<0.000000e+00> : vector<88x128xf32>
    %57 = tpu.matmul %45, %56, %cst_40 {dimension_numbers = #tpu.dot_dimension_numbers<[1], [0], [0], [1], [0, 0, 1, 1], [], []>} : vector<88x128xbf16>, vector<128x128xbf16>, vector<88x128xf32> -> vector<88x128xf32>
    %58 = vector.extract_strided_slice %57 {offsets = [6, 0], sizes = [80, 128], strides = [1, 1]} : vector<88x128xf32> to vector<80x128xf32>
    %59 = arith.addf %54, %58 : vector<80x128xf32>
    %c0_41 = arith.constant 0 : index
    %c0_42 = arith.constant 0 : index
    %60 = vector.load %arg9[%c0_41, %c0_42] : memref<80x128xf32, #tpu.memory_space<vmem>>, vector<80x128xf32>
    %61 = arith.addf %60, %59 : vector<80x128xf32>
    %c0_43 = arith.constant 0 : index
    %c0_44 = arith.constant 0 : index
    %62 = vector.load %arg9[%c0_43, %c0_44] : memref<80x128xf32, #tpu.memory_space<vmem>>, vector<80x128xf32>
    tpu.vector_store %arg9[%c0_43, %c0_44], %61 {strides = array<i32>} : memref<80x128xf32, #tpu.memory_space<vmem>>, vector<80x128xf32>,
    %c0_45 = arith.constant 0 : index
    %c0_46 = arith.constant 0 : index
    %63 = vector.load %arg9[%c0_45, %c0_46] : memref<80x128xf32, #tpu.memory_space<vmem>>, vector<80x128xf32>
    %c0_47 = arith.constant 0 : index
    %c0_48 = arith.constant 0 : index
    %64 = vector.load %arg5[%c0_47, %c0_48] : memref<1x128xf32, #tpu.memory_space<vmem>>, vector<1x128xf32>
    %65 = vector.broadcast %64 : vector<1x128xf32> to vector<80x128xf32>
    %66 = arith.addf %63, %65 : vector<80x128xf32>
    %c0_i32_49 = arith.constant 0 : i32
    %67 = arith.addi %1, %c0_i32_49 : i32
    %c0_50 = arith.constant 0 : index
    %c0_51 = arith.constant 0 : index
    %68 = arith.index_cast %67 : i32 to index
    %c0_52 = arith.constant 0 : index
    %69 = vector.load %arg6[%c0_50, %c0_51, %68, %c0_52] : memref<1x1x80x128xbf16, #tpu.memory_space<vmem>>, vector<1x1x80x128xbf16>
    %70 = vector.shape_cast %69 : vector<1x1x80x128xbf16> to vector<80x128xbf16>
    %c0_53 = arith.constant 0 : index
    %c0_54 = arith.constant 0 : index
    %c0_55 = arith.constant 0 : index
    %71 = vector.load %arg7[%c0_53, %c0_54, %c0_55] : memref<1x128x128xbf16, #tpu.memory_space<vmem>>, vector<1x128x128xbf16>
    %72 = vector.shape_cast %71 : vector<1x128x128xbf16> to vector<128x128xbf16>
    %cst_56 = arith.constant dense<0.000000e+00> : vector<80x128xf32>
    %73 = tpu.matmul %70, %72, %cst_56 {dimension_numbers = #tpu.dot_dimension_numbers<[1], [0], [0], [1], [0, 0, 1, 1], [], []>} : vector<80x128xbf16>, vector<128x128xbf16>, vector<80x128xf32> -> vector<80x128xf32>
    %74 = arith.addf %66, %73 : vector<80x128xf32>
    %cst_57 = arith.constant 0.000000e+00 : f32
    %75 = vector.broadcast %cst_57 : f32 to vector<80x128xf32>
    %76 = arith.maximumf %74, %75 : vector<80x128xf32>
    %c0_58 = arith.constant 0 : index
    %c0_59 = arith.constant 0 : index
    %c0_60 = arith.constant 0 : index
    %77 = vector.load %arg8[%c0_58, %c0_59, %c0_60] : memref<1x80x128xf32, #tpu.memory_space<vmem>>, vector<1x80x128xf32>
    %78 = vector.shape_cast %77 : vector<1x80x128xf32> to vector<80x128xf32>
    %79 = vector.shape_cast %76 : vector<80x128xf32> to vector<1x80x128xf32>
    tpu.vector_store %arg8[%c0_58, %c0_59, %c0_60], %79 {strides = array<i32>} : memref<1x80x128xf32, #tpu.memory_space<vmem>>, vector<1x80x128xf32>,
    return
  }
  func.func @transform_0(%arg0: i32, %arg1: i32, %arg2: i32) -> (i32, i32, i32, i32) {
    %c0_i32 = arith.constant 0 : i32
    %c0_i32_0 = arith.constant 0 : i32
    %c0_i32_1 = arith.constant 0 : i32
    %c0_i32_2 = arith.constant 0 : i32
    return %arg0, %c0_i32, %c0_i32_0, %c0_i32_1 : i32, i32, i32, i32
  }
  func.func @transform_1(%arg0: i32, %arg1: i32, %arg2: i32) -> (i32, i32, i32) {
    %c0_i32 = arith.constant 0 : i32
    %c0_i32_0 = arith.constant 0 : i32
    %c0_i32_1 = arith.constant 0 : i32
    return %c0_i32, %c0_i32_0, %arg1 : i32, i32, i32
  }
  func.func @transform_2(%arg0: i32, %arg1: i32, %arg2: i32) -> (i32, i32) {
    %c0_i32 = arith.constant 0 : i32
    %c0_i32_0 = arith.constant 0 : i32
    return %c0_i32, %arg1 : i32, i32
  }
  func.func @transform_3(%arg0: i32, %arg1: i32, %arg2: i32) -> (i32, i32, i32, i32) {
    %c0_i32 = arith.constant 0 : i32
    %c0_i32_0 = arith.constant 0 : i32
    %c0_i32_1 = arith.constant 0 : i32
    %c0_i32_2 = arith.constant 0 : i32
    return %arg0, %c0_i32, %c0_i32_0, %c0_i32_1 : i32, i32, i32, i32
  }
  func.func @transform_4(%arg0: i32, %arg1: i32, %arg2: i32) -> (i32, i32, i32) {
    %c0_i32 = arith.constant 0 : i32
    %c0_i32_0 = arith.constant 0 : i32
    %c0_i32_1 = arith.constant 0 : i32
    return %c0_i32, %c0_i32_0, %arg1 : i32, i32, i32
  }
  func.func @transform_5(%arg0: i32, %arg1: i32, %arg2: i32) -> (i32, i32, i32) {
    %c0_i32 = arith.constant 0 : i32
    return %arg0, %arg2, %arg1 : i32, i32, i32
  }
}

</mosaic_0001>

<llo_original>
// kernel: resblock_forward.2
$region0: #{resblock_forward.2}
  #allocation0 [shape = 'u32[]', space=smem, size = 0x4, offset = 0x4, fixed_abs, tag = 'smem constant byte address 0x4 - core index']
  #allocation1 [shape = 'u32[72,128]{1,0:T(1,128)}', space=vmem, size = 0x9000, scoped, tag = 'internal scratch']
  #allocation2 [shape = 'f32[72,128]{1,0:T(8,128)}', space=vmem, size = 0x9000, scoped, tag = 'scratch operand']
  %s0 = inlined_call_operand.vmem [shape: bf16[2,4,88,128], index: 0, kind: input, shape index: {}]
  %s1 = inlined_call_operand.vmem [shape: bf16[9,128,128], index: 1, kind: input, shape index: {}]
  %s2 = inlined_call_operand.vmem [shape: f32[1,128], index: 2, kind: input, shape index: {}]
  %s3 = inlined_call_operand.vmem [shape: bf16[2,72,128], index: 3, kind: output, shape index: {}]
  %s4 = sld [smem:[#allocation0]]
  $region45: #{resblock_forward.2} parent=0
    _
  %s6 = ssub.s32 1, %s4
  %s7 = scalar_select 0, %s6, %s4
  loop: start=0, step=1, limit=4
  $region2: #{resblock_forward.2} parent=0 // loop_pre_header
    _
  $region3: #{resblock_forward.2} parent=0 // loop_header
    %s9 = sphi 0, %s13
    %p10 = scmp.ge.s32.totalorder %s9, 4
    %s16 = sphi 0, %s35
    %s17 = sphi 0, %s31
    %s18 = sphi 0, %s27
    %s19 = sphi 0, %s16
    %s20 = sphi 0, %s17
    %s21 = sphi 0, %s18
    %s22 = sphi 0, %s19
    %s23 = sphi 0, %s20
    %s24 = sphi 0, %s21
    %s38 = sphi 0, %s40
    %s41 = sphi 0, %s38
    %s42 = sphi 0, %s41
    %s58 = sphi 0, %s42
    %s64 = sphi 0, %s66
    %s67 = sphi 0, %s64
    %s68 = sphi 0, %s67
    %s84 = sphi 0, %s68
    %s90 = sphi 0, %s92
    %s93 = sphi 0, %s90
    %s94 = sphi 0, %s93
    %s110 = sphi 0, %s94
    %s120 = sphi 0, %s122
    %s123 = sphi 0, %s120
    %s124 = sphi 0, %s123
    %s140 = sphi 0, %s124
  $region4: #{resblock_forward.2} parent=0 // loop_header_branch
    %12 = sbr.rel (%p10) target = $region8
  $region5: #{resblock_forward.2} parent=0 // loop_body
    %s14 = ssub.s32 %s9, 1
    %s15 = ssub.s32 %s9, 2
    %s25 = sadd.s32 1, %s18
    %p26 = scmp.ge.s32.totalorder %s25, 1
    %s27 = scalar_select %p26, 0, %s25
    %s28 = sadd.s32 1, %s17
    %s29 = scalar_select %p26, %s28, %s17
    %p30 = scmp.ge.s32.totalorder %s29, 1
    %s31 = scalar_select %p30, 0, %s29
    %s32 = sadd.s32 1, %s16
    %s33 = scalar_select %p30, %s32, %s16
    %p34 = scmp.ge.s32.totalorder %s33, 2
    %s35 = scalar_select %p34, 0, %s33
    %s36 = ssub.s32 %s16, %s35
    %p37 = scmp.eq.s32.totalorder %s36, 0
    %s39 = sadd.s32 %s38, 1
    %s40 = scalar_select %p37, %s38, %s39
    %p43 = pneg %p37
    %p44 = scmp.eq.s32.totalorder %s9, 1
    %p45 = por %p43, %p44
    %p46 = scmp.ne.s32.totalorder %s38, %s41
    %p47 = scmp.eq.s32.totalorder %s9, 0
    %p48 = por %p46, %p47
    %p49 = scmp.ne.s32.totalorder %s38, %s41
    %p50 = scmp.eq.s32.totalorder %s14, 1
    %p51 = por %p49, %p50
    %p52 = scmp.ne.s32.totalorder %s41, %s42
    %p53 = scmp.eq.s32.totalorder %s14, 0
    %p54 = por %p52, %p53
    %p55 = scmp.ne.s32.totalorder %s41, %s42
    %p56 = scmp.eq.s32.totalorder %s15, 1
    %p57 = por %p55, %p56
    %p59 = scmp.ne.s32.totalorder %s42, %s58
    %p60 = scmp.eq.s32.totalorder %s15, 0
    %p61 = por %p59, %p60
    %s62 = ssub.s32 %s17, %s31
    %p63 = scmp.eq.s32.totalorder %s62, 0
    %s65 = sadd.s32 %s64, 1
    %s66 = scalar_select %p63, %s64, %s65
    %p69 = pneg %p63
    %p70 = scmp.eq.s32.totalorder %s9, 1
    %p71 = por %p69, %p70
    %p72 = scmp.ne.s32.totalorder %s64, %s67
    %p73 = scmp.eq.s32.totalorder %s9, 0
    %p74 = por %p72, %p73
    %p75 = scmp.ne.s32.totalorder %s64, %s67
    %p76 = scmp.eq.s32.totalorder %s14, 1
    %p77 = por %p75, %p76
    %p78 = scmp.ne.s32.totalorder %s67, %s68
    %p79 = scmp.eq.s32.totalorder %s14, 0
    %p80 = por %p78, %p79
    %p81 = scmp.ne.s32.totalorder %s67, %s68
    %p82 = scmp.eq.s32.totalorder %s15, 1
    %p83 = por %p81, %p82
    %p85 = scmp.ne.s32.totalorder %s68, %s84
    %p86 = scmp.eq.s32.totalorder %s15, 0
    %p87 = por %p85, %p86
    %s88 = ssub.s32 %s17, %s31
    %p89 = scmp.eq.s32.totalorder %s88, 0
    %s91 = sadd.s32 %s90, 1
    %s92 = scalar_select %p89, %s90, %s91
    %p95 = pneg %p89
    %p96 = scmp.eq.s32.totalorder %s9, 1
    %p97 = por %p95, %p96
    %p98 = scmp.ne.s32.totalorder %s90, %s93
    %p99 = scmp.eq.s32.totalorder %s9, 0
    %p100 = por %p98, %p99
    %p101 = scmp.ne.s32.totalorder %s90, %s93
    %p102 = scmp.eq.s32.totalorder %s14, 1
    %p103 = por %p101, %p102
    %p104 = scmp.ne.s32.totalorder %s93, %s94
    %p105 = scmp.eq.s32.totalorder %s14, 0
    %p106 = por %p104, %p105
    %p107 = scmp.ne.s32.totalorder %s93, %s94
    %p108 = scmp.eq.s32.totalorder %s15, 1
    %p109 = por %p107, %p108
    %p111 = scmp.ne.s32.totalorder %s94, %s110
    %p112 = scmp.eq.s32.totalorder %s15, 0
    %p113 = por %p111, %p112
    %s114 = ssub.s32 %s16, %s35
    %s115 = ssub.s32 %s18, %s27
    %s116 = sor.u32 %s114, %s115
    %s117 = ssub.s32 %s17, %s31
    %s118 = sor.u32 %s116, %s117
    %p119 = scmp.eq.s32.totalorder %s118, 0
    %s121 = sadd.s32 %s120, 1
    %s122 = scalar_select %p119, %s120, %s121
    %p125 = pneg %p119
    %p126 = scmp.eq.s32.totalorder %s9, 1
    %p127 = por %p125, %p126
    %p128 = scmp.ne.s32.totalorder %s120, %s123
    %p129 = scmp.eq.s32.totalorder %s9, 0
    %p130 = por %p128, %p129
    %p131 = scmp.ne.s32.totalorder %s120, %s123
    %p132 = scmp.eq.s32.totalorder %s14, 1
    %p133 = por %p131, %p132
    %p134 = scmp.ne.s32.totalorder %s123, %s124
    %p135 = scmp.eq.s32.totalorder %s14, 0
    %p136 = por %p134, %p135
    %p137 = scmp.ne.s32.totalorder %s123, %s124
    %p138 = scmp.eq.s32.totalorder %s15, 1
    %p139 = por %p137, %p138
    %p141 = scmp.ne.s32.totalorder %s124, %s140
    %p142 = scmp.eq.s32.totalorder %s15, 0
    %p143 = por %p141, %p142
    %p144 = scmp.le.s32.totalorder 1, %s9
    %p145 = scmp.lt.s32.totalorder %s9, 3
    %p146 = pnand %p144, %p145
    %p147 = pneg %p146
    // Predicated region
    $region9: #{resblock_forward.2} parent=5 // pred_check
      _
    $region10: #{resblock_forward.2} parent=5 // pred_check_branch
      %149 = sbr.rel (%p146) target = $region12
    $region11: #{resblock_forward.2} parent=5 // pred_region
      %s150 = ssub.s32 %s9, 1
      // Predicated region
      $region13: #{resblock_forward.2} parent=11 // pred_check
        %p151 = pneg %p80
      $region14: #{resblock_forward.2} parent=11 // pred_check_branch
        %153 = sbr.rel (%p151) target = $region16
      $region15: #{resblock_forward.2} parent=11 // pred_region
        %p154 = scmp.lt.s32.totalorder %s20, 0
        %s155 = scalar_select %p154, %s20, 0
        %s156 = smul.addr %s155, 4
        %s157 = scalar_lea.vmem %s1, %s156
      $region16: #{resblock_forward.2} parent=11 // pred_fallthru
        _
      // Predicated region
      $region17: #{resblock_forward.2} parent=11 // pred_check
        %p158 = pneg %p106
      $region18: #{resblock_forward.2} parent=11 // pred_check_branch
        %160 = sbr.rel (%p158) target = $region20
      $region19: #{resblock_forward.2} parent=11 // pred_region
        %p161 = scmp.lt.s32.totalorder %s20, 0
        %s162 = scalar_select %p161, %s20, 0
        %s163 = scalar_lea.vmem %s2, %s162
      $region20: #{resblock_forward.2} parent=11 // pred_fallthru
        _
    $region12: #{resblock_forward.2} parent=5 // pred_fallthru
      _
    %p164 = scmp.lt.s32.totalorder %s9, 2
    // Predicated region
    $region21: #{resblock_forward.2} parent=5 // pred_check
      %p165 = pneg %p164
    $region22: #{resblock_forward.2} parent=5 // pred_check_branch
      %167 = sbr.rel (%p165) target = $region24
    $region23: #{resblock_forward.2} parent=5 // pred_region
      // Predicated region
      $region25: #{resblock_forward.2} parent=23 // pred_check
        %p168 = pneg %p48
      $region26: #{resblock_forward.2} parent=23 // pred_check_branch
        %170 = sbr.rel (%p168) target = $region28
      $region27: #{resblock_forward.2} parent=23 // pred_region
        %p171 = scmp.lt.s32.totalorder %s16, 1
        %s172 = scalar_select %p171, %s16, 1
        %s173 = smul.addr %s172, 44
        %s174 = smul.addr %s173, 4
        %s175 = scalar_lea.vmem %s0, %s174
      $region28: #{resblock_forward.2} parent=23 // pred_fallthru
        _
    $region24: #{resblock_forward.2} parent=5 // pred_fallthru
      _
    %p176 = scmp.le.s32.totalorder 1, %s9
    %p177 = scmp.lt.s32.totalorder %s9, 3
    %p178 = pnand %p176, %p177
    %p179 = pneg %p178
    // Predicated region
    $region29: #{resblock_forward.2} parent=5 // pred_check
      _
    $region30: #{resblock_forward.2} parent=5 // pred_check_branch
      %181 = sbr.rel (%p178) target = $region32
    $region31: #{resblock_forward.2} parent=5 // pred_region
      %s182 = ssub.s32 %s9, 1
      %p183 = scmp.lt.s32.totalorder %s19, 1
      %s184 = scalar_select %p183, %s19, 1
      %s185 = smul.addr %s184, 44
      %s186 = smul.addr %s185, 4
      %s187 = scalar_lea.vmem %s0, %s186
      %p188 = pneg %p54
      %p189 = pneg %p51
      %p190 = scmp.lt.s32.totalorder %s20, 0
      %s191 = scalar_select %p190, %s20, 0
      %s192 = smul.addr %s191, 4
      %s193 = scalar_lea.vmem %s1, %s192
      %p194 = pneg %p80
      %p195 = pneg %p77
      %p196 = scmp.lt.s32.totalorder %s20, 0
      %s197 = scalar_select %p196, %s20, 0
      %s198 = scalar_lea.vmem %s2, %s197
      %p199 = pneg %p106
      %p200 = pneg %p103
      %p201 = pneg %p136
      %p202 = pneg %p133
      %s203 = smul.u32 9, %s21
      %p204 = scmp.lt.s32.totalorder %s19, 1
      %s205 = scalar_select %p204, %s19, 1
      %p206 = scmp.lt.s32.totalorder %s203, 8
      %s207 = scalar_select %p206, %s203, 8
      %p208 = scmp.lt.s32.totalorder %s20, 0
      %s209 = scalar_select %p208, %s20, 0
      %s210 = sadd.s32 %s209, %s207
      %s211 = smul.addr %s205, 9
      %s212 = sadd.s32 %s210, %s211
      %s213 = smul.addr %s212, 4
      %s214 = scalar_lea.vmem %s3, %s213
      %p215 = scmp.lt.s32.totalorder %s19, 1
      %s216 = scalar_select %p215, %s19, 1
      %s217 = smul.addr %s216, 44
      %s218 = smul.addr %s217, 4
      %s219 = scalar_lea.vmem %s0, %s218
      %p220 = scmp.lt.s32.totalorder %s20, 0
      %s221 = scalar_select %p220, %s20, 0
      %s222 = smul.addr %s221, 4
      %s223 = scalar_lea.vmem %s1, %s222
      %p224 = scmp.lt.s32.totalorder %s20, 0
      %s225 = scalar_select %p224, %s20, 0
      %s226 = scalar_lea.vmem %s2, %s225
      %s227 = smul.u32 9, %s21
      %p228 = scmp.lt.s32.totalorder %s19, 1
      %s229 = scalar_select %p228, %s19, 1
      %p230 = scmp.lt.s32.totalorder %s227, 8
      %s231 = scalar_select %p230, %s227, 8
      %p232 = scmp.lt.s32.totalorder %s20, 0
      %s233 = scalar_select %p232, %s20, 0
      %s234 = sadd.s32 %s233, %s231
      %s235 = smul.addr %s229, 9
      %s236 = sadd.s32 %s234, %s235
      %s237 = smul.addr %s236, 4
      %s238 = scalar_lea.vmem %s3, %s237
      %s239 = smul.u32 9, %s21
      %s240 = smul.u32 %s21, 72
      %s241 = sshra.s32 %s240, 3
      %s242 = sand.u32 %s240, 7
      %s243 = smul.addr %s241, 4
      %s244 = scalar_lea.vmem %s219, %s243
      %v245 = vld [vmem:[%s244] sm:$0xf]
      %v246 = vld [vmem:[%s244 + $0x4] sm:$0xf]
      %v247 = vld [vmem:[%s244 + $0x8] sm:$0xf]
      %v248 = vld [vmem:[%s244 + $0xc] sm:$0xf]
      %v249 = vld [vmem:[%s244 + $0x10] sm:$0xf]
      %v250 = vld [vmem:[%s244 + $0x14] sm:$0xf]
      %v251 = vld [vmem:[%s244 + $0x18] sm:$0xf]
      %v252 = vld [vmem:[%s244 + $0x1c] sm:$0xf]
      %v253 = vld [vmem:[%s244 + $0x20] sm:$0xf]
      %v254 = vld [vmem:[%s244 + $0x24] sm:$0xf]
      %v255 = vld [vmem:[%s223] sm:$0xf]
      %v256 = vld [vmem:[%s223 + $0x4] sm:$0xf]
      %v257 = vld [vmem:[%s223 + $0x8] sm:$0xf]
      %v258 = vld [vmem:[%s223 + $0xc] sm:$0xf]
      %v259 = vld [vmem:[%s223 + $0x10] sm:$0xf]
      %v260 = vld [vmem:[%s223 + $0x14] sm:$0xf]
      %v261 = vld [vmem:[%s223 + $0x18] sm:$0xf]
      %v262 = vld [vmem:[%s223 + $0x1c] sm:$0xf]
      %v263 = vld [vmem:[%s223 + $0x20] sm:$0xf]
      %v264 = vld [vmem:[%s223 + $0x24] sm:$0xf]
      %v265 = vld [vmem:[%s223 + $0x28] sm:$0xf]
      %v266 = vld [vmem:[%s223 + $0x2c] sm:$0xf]
      %v267 = vld [vmem:[%s223 + $0x30] sm:$0xf]
      %v268 = vld [vmem:[%s223 + $0x34] sm:$0xf]
      %v269 = vld [vmem:[%s223 + $0x38] sm:$0xf]
      %v270 = vld [vmem:[%s223 + $0x3c] sm:$0xf]
      %v281 = vunpack.c.l.b16 %v245
      %v282 = vunpack.c.l.b16 %v246
      %v283 = vunpack.c.l.b16 %v247
      %v284 = vunpack.c.l.b16 %v248
      %v285 = vunpack.c.l.b16 %v249
      %v286 = vunpack.c.l.b16 %v250
      %v287 = vunpack.c.l.b16 %v251
      %v288 = vunpack.c.l.b16 %v252
      %v289 = vunpack.c.l.b16 %v253
      %v290 = vunpack.c.l.b16 %v254
      %v291 = vpack.c.b16 %v282, %v281
      %v292 = vpack.c.b16 %v284, %v283
      %v293 = vpack.c.b16 %v286, %v285
      %v294 = vpack.c.b16 %v288, %v287
      %v295 = vpack.c.b16 %v290, %v289
      %v317 = vunpack.c.l.b16 %v255
      %v318 = vunpack.c.l.b16 %v256
      %v319 = vunpack.c.l.b16 %v257
      %v320 = vunpack.c.l.b16 %v258
      %v321 = vunpack.c.l.b16 %v259
      %v322 = vunpack.c.l.b16 %v260
      %v323 = vunpack.c.l.b16 %v261
      %v324 = vunpack.c.l.b16 %v262
      %v325 = vunpack.c.l.b16 %v263
      %v326 = vunpack.c.l.b16 %v264
      %v327 = vunpack.c.l.b16 %v265
      %v328 = vunpack.c.l.b16 %v266
      %v329 = vunpack.c.l.b16 %v267
      %v330 = vunpack.c.l.b16 %v268
      %v331 = vunpack.c.l.b16 %v269
      %v332 = vunpack.c.l.b16 %v270
      %v333 = vpack.c.b16 %v318, %v317
      %v334 = vpack.c.b16 %v320, %v319
      %v335 = vpack.c.b16 %v322, %v321
      %v336 = vpack.c.b16 %v324, %v323
      %v337 = vpack.c.b16 %v326, %v325
      %v338 = vpack.c.b16 %v328, %v327
      %v339 = vpack.c.b16 %v330, %v329
      %v340 = vpack.c.b16 %v332, %v331
      %349 = vmatpush.bf16.msra.mxu0 %v340
      %350 = vmatpush.bf16.msra.mxu0 %v339
      %351 = vmatpush.bf16.msra.mxu0 %v338
      %352 = vmatpush.bf16.msra.mxu0 %v337
      %353 = vmatpush.bf16.msra.mxu0 %v336
      %354 = vmatpush.bf16.msra.mxu0 %v335
      %355 = vmatpush.bf16.msra.mxu0 %v334
      %356 = vmatpush.bf16.msra.mxu0 %v333
      %357 = vmatmul.bf16.gmra.mxu0 %v291
      %v358 = vpop.f32.mrf.mxu0
      %v359 = vadd.f32 0.0, %v358
      %v360 = vpop.f32.mrf.mxu0
      %v361 = vadd.f32 0.0, %v360
      %362 = vmatmul.bf16.gmra.mxu0 %v292
      %v363 = vpop.f32.mrf.mxu0
      %v364 = vadd.f32 0.0, %v363
      %v365 = vpop.f32.mrf.mxu0
      %v366 = vadd.f32 0.0, %v365
      %367 = vmatmul.bf16.gmra.mxu0 %v293
      %v368 = vpop.f32.mrf.mxu0
      %v369 = vadd.f32 0.0, %v368
      %v370 = vpop.f32.mrf.mxu0
      %v371 = vadd.f32 0.0, %v370
      %372 = vmatmul.bf16.gmra.mxu0 %v294
      %v373 = vpop.f32.mrf.mxu0
      %v374 = vadd.f32 0.0, %v373
      %v375 = vpop.f32.mrf.mxu0
      %v376 = vadd.f32 0.0, %v375
      %377 = vmatmul.bf16.gmra.mxu0 %v295
      %v378 = vpop.f32.mrf.mxu0
      %v379 = vadd.f32 0.0, %v378
      %v380 = vpop.f32.mrf.mxu0
      %381 = vdwg.mxu0
      %s382 = scalar_lea.vmem %s223, 128
      %v383 = vld [vmem:[%s382] sm:$0xf]
      %v384 = vld [vmem:[%s382 + $0x4] sm:$0xf]
      %v385 = vld [vmem:[%s382 + $0x8] sm:$0xf]
      %v386 = vld [vmem:[%s382 + $0xc] sm:$0xf]
      %v387 = vld [vmem:[%s382 + $0x10] sm:$0xf]
      %v388 = vld [vmem:[%s382 + $0x14] sm:$0xf]
      %v389 = vld [vmem:[%s382 + $0x18] sm:$0xf]
      %v390 = vld [vmem:[%s382 + $0x1c] sm:$0xf]
      %v391 = vld [vmem:[%s382 + $0x20] sm:$0xf]
      %v392 = vld [vmem:[%s382 + $0x24] sm:$0xf]
      %v393 = vld [vmem:[%s382 + $0x28] sm:$0xf]
      %v394 = vld [vmem:[%s382 + $0x2c] sm:$0xf]
      %v395 = vld [vmem:[%s382 + $0x30] sm:$0xf]
      %v396 = vld [vmem:[%s382 + $0x34] sm:$0xf]
      %v397 = vld [vmem:[%s382 + $0x38] sm:$0xf]
      %v398 = vld [vmem:[%s382 + $0x3c] sm:$0xf]
      %v415 = vunpack.c.l.b16 %v383
      %v416 = vunpack.c.l.b16 %v384
      %v417 = vunpack.c.l.b16 %v385
      %v418 = vunpack.c.l.b16 %v386
      %v419 = vunpack.c.l.b16 %v387
      %v420 = vunpack.c.l.b16 %v388
      %v421 = vunpack.c.l.b16 %v389
      %v422 = vunpack.c.l.b16 %v390
      %v423 = vunpack.c.l.b16 %v391
      %v424 = vunpack.c.l.b16 %v392
      %v425 = vunpack.c.l.b16 %v393
      %v426 = vunpack.c.l.b16 %v394
      %v427 = vunpack.c.l.b16 %v395
      %v428 = vunpack.c.l.b16 %v396
      %v429 = vunpack.c.l.b16 %v397
      %v430 = vunpack.c.l.b16 %v398
      %v431 = vpack.c.b16 %v416, %v415
      %v432 = vpack.c.b16 %v418, %v417
      %v433 = vpack.c.b16 %v420, %v419
      %v434 = vpack.c.b16 %v422, %v421
      %v435 = vpack.c.b16 %v424, %v423
      %v436 = vpack.c.b16 %v426, %v425
      %v437 = vpack.c.b16 %v428, %v427
      %v438 = vpack.c.b16 %v430, %v429
      %447 = vmatpush.bf16.msra.mxu0 %v438
      %448 = vmatpush.bf16.msra.mxu0 %v437
      %449 = vmatpush.bf16.msra.mxu0 %v436
      %450 = vmatpush.bf16.msra.mxu0 %v435
      %451 = vmatpush.bf16.msra.mxu0 %v434
      %452 = vmatpush.bf16.msra.mxu0 %v433
      %453 = vmatpush.bf16.msra.mxu0 %v432
      %454 = vmatpush.bf16.msra.mxu0 %v431
      %455 = vmatmul.bf16.gmra.mxu0 %v291
      %v456 = vpop.f32.mrf.mxu0
      %v457 = vadd.f32 0.0, %v456
      %v458 = vpop.f32.mrf.mxu0
      %v459 = vadd.f32 0.0, %v458
      %460 = vmatmul.bf16.gmra.mxu0 %v292
      %v461 = vpop.f32.mrf.mxu0
      %v462 = vadd.f32 0.0, %v461
      %v463 = vpop.f32.mrf.mxu0
      %v464 = vadd.f32 0.0, %v463
      %465 = vmatmul.bf16.gmra.mxu0 %v293
      %v466 = vpop.f32.mrf.mxu0
      %v467 = vadd.f32 0.0, %v466
      %v468 = vpop.f32.mrf.mxu0
      %v469 = vadd.f32 0.0, %v468
      %470 = vmatmul.bf16.gmra.mxu0 %v294
      %v471 = vpop.f32.mrf.mxu0
      %v472 = vadd.f32 0.0, %v471
      %v473 = vpop.f32.mrf.mxu0
      %v474 = vadd.f32 0.0, %v473
      %475 = vmatmul.bf16.gmra.mxu0 %v295
      %v476 = vpop.f32.mrf.mxu0
      %v477 = vadd.f32 0.0, %v476
      %v478 = vpop.f32.mrf.mxu0
      %v479 = vadd.f32 0.0, %v478
      %480 = vdwg.mxu0
      %vm491 = vcmask 1046528
      %v492 = vrot.slane %v457, 1
      %v493 = vrot.slane %v459, 1
      %v494 = vsel %vm491, %v492, %v493
      %v495 = vrot.slane %v462, 1
      %v496 = vsel %vm491, %v493, %v495
      %v497 = vrot.slane %v464, 1
      %v498 = vsel %vm491, %v495, %v497
      %v499 = vrot.slane %v467, 1
      %v500 = vsel %vm491, %v497, %v499
      %v501 = vrot.slane %v469, 1
      %v502 = vsel %vm491, %v499, %v501
      %v503 = vrot.slane %v472, 1
      %v504 = vsel %vm491, %v501, %v503
      %v505 = vrot.slane %v474, 1
      %v506 = vsel %vm491, %v503, %v505
      %v507 = vrot.slane %v477, 1
      %v508 = vsel %vm491, %v505, %v507
      %v509 = vrot.slane %v479, 1
      %v510 = vsel %vm491, %v507, %v509
      %v520 = vadd.f32 %v359, %v494
      %v521 = vadd.f32 %v361, %v496
      %v522 = vadd.f32 %v364, %v498
      %v523 = vadd.f32 %v366, %v500
      %v524 = vadd.f32 %v369, %v502
      %v525 = vadd.f32 %v371, %v504
      %v526 = vadd.f32 %v374, %v506
      %v527 = vadd.f32 %v376, %v508
      %v528 = vadd.f32 %v379, %v510
      %529 = vst [vmem:[#allocation2] sm:$0xff] %v520
      %530 = vst [vmem:[#allocation2 + $0x8] sm:$0xff] %v521
      %531 = vst [vmem:[#allocation2 + $0x10] sm:$0xff] %v522
      %532 = vst [vmem:[#allocation2 + $0x18] sm:$0xff] %v523
      %533 = vst [vmem:[#allocation2 + $0x20] sm:$0xff] %v524
      %534 = vst [vmem:[#allocation2 + $0x28] sm:$0xff] %v525
      %535 = vst [vmem:[#allocation2 + $0x30] sm:$0xff] %v526
      %536 = vst [vmem:[#allocation2 + $0x38] sm:$0xff] %v527
      %537 = vst [vmem:[#allocation2 + $0x40] sm:$0xff] %v528
      %s538 = sadd.s32 %s240, 8
      %s539 = sshra.s32 %s538, 3
      %s540 = sand.u32 %s538, 7
      %s541 = smul.addr %s539, 4
      %s542 = scalar_lea.vmem %s219, %s541
      %v543 = vld [vmem:[%s542] sm:$0xf]
      %v544 = vld [vmem:[%s542 + $0x4] sm:$0xf]
      %v545 = vld [vmem:[%s542 + $0x8] sm:$0xf]
      %v546 = vld [vmem:[%s542 + $0xc] sm:$0xf]
      %v547 = vld [vmem:[%s542 + $0x10] sm:$0xf]
      %v548 = vld [vmem:[%s542 + $0x14] sm:$0xf]
      %v549 = vld [vmem:[%s542 + $0x18] sm:$0xf]
      %v550 = vld [vmem:[%s542 + $0x1c] sm:$0xf]
      %v551 = vld [vmem:[%s542 + $0x20] sm:$0xf]
      %v552 = vld [vmem:[%s542 + $0x24] sm:$0xf]
      %s553 = scalar_lea.vmem %s223, 384
      %v554 = vld [vmem:[%s553] sm:$0xf]
      %v555 = vld [vmem:[%s553 + $0x4] sm:$0xf]
      %v556 = vld [vmem:[%s553 + $0x8] sm:$0xf]
      %v557 = vld [vmem:[%s553 + $0xc] sm:$0xf]
      %v558 = vld [vmem:[%s553 + $0x10] sm:$0xf]
      %v559 = vld [vmem:[%s553 + $0x14] sm:$0xf]
      %v560 = vld [vmem:[%s553 + $0x18] sm:$0xf]
      %v561 = vld [vmem:[%s553 + $0x1c] sm:$0xf]
      %v562 = vld [vmem:[%s553 + $0x20] sm:$0xf]
      %v563 = vld [vmem:[%s553 + $0x24] sm:$0xf]
      %v564 = vld [vmem:[%s553 + $0x28] sm:$0xf]
      %v565 = vld [vmem:[%s553 + $0x2c] sm:$0xf]
      %v566 = vld [vmem:[%s553 + $0x30] sm:$0xf]
      %v567 = vld [vmem:[%s553 + $0x34] sm:$0xf]
      %v568 = vld [vmem:[%s553 + $0x38] sm:$0xf]
      %v569 = vld [vmem:[%s553 + $0x3c] sm:$0xf]
      %v580 = vunpack.c.l.b16 %v543
      %v581 = vunpack.c.l.b16 %v544
      %v582 = vunpack.c.l.b16 %v545
      %v583 = vunpack.c.l.b16 %v546
      %v584 = vunpack.c.l.b16 %v547
      %v585 = vunpack.c.l.b16 %v548
      %v586 = vunpack.c.l.b16 %v549
      %v587 = vunpack.c.l.b16 %v550
      %v588 = vunpack.c.l.b16 %v551
      %v589 = vunpack.c.l.b16 %v552
      %v590 = vpack.c.b16 %v581, %v580
      %v591 = vpack.c.b16 %v583, %v582
      %v592 = vpack.c.b16 %v585, %v584
      %v593 = vpack.c.b16 %v587, %v586
      %v594 = vpack.c.b16 %v589, %v588
      %v616 = vunpack.c.l.b16 %v554
      %v617 = vunpack.c.l.b16 %v555
      %v618 = vunpack.c.l.b16 %v556
      %v619 = vunpack.c.l.b16 %v557
      %v620 = vunpack.c.l.b16 %v558
      %v621 = vunpack.c.l.b16 %v559
      %v622 = vunpack.c.l.b16 %v560
      %v623 = vunpack.c.l.b16 %v561
      %v624 = vunpack.c.l.b16 %v562
      %v625 = vunpack.c.l.b16 %v563
      %v626 = vunpack.c.l.b16 %v564
      %v627 = vunpack.c.l.b16 %v565
      %v628 = vunpack.c.l.b16 %v566
      %v629 = vunpack.c.l.b16 %v567
      %v630 = vunpack.c.l.b16 %v568
      %v631 = vunpack.c.l.b16 %v569
      %v632 = vpack.c.b16 %v617, %v616
      %v633 = vpack.c.b16 %v619, %v618
      %v634 = vpack.c.b16 %v621, %v620
      %v635 = vpack.c.b16 %v623, %v622
      %v636 = vpack.c.b16 %v625, %v624
      %v637 = vpack.c.b16 %v627, %v626
      %v638 = vpack.c.b16 %v629, %v628
      %v639 = vpack.c.b16 %v631, %v630
      %648 = vmatpush.bf16.msra.mxu0 %v639
      %649 = vmatpush.bf16.msra.mxu0 %v638
      %650 = vmatpush.bf16.msra.mxu0 %v637
      %651 = vmatpush.bf16.msra.mxu0 %v636
      %652 = vmatpush.bf16.msra.mxu0 %v635
      %653 = vmatpush.bf16.msra.mxu0 %v634
      %654 = vmatpush.bf16.msra.mxu0 %v633
      %655 = vmatpush.bf16.msra.mxu0 %v632
      %656 = vmatmul.bf16.gmra.mxu0 %v590
      %v657 = vpop.f32.mrf.mxu0
      %v658 = vadd.f32 0.0, %v657
      %v659 = vpop.f32.mrf.mxu0
      %v660 = vadd.f32 0.0, %v659
      %661 = vmatmul.bf16.gmra.mxu0 %v591
      %v662 = vpop.f32.mrf.mxu0
      %v663 = vadd.f32 0.0, %v662
      %v664 = vpop.f32.mrf.mxu0
      %v665 = vadd.f32 0.0, %v664
      %666 = vmatmul.bf16.gmra.mxu0 %v592
      %v667 = vpop.f32.mrf.mxu0
      %v668 = vadd.f32 0.0, %v667
      %v669 = vpop.f32.mrf.mxu0
      %v670 = vadd.f32 0.0, %v669
      %671 = vmatmul.bf16.gmra.mxu0 %v593
      %v672 = vpop.f32.mrf.mxu0
      %v673 = vadd.f32 0.0, %v672
      %v674 = vpop.f32.mrf.mxu0
      %v675 = vadd.f32 0.0, %v674
      %676 = vmatmul.bf16.gmra.mxu0 %v594
      %v677 = vpop.f32.mrf.mxu0
      %v678 = vadd.f32 0.0, %v677
      %v679 = vpop.f32.mrf.mxu0
      %v680 = vadd.f32 0.0, %v679
      %681 = vdwg.mxu0
      %s682 = scalar_lea.vmem %s223, 512
      %v683 = vld [vmem:[%s682] sm:$0xf]
      %v684 = vld [vmem:[%s682 + $0x4] sm:$0xf]
      %v685 = vld [vmem:[%s682 + $0x8] sm:$0xf]
      %v686 = vld [vmem:[%s682 + $0xc] sm:$0xf]
      %v687 = vld [vmem:[%s682 + $0x10] sm:$0xf]
      %v688 = vld [vmem:[%s682 + $0x14] sm:$0xf]
      %v689 = vld [vmem:[%s682 + $0x18] sm:$0xf]
      %v690 = vld [vmem:[%s682 + $0x1c] sm:$0xf]
      %v691 = vld [vmem:[%s682 + $0x20] sm:$0xf]
      %v692 = vld [vmem:[%s682 + $0x24] sm:$0xf]
      %v693 = vld [vmem:[%s682 + $0x28] sm:$0xf]
      %v694 = vld [vmem:[%s682 + $0x2c] sm:$0xf]
      %v695 = vld [vmem:[%s682 + $0x30] sm:$0xf]
      %v696 = vld [vmem:[%s682 + $0x34] sm:$0xf]
      %v697 = vld [vmem:[%s682 + $0x38] sm:$0xf]
      %v698 = vld [vmem:[%s682 + $0x3c] sm:$0xf]
      %v715 = vunpack.c.l.b16 %v683
      %v716 = vunpack.c.l.b16 %v684
      %v717 = vunpack.c.l.b16 %v685
      %v718 = vunpack.c.l.b16 %v686
      %v719 = vunpack.c.l.b16 %v687
      %v720 = vunpack.c.l.b16 %v688
      %v721 = vunpack.c.l.b16 %v689
      %v722 = vunpack.c.l.b16 %v690
      %v723 = vunpack.c.l.b16 %v691
      %v724 = vunpack.c.l.b16 %v692
      %v725 = vunpack.c.l.b16 %v693
      %v726 = vunpack.c.l.b16 %v694
      %v727 = vunpack.c.l.b16 %v695
      %v728 = vunpack.c.l.b16 %v696
      %v729 = vunpack.c.l.b16 %v697
      %v730 = vunpack.c.l.b16 %v698
      %v731 = vpack.c.b16 %v716, %v715
      %v732 = vpack.c.b16 %v718, %v717
      %v733 = vpack.c.b16 %v720, %v719
      %v734 = vpack.c.b16 %v722, %v721
      %v735 = vpack.c.b16 %v724, %v723
      %v736 = vpack.c.b16 %v726, %v725
      %v737 = vpack.c.b16 %v728, %v727
      %v738 = vpack.c.b16 %v730, %v729
      %747 = vmatpush.bf16.msra.mxu0 %v738
      %748 = vmatpush.bf16.msra.mxu0 %v737
      %749 = vmatpush.bf16.msra.mxu0 %v736
      %750 = vmatpush.bf16.msra.mxu0 %v735
      %751 = vmatpush.bf16.msra.mxu0 %v734
      %752 = vmatpush.bf16.msra.mxu0 %v733
      %753 = vmatpush.bf16.msra.mxu0 %v732
      %754 = vmatpush.bf16.msra.mxu0 %v731
      %755 = vmatmul.bf16.gmra.mxu0 %v590
      %v756 = vpop.f32.mrf.mxu0
      %v757 = vadd.f32 0.0, %v756
      %v758 = vpop.f32.mrf.mxu0
      %v759 = vadd.f32 0.0, %v758
      %760 = vmatmul.bf16.gmra.mxu0 %v591
      %v761 = vpop.f32.mrf.mxu0
      %v762 = vadd.f32 0.0, %v761
      %v763 = vpop.f32.mrf.mxu0
      %v764 = vadd.f32 0.0, %v763
      %765 = vmatmul.bf16.gmra.mxu0 %v592
      %v766 = vpop.f32.mrf.mxu0
      %v767 = vadd.f32 0.0, %v766
      %v768 = vpop.f32.mrf.mxu0
      %v769 = vadd.f32 0.0, %v768
      %770 = vmatmul.bf16.gmra.mxu0 %v593
      %v771 = vpop.f32.mrf.mxu0
      %v772 = vadd.f32 0.0, %v771
      %v773 = vpop.f32.mrf.mxu0
      %v774 = vadd.f32 0.0, %v773
      %775 = vmatmul.bf16.gmra.mxu0 %v594
      %v776 = vpop.f32.mrf.mxu0
      %v777 = vadd.f32 0.0, %v776
      %v778 = vpop.f32.mrf.mxu0
      %v779 = vadd.f32 0.0, %v778
      %780 = vdwg.mxu0
      %v791 = vrot.slane %v757, 1
      %v792 = vrot.slane %v759, 1
      %v793 = vsel %vm491, %v791, %v792
      %v794 = vrot.slane %v762, 1
      %v795 = vsel %vm491, %v792, %v794
      %v796 = vrot.slane %v764, 1
      %v797 = vsel %vm491, %v794, %v796
      %v798 = vrot.slane %v767, 1
      %v799 = vsel %vm491, %v796, %v798
      %v800 = vrot.slane %v769, 1
      %v801 = vsel %vm491, %v798, %v800
      %v802 = vrot.slane %v772, 1
      %v803 = vsel %vm491, %v800, %v802
      %v804 = vrot.slane %v774, 1
      %v805 = vsel %vm491, %v802, %v804
      %v806 = vrot.slane %v777, 1
      %v807 = vsel %vm491, %v804, %v806
      %v808 = vrot.slane %v779, 1
      %v809 = vsel %vm491, %v806, %v808
      %v820 = vadd.f32 %v658, %v793
      %v821 = vadd.f32 %v660, %v795
      %v822 = vadd.f32 %v663, %v797
      %v823 = vadd.f32 %v665, %v799
      %v824 = vadd.f32 %v668, %v801
      %v825 = vadd.f32 %v670, %v803
      %v826 = vadd.f32 %v673, %v805
      %v827 = vadd.f32 %v675, %v807
      %v828 = vadd.f32 %v678, %v809
      %v829 = vadd.f32 %v680, %v808
      %v830 = vld [vmem:[#allocation2] sm:$0xff]
      %v831 = vld [vmem:[#allocation2 + $0x8] sm:$0xff]
      %v832 = vld [vmem:[#allocation2 + $0x10] sm:$0xff]
      %v833 = vld [vmem:[#allocation2 + $0x18] sm:$0xff]
      %v834 = vld [vmem:[#allocation2 + $0x20] sm:$0xff]
      %v835 = vld [vmem:[#allocation2 + $0x28] sm:$0xff]
      %v836 = vld [vmem:[#allocation2 + $0x30] sm:$0xff]
      %v837 = vld [vmem:[#allocation2 + $0x38] sm:$0xff]
      %v838 = vld [vmem:[#allocation2 + $0x40] sm:$0xff]
      %v849 = vrot.slane %v820, 1
      %v850 = vrot.slane %v821, 1
      %v851 = vsel %vm491, %v849, %v850
      %v852 = vrot.slane %v822, 1
      %v853 = vsel %vm491, %v850, %v852
      %v854 = vrot.slane %v823, 1
      %v855 = vsel %vm491, %v852, %v854
      %v856 = vrot.slane %v824, 1
      %v857 = vsel %vm491, %v854, %v856
      %v858 = vrot.slane %v825, 1
      %v859 = vsel %vm491, %v856, %v858
      %v860 = vrot.slane %v826, 1
      %v861 = vsel %vm491, %v858, %v860
      %v862 = vrot.slane %v827, 1
      %v863 = vsel %vm491, %v860, %v862
      %v864 = vrot.slane %v828, 1
      %v865 = vsel %vm491, %v862, %v864
      %v866 = vrot.slane %v829, 1
      %v867 = vsel %vm491, %v864, %v866
      %v877 = vadd.f32 %v830, %v851
      %v878 = vadd.f32 %v831, %v853
      %v879 = vadd.f32 %v832, %v855
      %v880 = vadd.f32 %v833, %v857
      %v881 = vadd.f32 %v834, %v859
      %v882 = vadd.f32 %v835, %v861
      %v883 = vadd.f32 %v836, %v863
      %v884 = vadd.f32 %v837, %v865
      %v885 = vadd.f32 %v838, %v867
      %886 = vst [vmem:[#allocation2] sm:$0xff] %v877
      %887 = vst [vmem:[#allocation2 + $0x8] sm:$0xff] %v878
      %888 = vst [vmem:[#allocation2 + $0x10] sm:$0xff] %v879
      %889 = vst [vmem:[#allocation2 + $0x18] sm:$0xff] %v880
      %890 = vst [vmem:[#allocation2 + $0x20] sm:$0xff] %v881
      %891 = vst [vmem:[#allocation2 + $0x28] sm:$0xff] %v882
      %892 = vst [vmem:[#allocation2 + $0x30] sm:$0xff] %v883
      %893 = vst [vmem:[#allocation2 + $0x38] sm:$0xff] %v884
      %894 = vst [vmem:[#allocation2 + $0x40] sm:$0xff] %v885
      %s895 = sadd.s32 %s241, 11
      %s896 = smul.addr %s895, 4
      %s897 = scalar_lea.vmem %s219, %s896
      %v898 = vld [vmem:[%s897] sm:$0xf]
      %v899 = vld [vmem:[%s897 + $0x4] sm:$0xf]
      %v900 = vld [vmem:[%s897 + $0x8] sm:$0xf]
      %v901 = vld [vmem:[%s897 + $0xc] sm:$0xf]
      %v902 = vld [vmem:[%s897 + $0x10] sm:$0xf]
      %v903 = vld [vmem:[%s897 + $0x14] sm:$0xf]
      %v904 = vld [vmem:[%s897 + $0x18] sm:$0xf]
      %v905 = vld [vmem:[%s897 + $0x1c] sm:$0xf]
      %v906 = vld [vmem:[%s897 + $0x20] sm:$0xf]
      %s907 = scalar_lea.vmem %s223, 64
      %v908 = vld [vmem:[%s907] sm:$0xf]
      %v909 = vld [vmem:[%s907 + $0x4] sm:$0xf]
      %v910 = vld [vmem:[%s907 + $0x8] sm:$0xf]
      %v911 = vld [vmem:[%s907 + $0xc] sm:$0xf]
      %v912 = vld [vmem:[%s907 + $0x10] sm:$0xf]
      %v913 = vld [vmem:[%s907 + $0x14] sm:$0xf]
      %v914 = vld [vmem:[%s907 + $0x18] sm:$0xf]
      %v915 = vld [vmem:[%s907 + $0x1c] sm:$0xf]
      %v916 = vld [vmem:[%s907 + $0x20] sm:$0xf]
      %v917 = vld [vmem:[%s907 + $0x24] sm:$0xf]
      %v918 = vld [vmem:[%s907 + $0x28] sm:$0xf]
      %v919 = vld [vmem:[%s907 + $0x2c] sm:$0xf]
      %v920 = vld [vmem:[%s907 + $0x30] sm:$0xf]
      %v921 = vld [vmem:[%s907 + $0x34] sm:$0xf]
      %v922 = vld [vmem:[%s907 + $0x38] sm:$0xf]
      %v923 = vld [vmem:[%s907 + $0x3c] sm:$0xf]
      %v933 = vunpack.c.l.b16 %v898
      %v934 = vunpack.c.l.b16 %v899
      %v935 = vunpack.c.l.b16 %v900
      %v936 = vunpack.c.l.b16 %v901
      %v937 = vunpack.c.l.b16 %v902
      %v938 = vunpack.c.l.b16 %v903
      %v939 = vunpack.c.l.b16 %v904
      %v940 = vunpack.c.l.b16 %v905
      %v941 = vunpack.c.l.b16 %v906
      %v942 = vpack.c.b16 %v934, %v933
      %v943 = vpack.c.b16 %v936, %v935
      %v944 = vpack.c.b16 %v938, %v937
      %v945 = vpack.c.b16 %v940, %v939
      %v946 = vpack.c.b16 %v941, %v941
      %v968 = vunpack.c.l.b16 %v908
      %v969 = vunpack.c.l.b16 %v909
      %v970 = vunpack.c.l.b16 %v910
      %v971 = vunpack.c.l.b16 %v911
      %v972 = vunpack.c.l.b16 %v912
      %v973 = vunpack.c.l.b16 %v913
      %v974 = vunpack.c.l.b16 %v914
      %v975 = vunpack.c.l.b16 %v915
      %v976 = vunpack.c.l.b16 %v916
      %v977 = vunpack.c.l.b16 %v917
      %v978 = vunpack.c.l.b16 %v918
      %v979 = vunpack.c.l.b16 %v919
      %v980 = vunpack.c.l.b16 %v920
      %v981 = vunpack.c.l.b16 %v921
      %v982 = vunpack.c.l.b16 %v922
      %v983 = vunpack.c.l.b16 %v923
      %v984 = vpack.c.b16 %v969, %v968
      %v985 = vpack.c.b16 %v971, %v970
      %v986 = vpack.c.b16 %v973, %v972
      %v987 = vpack.c.b16 %v975, %v974
      %v988 = vpack.c.b16 %v977, %v976
      %v989 = vpack.c.b16 %v979, %v978
      %v990 = vpack.c.b16 %v981, %v980
      %v991 = vpack.c.b16 %v983, %v982
      %1000 = vmatpush.bf16.msra.mxu0 %v991
      %1001 = vmatpush.bf16.msra.mxu0 %v990
      %1002 = vmatpush.bf16.msra.mxu0 %v989
      %1003 = vmatpush.bf16.msra.mxu0 %v988
      %1004 = vmatpush.bf16.msra.mxu0 %v987
      %1005 = vmatpush.bf16.msra.mxu0 %v986
      %1006 = vmatpush.bf16.msra.mxu0 %v985
      %1007 = vmatpush.bf16.msra.mxu0 %v984
      %1008 = vmatmul.bf16.gmra.mxu0 %v942
      %v1009 = vpop.f32.mrf.mxu0
      %v1010 = vadd.f32 0.0, %v1009
      %v1011 = vpop.f32.mrf.mxu0
      %v1012 = vadd.f32 0.0, %v1011
      %1013 = vmatmul.bf16.gmra.mxu0 %v943
      %v1014 = vpop.f32.mrf.mxu0
      %v1015 = vadd.f32 0.0, %v1014
      %v1016 = vpop.f32.mrf.mxu0
      %v1017 = vadd.f32 0.0, %v1016
      %1018 = vmatmul.bf16.gmra.mxu0 %v944
      %v1019 = vpop.f32.mrf.mxu0
      %v1020 = vadd.f32 0.0, %v1019
      %v1021 = vpop.f32.mrf.mxu0
      %v1022 = vadd.f32 0.0, %v1021
      %1023 = vmatmul.bf16.gmra.mxu0 %v945
      %v1024 = vpop.f32.mrf.mxu0
      %v1025 = vadd.f32 0.0, %v1024
      %v1026 = vpop.f32.mrf.mxu0
      %v1027 = vadd.f32 0.0, %v1026
      %1028 = vmatmul.bf16.gmra.mxu0 %v946
      %v1029 = vpop.f32.mrf.mxu0
      %v1030 = vadd.f32 0.0, %v1029
      %v1031 = vpop.f32.mrf.mxu0
      %1032 = vdwg.mxu0
      %v1033 = vld [vmem:[#allocation2] sm:$0xff]
      %v1034 = vld [vmem:[#allocation2 + $0x8] sm:$0xff]
      %v1035 = vld [vmem:[#allocation2 + $0x10] sm:$0xff]
      %v1036 = vld [vmem:[#allocation2 + $0x18] sm:$0xff]
      %v1037 = vld [vmem:[#allocation2 + $0x20] sm:$0xff]
      %v1038 = vld [vmem:[#allocation2 + $0x28] sm:$0xff]
      %v1039 = vld [vmem:[#allocation2 + $0x30] sm:$0xff]
      %v1040 = vld [vmem:[#allocation2 + $0x38] sm:$0xff]
      %v1041 = vld [vmem:[#allocation2 + $0x40] sm:$0xff]
      %v1042 = vadd.f32 %v1033, %v1010
      %v1043 = vadd.f32 %v1034, %v1012
      %v1044 = vadd.f32 %v1035, %v1015
      %v1045 = vadd.f32 %v1036, %v1017
      %v1046 = vadd.f32 %v1037, %v1020
      %v1047 = vadd.f32 %v1038, %v1022
      %v1048 = vadd.f32 %v1039, %v1025
      %v1049 = vadd.f32 %v1040, %v1027
      %v1050 = vadd.f32 %v1041, %v1030
      %1051 = vst [vmem:[#allocation2] sm:$0xff] %v1042
      %1052 = vst [vmem:[#allocation2 + $0x8] sm:$0xff] %v1043
      %1053 = vst [vmem:[#allocation2 + $0x10] sm:$0xff] %v1044
      %1054 = vst [vmem:[#allocation2 + $0x18] sm:$0xff] %v1045
      %1055 = vst [vmem:[#allocation2 + $0x20] sm:$0xff] %v1046
      %1056 = vst [vmem:[#allocation2 + $0x28] sm:$0xff] %v1047
      %1057 = vst [vmem:[#allocation2 + $0x30] sm:$0xff] %v1048
      %1058 = vst [vmem:[#allocation2 + $0x38] sm:$0xff] %v1049
      %1059 = vst [vmem:[#allocation2 + $0x40] sm:$0xff] %v1050
      %s1060 = sadd.s32 %s539, 11
      %s1061 = smul.addr %s1060, 4
      %s1062 = scalar_lea.vmem %s219, %s1061
      %v1063 = vld [vmem:[%s1062] sm:$0xf]
      %v1064 = vld [vmem:[%s1062 + $0x4] sm:$0xf]
      %v1065 = vld [vmem:[%s1062 + $0x8] sm:$0xf]
      %v1066 = vld [vmem:[%s1062 + $0xc] sm:$0xf]
      %v1067 = vld [vmem:[%s1062 + $0x10] sm:$0xf]
      %v1068 = vld [vmem:[%s1062 + $0x14] sm:$0xf]
      %v1069 = vld [vmem:[%s1062 + $0x18] sm:$0xf]
      %v1070 = vld [vmem:[%s1062 + $0x1c] sm:$0xf]
      %v1071 = vld [vmem:[%s1062 + $0x20] sm:$0xf]
      %v1072 = vld [vmem:[%s1062 + $0x24] sm:$0xf]
      %s1073 = scalar_lea.vmem %s223, 448
      %v1074 = vld [vmem:[%s1073] sm:$0xf]
      %v1075 = vld [vmem:[%s1073 + $0x4] sm:$0xf]
      %v1076 = vld [vmem:[%s1073 + $0x8] sm:$0xf]
      %v1077 = vld [vmem:[%s1073 + $0xc] sm:$0xf]
      %v1078 = vld [vmem:[%s1073 + $0x10] sm:$0xf]
      %v1079 = vld [vmem:[%s1073 + $0x14] sm:$0xf]
      %v1080 = vld [vmem:[%s1073 + $0x18] sm:$0xf]
      %v1081 = vld [vmem:[%s1073 + $0x1c] sm:$0xf]
      %v1082 = vld [vmem:[%s1073 + $0x20] sm:$0xf]
      %v1083 = vld [vmem:[%s1073 + $0x24] sm:$0xf]
      %v1084 = vld [vmem:[%s1073 + $0x28] sm:$0xf]
      %v1085 = vld [vmem:[%s1073 + $0x2c] sm:$0xf]
      %v1086 = vld [vmem:[%s1073 + $0x30] sm:$0xf]
      %v1087 = vld [vmem:[%s1073 + $0x34] sm:$0xf]
      %v1088 = vld [vmem:[%s1073 + $0x38] sm:$0xf]
      %v1089 = vld [vmem:[%s1073 + $0x3c] sm:$0xf]
      %v1100 = vunpack.c.l.b16 %v1063
      %v1101 = vunpack.c.l.b16 %v1064
      %v1102 = vunpack.c.l.b16 %v1065
      %v1103 = vunpack.c.l.b16 %v1066
      %v1104 = vunpack.c.l.b16 %v1067
      %v1105 = vunpack.c.l.b16 %v1068
      %v1106 = vunpack.c.l.b16 %v1069
      %v1107 = vunpack.c.l.b16 %v1070
      %v1108 = vunpack.c.l.b16 %v1071
      %v1109 = vunpack.c.l.b16 %v1072
      %v1110 = vpack.c.b16 %v1101, %v1100
      %v1111 = vpack.c.b16 %v1103, %v1102
      %v1112 = vpack.c.b16 %v1105, %v1104
      %v1113 = vpack.c.b16 %v1107, %v1106
      %v1114 = vpack.c.b16 %v1109, %v1108
      %v1136 = vunpack.c.l.b16 %v1074
      %v1137 = vunpack.c.l.b16 %v1075
      %v1138 = vunpack.c.l.b16 %v1076
      %v1139 = vunpack.c.l.b16 %v1077
      %v1140 = vunpack.c.l.b16 %v1078
      %v1141 = vunpack.c.l.b16 %v1079
      %v1142 = vunpack.c.l.b16 %v1080
      %v1143 = vunpack.c.l.b16 %v1081
      %v1144 = vunpack.c.l.b16 %v1082
      %v1145 = vunpack.c.l.b16 %v1083
      %v1146 = vunpack.c.l.b16 %v1084
      %v1147 = vunpack.c.l.b16 %v1085
      %v1148 = vunpack.c.l.b16 %v1086
      %v1149 = vunpack.c.l.b16 %v1087
      %v1150 = vunpack.c.l.b16 %v1088
      %v1151 = vunpack.c.l.b16 %v1089
      %v1152 = vpack.c.b16 %v1137, %v1136
      %v1153 = vpack.c.b16 %v1139, %v1138
      %v1154 = vpack.c.b16 %v1141, %v1140
      %v1155 = vpack.c.b16 %v1143, %v1142
      %v1156 = vpack.c.b16 %v1145, %v1144
      %v1157 = vpack.c.b16 %v1147, %v1146
      %v1158 = vpack.c.b16 %v1149, %v1148
      %v1159 = vpack.c.b16 %v1151, %v1150
      %1168 = vmatpush.bf16.msra.mxu0 %v1159
      %1169 = vmatpush.bf16.msra.mxu0 %v1158
      %1170 = vmatpush.bf16.msra.mxu0 %v1157
      %1171 = vmatpush.bf16.msra.mxu0 %v1156
      %1172 = vmatpush.bf16.msra.mxu0 %v1155
      %1173 = vmatpush.bf16.msra.mxu0 %v1154
      %1174 = vmatpush.bf16.msra.mxu0 %v1153
      %1175 = vmatpush.bf16.msra.mxu0 %v1152
      %1176 = vmatmul.bf16.gmra.mxu0 %v1110
      %v1177 = vpop.f32.mrf.mxu0
      %v1178 = vadd.f32 0.0, %v1177
      %v1179 = vpop.f32.mrf.mxu0
      %v1180 = vadd.f32 0.0, %v1179
      %1181 = vmatmul.bf16.gmra.mxu0 %v1111
      %v1182 = vpop.f32.mrf.mxu0
      %v1183 = vadd.f32 0.0, %v1182
      %v1184 = vpop.f32.mrf.mxu0
      %v1185 = vadd.f32 0.0, %v1184
      %1186 = vmatmul.bf16.gmra.mxu0 %v1112
      %v1187 = vpop.f32.mrf.mxu0
      %v1188 = vadd.f32 0.0, %v1187
      %v1189 = vpop.f32.mrf.mxu0
      %v1190 = vadd.f32 0.0, %v1189
      %1191 = vmatmul.bf16.gmra.mxu0 %v1113
      %v1192 = vpop.f32.mrf.mxu0
      %v1193 = vadd.f32 0.0, %v1192
      %v1194 = vpop.f32.mrf.mxu0
      %v1195 = vadd.f32 0.0, %v1194
      %1196 = vmatmul.bf16.gmra.mxu0 %v1114
      %v1197 = vpop.f32.mrf.mxu0
      %v1198 = vadd.f32 0.0, %v1197
      %v1199 = vpop.f32.mrf.mxu0
      %v1200 = vadd.f32 0.0, %v1199
      %1201 = vdwg.mxu0
      %v1202 = vld [vmem:[#allocation2] sm:$0xff]
      %v1203 = vld [vmem:[#allocation2 + $0x8] sm:$0xff]
      %v1204 = vld [vmem:[#allocation2 + $0x10] sm:$0xff]
      %v1205 = vld [vmem:[#allocation2 + $0x18] sm:$0xff]
      %v1206 = vld [vmem:[#allocation2 + $0x20] sm:$0xff]
      %v1207 = vld [vmem:[#allocation2 + $0x28] sm:$0xff]
      %v1208 = vld [vmem:[#allocation2 + $0x30] sm:$0xff]
      %v1209 = vld [vmem:[#allocation2 + $0x38] sm:$0xff]
      %v1210 = vld [vmem:[#allocation2 + $0x40] sm:$0xff]
      %v1221 = vrot.slane %v1178, 1
      %v1222 = vrot.slane %v1180, 1
      %v1223 = vsel %vm491, %v1221, %v1222
      %v1224 = vrot.slane %v1183, 1
      %v1225 = vsel %vm491, %v1222, %v1224
      %v1226 = vrot.slane %v1185, 1
      %v1227 = vsel %vm491, %v1224, %v1226
      %v1228 = vrot.slane %v1188, 1
      %v1229 = vsel %vm491, %v1226, %v1228
      %v1230 = vrot.slane %v1190, 1
      %v1231 = vsel %vm491, %v1228, %v1230
      %v1232 = vrot.slane %v1193, 1
      %v1233 = vsel %vm491, %v1230, %v1232
      %v1234 = vrot.slane %v1195, 1
      %v1235 = vsel %vm491, %v1232, %v1234
      %v1236 = vrot.slane %v1198, 1
      %v1237 = vsel %vm491, %v1234, %v1236
      %v1238 = vrot.slane %v1200, 1
      %v1239 = vsel %vm491, %v1236, %v1238
      %v1249 = vadd.f32 %v1202, %v1223
      %v1250 = vadd.f32 %v1203, %v1225
      %v1251 = vadd.f32 %v1204, %v1227
      %v1252 = vadd.f32 %v1205, %v1229
      %v1253 = vadd.f32 %v1206, %v1231
      %v1254 = vadd.f32 %v1207, %v1233
      %v1255 = vadd.f32 %v1208, %v1235
      %v1256 = vadd.f32 %v1209, %v1237
      %v1257 = vadd.f32 %v1210, %v1239
      %1258 = vst [vmem:[#allocation2] sm:$0xff] %v1249
      %1259 = vst [vmem:[#allocation2 + $0x8] sm:$0xff] %v1250
      %1260 = vst [vmem:[#allocation2 + $0x10] sm:$0xff] %v1251
      %1261 = vst [vmem:[#allocation2 + $0x18] sm:$0xff] %v1252
      %1262 = vst [vmem:[#allocation2 + $0x20] sm:$0xff] %v1253
      %1263 = vst [vmem:[#allocation2 + $0x28] sm:$0xff] %v1254
      %1264 = vst [vmem:[#allocation2 + $0x30] sm:$0xff] %v1255
      %1265 = vst [vmem:[#allocation2 + $0x38] sm:$0xff] %v1256
      %1266 = vst [vmem:[#allocation2 + $0x40] sm:$0xff] %v1257
      %s1267 = sadd.s32 %s241, 22
      %s1268 = smul.addr %s1267, 4
      %s1269 = scalar_lea.vmem %s219, %s1268
      %v1270 = vld [vmem:[%s1269] sm:$0xf]
      %v1271 = vld [vmem:[%s1269 + $0x4] sm:$0xf]
      %v1272 = vld [vmem:[%s1269 + $0x8] sm:$0xf]
      %v1273 = vld [vmem:[%s1269 + $0xc] sm:$0xf]
      %v1274 = vld [vmem:[%s1269 + $0x10] sm:$0xf]
      %v1275 = vld [vmem:[%s1269 + $0x14] sm:$0xf]
      %v1276 = vld [vmem:[%s1269 + $0x18] sm:$0xf]
      %v1277 = vld [vmem:[%s1269 + $0x1c] sm:$0xf]
      %v1278 = vld [vmem:[%s1269 + $0x20] sm:$0xf]
      %v1279 = vld [vmem:[%s1269 + $0x24] sm:$0xf]
      %s1280 = scalar_lea.vmem %s223, 192
      %v1281 = vld [vmem:[%s1280] sm:$0xf]
      %v1282 = vld [vmem:[%s1280 + $0x4] sm:$0xf]
      %v1283 = vld [vmem:[%s1280 + $0x8] sm:$0xf]
      %v1284 = vld [vmem:[%s1280 + $0xc] sm:$0xf]
      %v1285 = vld [vmem:[%s1280 + $0x10] sm:$0xf]
      %v1286 = vld [vmem:[%s1280 + $0x14] sm:$0xf]
      %v1287 = vld [vmem:[%s1280 + $0x18] sm:$0xf]
      %v1288 = vld [vmem:[%s1280 + $0x1c] sm:$0xf]
      %v1289 = vld [vmem:[%s1280 + $0x20] sm:$0xf]
      %v1290 = vld [vmem:[%s1280 + $0x24] sm:$0xf]
      %v1291 = vld [vmem:[%s1280 + $0x28] sm:$0xf]
      %v1292 = vld [vmem:[%s1280 + $0x2c] sm:$0xf]
      %v1293 = vld [vmem:[%s1280 + $0x30] sm:$0xf]
      %v1294 = vld [vmem:[%s1280 + $0x34] sm:$0xf]
      %v1295 = vld [vmem:[%s1280 + $0x38] sm:$0xf]
      %v1296 = vld [vmem:[%s1280 + $0x3c] sm:$0xf]
      %v1307 = vunpack.c.l.b16 %v1270
      %v1308 = vunpack.c.l.b16 %v1271
      %v1309 = vunpack.c.l.b16 %v1272
      %v1310 = vunpack.c.l.b16 %v1273
      %v1311 = vunpack.c.l.b16 %v1274
      %v1312 = vunpack.c.l.b16 %v1275
      %v1313 = vunpack.c.l.b16 %v1276
      %v1314 = vunpack.c.l.b16 %v1277
      %v1315 = vunpack.c.l.b16 %v1278
      %v1316 = vunpack.c.l.b16 %v1279
      %v1317 = vpack.c.b16 %v1308, %v1307
      %v1318 = vpack.c.b16 %v1310, %v1309
      %v1319 = vpack.c.b16 %v1312, %v1311
      %v1320 = vpack.c.b16 %v1314, %v1313
      %v1321 = vpack.c.b16 %v1316, %v1315
      %v1343 = vunpack.c.l.b16 %v1281
      %v1344 = vunpack.c.l.b16 %v1282
      %v1345 = vunpack.c.l.b16 %v1283
      %v1346 = vunpack.c.l.b16 %v1284
      %v1347 = vunpack.c.l.b16 %v1285
      %v1348 = vunpack.c.l.b16 %v1286
      %v1349 = vunpack.c.l.b16 %v1287
      %v1350 = vunpack.c.l.b16 %v1288
      %v1351 = vunpack.c.l.b16 %v1289
      %v1352 = vunpack.c.l.b16 %v1290
      %v1353 = vunpack.c.l.b16 %v1291
      %v1354 = vunpack.c.l.b16 %v1292
      %v1355 = vunpack.c.l.b16 %v1293
      %v1356 = vunpack.c.l.b16 %v1294
      %v1357 = vunpack.c.l.b16 %v1295
      %v1358 = vunpack.c.l.b16 %v1296
      %v1359 = vpack.c.b16 %v1344, %v1343
      %v1360 = vpack.c.b16 %v1346, %v1345
      %v1361 = vpack.c.b16 %v1348, %v1347
      %v1362 = vpack.c.b16 %v1350, %v1349
      %v1363 = vpack.c.b16 %v1352, %v1351
      %v1364 = vpack.c.b16 %v1354, %v1353
      %v1365 = vpack.c.b16 %v1356, %v1355
      %v1366 = vpack.c.b16 %v1358, %v1357
      %1375 = vmatpush.bf16.msra.mxu0 %v1366
      %1376 = vmatpush.bf16.msra.mxu0 %v1365
      %1377 = vmatpush.bf16.msra.mxu0 %v1364
      %1378 = vmatpush.bf16.msra.mxu0 %v1363
      %1379 = vmatpush.bf16.msra.mxu0 %v1362
      %1380 = vmatpush.bf16.msra.mxu0 %v1361
      %1381 = vmatpush.bf16.msra.mxu0 %v1360
      %1382 = vmatpush.bf16.msra.mxu0 %v1359
      %1383 = vmatmul.bf16.gmra.mxu0 %v1317
      %v1384 = vpop.f32.mrf.mxu0
      %v1385 = vadd.f32 0.0, %v1384
      %v1386 = vpop.f32.mrf.mxu0
      %v1387 = vadd.f32 0.0, %v1386
      %1388 = vmatmul.bf16.gmra.mxu0 %v1318
      %v1389 = vpop.f32.mrf.mxu0
      %v1390 = vadd.f32 0.0, %v1389
      %v1391 = vpop.f32.mrf.mxu0
      %v1392 = vadd.f32 0.0, %v1391
      %1393 = vmatmul.bf16.gmra.mxu0 %v1319
      %v1394 = vpop.f32.mrf.mxu0
      %v1395 = vadd.f32 0.0, %v1394
      %v1396 = vpop.f32.mrf.mxu0
      %v1397 = vadd.f32 0.0, %v1396
      %1398 = vmatmul.bf16.gmra.mxu0 %v1320
      %v1399 = vpop.f32.mrf.mxu0
      %v1400 = vadd.f32 0.0, %v1399
      %v1401 = vpop.f32.mrf.mxu0
      %v1402 = vadd.f32 0.0, %v1401
      %1403 = vmatmul.bf16.gmra.mxu0 %v1321
      %v1404 = vpop.f32.mrf.mxu0
      %v1405 = vadd.f32 0.0, %v1404
      %v1406 = vpop.f32.mrf.mxu0
      %1407 = vdwg.mxu0
      %s1408 = scalar_lea.vmem %s223, 320
      %v1409 = vld [vmem:[%s1408] sm:$0xf]
      %v1410 = vld [vmem:[%s1408 + $0x4] sm:$0xf]
      %v1411 = vld [vmem:[%s1408 + $0x8] sm:$0xf]
      %v1412 = vld [vmem:[%s1408 + $0xc] sm:$0xf]
      %v1413 = vld [vmem:[%s1408 + $0x10] sm:$0xf]
      %v1414 = vld [vmem:[%s1408 + $0x14] sm:$0xf]
      %v1415 = vld [vmem:[%s1408 + $0x18] sm:$0xf]
      %v1416 = vld [vmem:[%s1408 + $0x1c] sm:$0xf]
      %v1417 = vld [vmem:[%s1408 + $0x20] sm:$0xf]
      %v1418 = vld [vmem:[%s1408 + $0x24] sm:$0xf]
      %v1419 = vld [vmem:[%s1408 + $0x28] sm:$0xf]
      %v1420 = vld [vmem:[%s1408 + $0x2c] sm:$0xf]
      %v1421 = vld [vmem:[%s1408 + $0x30] sm:$0xf]
      %v1422 = vld [vmem:[%s1408 + $0x34] sm:$0xf]
      %v1423 = vld [vmem:[%s1408 + $0x38] sm:$0xf]
      %v1424 = vld [vmem:[%s1408 + $0x3c] sm:$0xf]
      %v1441 = vunpack.c.l.b16 %v1409
      %v1442 = vunpack.c.l.b16 %v1410
      %v1443 = vunpack.c.l.b16 %v1411
      %v1444 = vunpack.c.l.b16 %v1412
      %v1445 = vunpack.c.l.b16 %v1413
      %v1446 = vunpack.c.l.b16 %v1414
      %v1447 = vunpack.c.l.b16 %v1415
      %v1448 = vunpack.c.l.b16 %v1416
      %v1449 = vunpack.c.l.b16 %v1417
      %v1450 = vunpack.c.l.b16 %v1418
      %v1451 = vunpack.c.l.b16 %v1419
      %v1452 = vunpack.c.l.b16 %v1420
      %v1453 = vunpack.c.l.b16 %v1421
      %v1454 = vunpack.c.l.b16 %v1422
      %v1455 = vunpack.c.l.b16 %v1423
      %v1456 = vunpack.c.l.b16 %v1424
      %v1457 = vpack.c.b16 %v1442, %v1441
      %v1458 = vpack.c.b16 %v1444, %v1443
      %v1459 = vpack.c.b16 %v1446, %v1445
      %v1460 = vpack.c.b16 %v1448, %v1447
      %v1461 = vpack.c.b16 %v1450, %v1449
      %v1462 = vpack.c.b16 %v1452, %v1451
      %v1463 = vpack.c.b16 %v1454, %v1453
      %v1464 = vpack.c.b16 %v1456, %v1455
      %1473 = vmatpush.bf16.msra.mxu0 %v1464
      %1474 = vmatpush.bf16.msra.mxu0 %v1463
      %1475 = vmatpush.bf16.msra.mxu0 %v1462
      %1476 = vmatpush.bf16.msra.mxu0 %v1461
      %1477 = vmatpush.bf16.msra.mxu0 %v1460
      %1478 = vmatpush.bf16.msra.mxu0 %v1459
      %1479 = vmatpush.bf16.msra.mxu0 %v1458
      %1480 = vmatpush.bf16.msra.mxu0 %v1457
      %1481 = vmatmul.bf16.gmra.mxu0 %v1317
      %v1482 = vpop.f32.mrf.mxu0
      %v1483 = vadd.f32 0.0, %v1482
      %v1484 = vpop.f32.mrf.mxu0
      %v1485 = vadd.f32 0.0, %v1484
      %1486 = vmatmul.bf16.gmra.mxu0 %v1318
      %v1487 = vpop.f32.mrf.mxu0
      %v1488 = vadd.f32 0.0, %v1487
      %v1489 = vpop.f32.mrf.mxu0
      %v1490 = vadd.f32 0.0, %v1489
      %1491 = vmatmul.bf16.gmra.mxu0 %v1319
      %v1492 = vpop.f32.mrf.mxu0
      %v1493 = vadd.f32 0.0, %v1492
      %v1494 = vpop.f32.mrf.mxu0
      %v1495 = vadd.f32 0.0, %v1494
      %1496 = vmatmul.bf16.gmra.mxu0 %v1320
      %v1497 = vpop.f32.mrf.mxu0
      %v1498 = vadd.f32 0.0, %v1497
      %v1499 = vpop.f32.mrf.mxu0
      %v1500 = vadd.f32 0.0, %v1499
      %1501 = vmatmul.bf16.gmra.mxu0 %v1321
      %v1502 = vpop.f32.mrf.mxu0
      %v1503 = vadd.f32 0.0, %v1502
      %v1504 = vpop.f32.mrf.mxu0
      %v1505 = vadd.f32 0.0, %v1504
      %1506 = vdwg.mxu0
      %v1517 = vrot.slane %v1483, 1
      %v1518 = vrot.slane %v1485, 1
      %v1519 = vsel %vm491, %v1517, %v1518
      %v1520 = vrot.slane %v1488, 1
      %v1521 = vsel %vm491, %v1518, %v1520
      %v1522 = vrot.slane %v1490, 1
      %v1523 = vsel %vm491, %v1520, %v1522
      %v1524 = vrot.slane %v1493, 1
      %v1525 = vsel %vm491, %v1522, %v1524
      %v1526 = vrot.slane %v1495, 1
      %v1527 = vsel %vm491, %v1524, %v1526
      %v1528 = vrot.slane %v1498, 1
      %v1529 = vsel %vm491, %v1526, %v1528
      %v1530 = vrot.slane %v1500, 1
      %v1531 = vsel %vm491, %v1528, %v1530
      %v1532 = vrot.slane %v1503, 1
      %v1533 = vsel %vm491, %v1530, %v1532
      %v1534 = vrot.slane %v1505, 1
      %v1535 = vsel %vm491, %v1532, %v1534
      %v1545 = vadd.f32 %v1385, %v1519
      %v1546 = vadd.f32 %v1387, %v1521
      %v1547 = vadd.f32 %v1390, %v1523
      %v1548 = vadd.f32 %v1392, %v1525
      %v1549 = vadd.f32 %v1395, %v1527
      %v1550 = vadd.f32 %v1397, %v1529
      %v1551 = vadd.f32 %v1400, %v1531
      %v1552 = vadd.f32 %v1402, %v1533
      %v1553 = vadd.f32 %v1405, %v1535
      %v1554 = vld [vmem:[#allocation2] sm:$0xff]
      %v1555 = vld [vmem:[#allocation2 + $0x8] sm:$0xff]
      %v1556 = vld [vmem:[#allocation2 + $0x10] sm:$0xff]
      %v1557 = vld [vmem:[#allocation2 + $0x18] sm:$0xff]
      %v1558 = vld [vmem:[#allocation2 + $0x20] sm:$0xff]
      %v1559 = vld [vmem:[#allocation2 + $0x28] sm:$0xff]
      %v1560 = vld [vmem:[#allocation2 + $0x30] sm:$0xff]
      %v1561 = vld [vmem:[#allocation2 + $0x38] sm:$0xff]
      %v1562 = vld [vmem:[#allocation2 + $0x40] sm:$0xff]
      %v1563 = vadd.f32 %v1554, %v1545
      %v1564 = vadd.f32 %v1555, %v1546
      %v1565 = vadd.f32 %v1556, %v1547
      %v1566 = vadd.f32 %v1557, %v1548
      %v1567 = vadd.f32 %v1558, %v1549
      %v1568 = vadd.f32 %v1559, %v1550
      %v1569 = vadd.f32 %v1560, %v1551
      %v1570 = vadd.f32 %v1561, %v1552
      %v1571 = vadd.f32 %v1562, %v1553
      %1572 = vst [vmem:[#allocation2] sm:$0xff] %v1563
      %1573 = vst [vmem:[#allocation2 + $0x8] sm:$0xff] %v1564
      %1574 = vst [vmem:[#allocation2 + $0x10] sm:$0xff] %v1565
      %1575 = vst [vmem:[#allocation2 + $0x18] sm:$0xff] %v1566
      %1576 = vst [vmem:[#allocation2 + $0x20] sm:$0xff] %v1567
      %1577 = vst [vmem:[#allocation2 + $0x28] sm:$0xff] %v1568
      %1578 = vst [vmem:[#allocation2 + $0x30] sm:$0xff] %v1569
      %1579 = vst [vmem:[#allocation2 + $0x38] sm:$0xff] %v1570
      %1580 = vst [vmem:[#allocation2 + $0x40] sm:$0xff] %v1571
      %s1581 = sadd.s32 %s241, 33
      %s1582 = smul.addr %s1581, 4
      %s1583 = scalar_lea.vmem %s219, %s1582
      %v1584 = vld [vmem:[%s1583] sm:$0xf]
      %v1585 = vld [vmem:[%s1583 + $0x4] sm:$0xf]
      %v1586 = vld [vmem:[%s1583 + $0x8] sm:$0xf]
      %v1587 = vld [vmem:[%s1583 + $0xc] sm:$0xf]
      %v1588 = vld [vmem:[%s1583 + $0x10] sm:$0xf]
      %v1589 = vld [vmem:[%s1583 + $0x14] sm:$0xf]
      %v1590 = vld [vmem:[%s1583 + $0x18] sm:$0xf]
      %v1591 = vld [vmem:[%s1583 + $0x1c] sm:$0xf]
      %v1592 = vld [vmem:[%s1583 + $0x20] sm:$0xf]
      %s1593 = scalar_lea.vmem %s223, 256
      %v1594 = vld [vmem:[%s1593] sm:$0xf]
      %v1595 = vld [vmem:[%s1593 + $0x4] sm:$0xf]
      %v1596 = vld [vmem:[%s1593 + $0x8] sm:$0xf]
      %v1597 = vld [vmem:[%s1593 + $0xc] sm:$0xf]
      %v1598 = vld [vmem:[%s1593 + $0x10] sm:$0xf]
      %v1599 = vld [vmem:[%s1593 + $0x14] sm:$0xf]
      %v1600 = vld [vmem:[%s1593 + $0x18] sm:$0xf]
      %v1601 = vld [vmem:[%s1593 + $0x1c] sm:$0xf]
      %v1602 = vld [vmem:[%s1593 + $0x20] sm:$0xf]
      %v1603 = vld [vmem:[%s1593 + $0x24] sm:$0xf]
      %v1604 = vld [vmem:[%s1593 + $0x28] sm:$0xf]
      %v1605 = vld [vmem:[%s1593 + $0x2c] sm:$0xf]
      %v1606 = vld [vmem:[%s1593 + $0x30] sm:$0xf]
      %v1607 = vld [vmem:[%s1593 + $0x34] sm:$0xf]
      %v1608 = vld [vmem:[%s1593 + $0x38] sm:$0xf]
      %v1609 = vld [vmem:[%s1593 + $0x3c] sm:$0xf]
      %v1619 = vunpack.c.l.b16 %v1584
      %v1620 = vunpack.c.l.b16 %v1585
      %v1621 = vunpack.c.l.b16 %v1586
      %v1622 = vunpack.c.l.b16 %v1587
      %v1623 = vunpack.c.l.b16 %v1588
      %v1624 = vunpack.c.l.b16 %v1589
      %v1625 = vunpack.c.l.b16 %v1590
      %v1626 = vunpack.c.l.b16 %v1591
      %v1627 = vunpack.c.l.b16 %v1592
      %v1628 = vpack.c.b16 %v1620, %v1619
      %v1629 = vpack.c.b16 %v1622, %v1621
      %v1630 = vpack.c.b16 %v1624, %v1623
      %v1631 = vpack.c.b16 %v1626, %v1625
      %v1632 = vpack.c.b16 %v1627, %v1627
      %v1654 = vunpack.c.l.b16 %v1594
      %v1655 = vunpack.c.l.b16 %v1595
      %v1656 = vunpack.c.l.b16 %v1596
      %v1657 = vunpack.c.l.b16 %v1597
      %v1658 = vunpack.c.l.b16 %v1598
      %v1659 = vunpack.c.l.b16 %v1599
      %v1660 = vunpack.c.l.b16 %v1600
      %v1661 = vunpack.c.l.b16 %v1601
      %v1662 = vunpack.c.l.b16 %v1602
      %v1663 = vunpack.c.l.b16 %v1603
      %v1664 = vunpack.c.l.b16 %v1604
      %v1665 = vunpack.c.l.b16 %v1605
      %v1666 = vunpack.c.l.b16 %v1606
      %v1667 = vunpack.c.l.b16 %v1607
      %v1668 = vunpack.c.l.b16 %v1608
      %v1669 = vunpack.c.l.b16 %v1609
      %v1670 = vpack.c.b16 %v1655, %v1654
      %v1671 = vpack.c.b16 %v1657, %v1656
      %v1672 = vpack.c.b16 %v1659, %v1658
      %v1673 = vpack.c.b16 %v1661, %v1660
      %v1674 = vpack.c.b16 %v1663, %v1662
      %v1675 = vpack.c.b16 %v1665, %v1664
      %v1676 = vpack.c.b16 %v1667, %v1666
      %v1677 = vpack.c.b16 %v1669, %v1668
      %1686 = vmatpush.bf16.msra.mxu0 %v1677
      %1687 = vmatpush.bf16.msra.mxu0 %v1676
      %1688 = vmatpush.bf16.msra.mxu0 %v1675
      %1689 = vmatpush.bf16.msra.mxu0 %v1674
      %1690 = vmatpush.bf16.msra.mxu0 %v1673
      %1691 = vmatpush.bf16.msra.mxu0 %v1672
      %1692 = vmatpush.bf16.msra.mxu0 %v1671
      %1693 = vmatpush.bf16.msra.mxu0 %v1670
      %1694 = vmatmul.bf16.gmra.mxu0 %v1628
      %v1695 = vpop.f32.mrf.mxu0
      %v1696 = vadd.f32 0.0, %v1695
      %v1697 = vpop.f32.mrf.mxu0
      %v1698 = vadd.f32 0.0, %v1697
      %1699 = vmatmul.bf16.gmra.mxu0 %v1629
      %v1700 = vpop.f32.mrf.mxu0
      %v1701 = vadd.f32 0.0, %v1700
      %v1702 = vpop.f32.mrf.mxu0
      %v1703 = vadd.f32 0.0, %v1702
      %1704 = vmatmul.bf16.gmra.mxu0 %v1630
      %v1705 = vpop.f32.mrf.mxu0
      %v1706 = vadd.f32 0.0, %v1705
      %v1707 = vpop.f32.mrf.mxu0
      %v1708 = vadd.f32 0.0, %v1707
      %1709 = vmatmul.bf16.gmra.mxu0 %v1631
      %v1710 = vpop.f32.mrf.mxu0
      %v1711 = vadd.f32 0.0, %v1710
      %v1712 = vpop.f32.mrf.mxu0
      %v1713 = vadd.f32 0.0, %v1712
      %1714 = vmatmul.bf16.gmra.mxu0 %v1632
      %v1715 = vpop.f32.mrf.mxu0
      %v1716 = vadd.f32 0.0, %v1715
      %v1717 = vpop.f32.mrf.mxu0
      %1718 = vdwg.mxu0
      %v1719 = vld [vmem:[#allocation2] sm:$0xff]
      %v1720 = vld [vmem:[#allocation2 + $0x8] sm:$0xff]
      %v1721 = vld [vmem:[#allocation2 + $0x10] sm:$0xff]
      %v1722 = vld [vmem:[#allocation2 + $0x18] sm:$0xff]
      %v1723 = vld [vmem:[#allocation2 + $0x20] sm:$0xff]
      %v1724 = vld [vmem:[#allocation2 + $0x28] sm:$0xff]
      %v1725 = vld [vmem:[#allocation2 + $0x30] sm:$0xff]
      %v1726 = vld [vmem:[#allocation2 + $0x38] sm:$0xff]
      %v1727 = vld [vmem:[#allocation2 + $0x40] sm:$0xff]
      %v1728 = vadd.f32 %v1719, %v1696
      %v1729 = vadd.f32 %v1720, %v1698
      %v1730 = vadd.f32 %v1721, %v1701
      %v1731 = vadd.f32 %v1722, %v1703
      %v1732 = vadd.f32 %v1723, %v1706
      %v1733 = vadd.f32 %v1724, %v1708
      %v1734 = vadd.f32 %v1725, %v1711
      %v1735 = vadd.f32 %v1726, %v1713
      %v1736 = vadd.f32 %v1727, %v1716
      %1737 = vst [vmem:[#allocation2] sm:$0xff] %v1728
      %1738 = vst [vmem:[#allocation2 + $0x8] sm:$0xff] %v1729
      %1739 = vst [vmem:[#allocation2 + $0x10] sm:$0xff] %v1730
      %1740 = vst [vmem:[#allocation2 + $0x18] sm:$0xff] %v1731
      %1741 = vst [vmem:[#allocation2 + $0x20] sm:$0xff] %v1732
      %1742 = vst [vmem:[#allocation2 + $0x28] sm:$0xff] %v1733
      %1743 = vst [vmem:[#allocation2 + $0x30] sm:$0xff] %v1734
      %1744 = vst [vmem:[#allocation2 + $0x38] sm:$0xff] %v1735
      %1745 = vst [vmem:[#allocation2 + $0x40] sm:$0xff] %v1736
      %v1746 = vld [vmem:[#allocation2] sm:$0xff]
      %v1747 = vld [vmem:[#allocation2 + $0x8] sm:$0xff]
      %v1748 = vld [vmem:[#allocation2 + $0x10] sm:$0xff]
      %v1749 = vld [vmem:[#allocation2 + $0x18] sm:$0xff]
      %v1750 = vld [vmem:[#allocation2 + $0x20] sm:$0xff]
      %v1751 = vld [vmem:[#allocation2 + $0x28] sm:$0xff]
      %v1752 = vld [vmem:[#allocation2 + $0x30] sm:$0xff]
      %v1753 = vld [vmem:[#allocation2 + $0x38] sm:$0xff]
      %v1754 = vld [vmem:[#allocation2 + $0x40] sm:$0xff]
      %v1755 = vld [vmem:[%s226] sm:$0x1]
      %v1757 = vperm.slane %v1755, 0
      %v1759 = vadd.f32 %v1746, %v1757
      %v1760 = vadd.f32 %v1747, %v1757
      %v1761 = vadd.f32 %v1748, %v1757
      %v1762 = vadd.f32 %v1749, %v1757
      %v1763 = vadd.f32 %v1750, %v1757
      %v1764 = vadd.f32 %v1751, %v1757
      %v1765 = vadd.f32 %v1752, %v1757
      %v1766 = vadd.f32 %v1753, %v1757
      %v1767 = vadd.f32 %v1754, %v1757
      %v1768 = vmax.f32 %v1759, 0.0
      %v1769 = vmax.f32 %v1760, 0.0
      %v1770 = vmax.f32 %v1761, 0.0
      %v1771 = vmax.f32 %v1762, 0.0
      %v1772 = vmax.f32 %v1763, 0.0
      %v1773 = vmax.f32 %v1764, 0.0
      %v1774 = vmax.f32 %v1765, 0.0
      %v1775 = vmax.f32 %v1766, 0.0
      %v1776 = vmax.f32 %v1767, 0.0
      %v1777 = vpack.c.bf16 %v1768, %v1768
      %v1778 = vpack.c.bf16 %v1769, %v1769
      %v1779 = vpack.c.bf16 %v1770, %v1770
      %v1780 = vpack.c.bf16 %v1771, %v1771
      %v1781 = vpack.c.bf16 %v1772, %v1772
      %v1782 = vpack.c.bf16 %v1773, %v1773
      %v1783 = vpack.c.bf16 %v1774, %v1774
      %v1784 = vpack.c.bf16 %v1775, %v1775
      %v1785 = vpack.c.bf16 %v1776, %v1776
      %1786 = vst [vmem:[%s238] sm:$0xf] %v1777
      %1787 = vst [vmem:[%s238 + $0x4] sm:$0xf] %v1778
      %1788 = vst [vmem:[%s238 + $0x8] sm:$0xf] %v1779
      %1789 = vst [vmem:[%s238 + $0xc] sm:$0xf] %v1780
      %1790 = vst [vmem:[%s238 + $0x10] sm:$0xf] %v1781
      %1791 = vst [vmem:[%s238 + $0x14] sm:$0xf] %v1782
      %1792 = vst [vmem:[%s238 + $0x18] sm:$0xf] %v1783
      %1793 = vst [vmem:[%s238 + $0x1c] sm:$0xf] %v1784
      %1794 = vst [vmem:[%s238 + $0x20] sm:$0xf] %v1785
      %s1795 = smul.u32 9, %s21
      %p1796 = scmp.lt.s32.totalorder %s19, 1
      %s1797 = scalar_select %p1796, %s19, 1
      %p1798 = scmp.lt.s32.totalorder %s1795, 8
      %s1799 = scalar_select %p1798, %s1795, 8
      %p1800 = scmp.lt.s32.totalorder %s20, 0
      %s1801 = scalar_select %p1800, %s20, 0
      %s1802 = sadd.s32 %s1801, %s1799
      %s1803 = smul.addr %s1797, 9
      %s1804 = sadd.s32 %s1802, %s1803
      %s1805 = smul.addr %s1804, 4
      %s1806 = scalar_lea.vmem %s3, %s1805
      // Predicated region
      $region33: #{resblock_forward.2} parent=31 // pred_check
        %p1807 = pneg %p133
      $region34: #{resblock_forward.2} parent=31 // pred_check_branch
        %1809 = sbr.rel (%p1807) target = $region36
      $region35: #{resblock_forward.2} parent=31 // pred_region
        %s1810 = smul.u32 9, %s21
      $region36: #{resblock_forward.2} parent=31 // pred_fallthru
        _
    $region32: #{resblock_forward.2} parent=5 // pred_fallthru
      _
    %p1811 = scmp.le.s32.totalorder 2, %s9
    // Predicated region
    $region37: #{resblock_forward.2} parent=5 // pred_check
      %p1812 = pneg %p1811
    $region38: #{resblock_forward.2} parent=5 // pred_check_branch
      %1814 = sbr.rel (%p1812) target = $region40
    $region39: #{resblock_forward.2} parent=5 // pred_region
      %s1815 = ssub.s32 %s9, 2
      // Predicated region
      $region41: #{resblock_forward.2} parent=39 // pred_check
        %p1816 = pneg %p139
      $region42: #{resblock_forward.2} parent=39 // pred_check_branch
        %1818 = sbr.rel (%p1816) target = $region44
      $region43: #{resblock_forward.2} parent=39 // pred_region
        %s1819 = smul.u32 9, %s24
        %p1820 = scmp.lt.s32.totalorder %s22, 1
        %s1821 = scalar_select %p1820, %s22, 1
        %p1822 = scmp.lt.s32.totalorder %s1819, 8
        %s1823 = scalar_select %p1822, %s1819, 8
        %p1824 = scmp.lt.s32.totalorder %s23, 0
        %s1825 = scalar_select %p1824, %s23, 0
        %s1826 = sadd.s32 %s1825, %s1823
        %s1827 = smul.addr %s1821, 9
        %s1828 = sadd.s32 %s1826, %s1827
        %s1829 = smul.addr %s1828, 4
        %s1830 = scalar_lea.vmem %s3, %s1829
      $region44: #{resblock_forward.2} parent=39 // pred_fallthru
        _
    $region40: #{resblock_forward.2} parent=5 // pred_fallthru
      _
  $region6: #{resblock_forward.2} parent=0 // loop_footer
    %s13 = sadd.s32 1, %s9
  $region7: #{resblock_forward.2} parent=0 // loop_footer_branch
    %8 = sbr.rel target = $region3
  $region8: #{resblock_forward.2} parent=0 // loop_exit
    _

// kernel: resblock_forward.3
$region0: #{resblock_forward.3}
  #allocation0 [shape = 'u32[]', space=smem, size = 0x4, offset = 0x4, fixed_abs, tag = 'smem constant byte address 0x4 - core index']
  #allocation1 [shape = 'u32[72,128]{1,0:T(1,128)}', space=vmem, size = 0x9000, scoped, tag = 'internal scratch']
  #allocation2 [shape = 'f32[80,128]{1,0:T(8,128)}', space=vmem, size = 0xa000, scoped, tag = 'scratch operand']
  %s0 = inlined_call_operand.vmem [shape: bf16[2,1,104,128], index: 0, kind: input, shape index: {}]
  %s1 = inlined_call_operand.vmem [shape: bf16[9,128,128], index: 1, kind: input, shape index: {}]
  %s2 = inlined_call_operand.vmem [shape: f32[1,128], index: 2, kind: input, shape index: {}]
  %s3 = inlined_call_operand.vmem [shape: bf16[2,1,80,128], index: 3, kind: input, shape index: {}]
  %s4 = inlined_call_operand.vmem [shape: bf16[1,128,128], index: 4, kind: input, shape index: {}]
  %s5 = inlined_call_operand.vmem [shape: f32[2,80,128], index: 5, kind: output, shape index: {}]
  %s6 = sld [smem:[#allocation0]]
  $region53: #{resblock_forward.3} parent=0
    _
  %s8 = ssub.s32 1, %s6
  %s9 = scalar_select 0, %s8, %s6
  loop: start=0, step=1, limit=4
  $region2: #{resblock_forward.3} parent=0 // loop_pre_header
    _
  $region3: #{resblock_forward.3} parent=0 // loop_header
    %s11 = sphi 0, %s15
    %p12 = scmp.ge.s32.totalorder %s11, 4
    %s18 = sphi 0, %s37
    %s19 = sphi 0, %s33
    %s20 = sphi 0, %s29
    %s21 = sphi 0, %s18
    %s22 = sphi 0, %s19
    %s23 = sphi 0, %s20
    %s24 = sphi 0, %s21
    %s25 = sphi 0, %s22
    %s26 = sphi 0, %s23
    %s40 = sphi 0, %s42
    %s43 = sphi 0, %s40
    %s44 = sphi 0, %s43
    %s60 = sphi 0, %s44
    %s66 = sphi 0, %s68
    %s69 = sphi 0, %s66
    %s70 = sphi 0, %s69
    %s86 = sphi 0, %s70
    %s92 = sphi 0, %s94
    %s95 = sphi 0, %s92
    %s96 = sphi 0, %s95
    %s112 = sphi 0, %s96
    %s118 = sphi 0, %s120
    %s121 = sphi 0, %s118
    %s122 = sphi 0, %s121
    %s138 = sphi 0, %s122
    %s144 = sphi 0, %s146
    %s147 = sphi 0, %s144
    %s148 = sphi 0, %s147
    %s164 = sphi 0, %s148
    %s174 = sphi 0, %s176
    %s177 = sphi 0, %s174
    %s178 = sphi 0, %s177
    %s194 = sphi 0, %s178
  $region4: #{resblock_forward.3} parent=0 // loop_header_branch
    %14 = sbr.rel (%p12) target = $region8
  $region5: #{resblock_forward.3} parent=0 // loop_body
    %s16 = ssub.s32 %s11, 1
    %s17 = ssub.s32 %s11, 2
    %s27 = sadd.s32 1, %s20
    %p28 = scmp.ge.s32.totalorder %s27, 1
    %s29 = scalar_select %p28, 0, %s27
    %s30 = sadd.s32 1, %s19
    %s31 = scalar_select %p28, %s30, %s19
    %p32 = scmp.ge.s32.totalorder %s31, 1
    %s33 = scalar_select %p32, 0, %s31
    %s34 = sadd.s32 1, %s18
    %s35 = scalar_select %p32, %s34, %s18
    %p36 = scmp.ge.s32.totalorder %s35, 2
    %s37 = scalar_select %p36, 0, %s35
    %s38 = ssub.s32 %s18, %s37
    %p39 = scmp.eq.s32.totalorder %s38, 0
    %s41 = sadd.s32 %s40, 1
    %s42 = scalar_select %p39, %s40, %s41
    %p45 = pneg %p39
    %p46 = scmp.eq.s32.totalorder %s11, 1
    %p47 = por %p45, %p46
    %p48 = scmp.ne.s32.totalorder %s40, %s43
    %p49 = scmp.eq.s32.totalorder %s11, 0
    %p50 = por %p48, %p49
    %p51 = scmp.ne.s32.totalorder %s40, %s43
    %p52 = scmp.eq.s32.totalorder %s16, 1
    %p53 = por %p51, %p52
    %p54 = scmp.ne.s32.totalorder %s43, %s44
    %p55 = scmp.eq.s32.totalorder %s16, 0
    %p56 = por %p54, %p55
    %p57 = scmp.ne.s32.totalorder %s43, %s44
    %p58 = scmp.eq.s32.totalorder %s17, 1
    %p59 = por %p57, %p58
    %p61 = scmp.ne.s32.totalorder %s44, %s60
    %p62 = scmp.eq.s32.totalorder %s17, 0
    %p63 = por %p61, %p62
    %s64 = ssub.s32 %s19, %s33
    %p65 = scmp.eq.s32.totalorder %s64, 0
    %s67 = sadd.s32 %s66, 1
    %s68 = scalar_select %p65, %s66, %s67
    %p71 = pneg %p65
    %p72 = scmp.eq.s32.totalorder %s11, 1
    %p73 = por %p71, %p72
    %p74 = scmp.ne.s32.totalorder %s66, %s69
    %p75 = scmp.eq.s32.totalorder %s11, 0
    %p76 = por %p74, %p75
    %p77 = scmp.ne.s32.totalorder %s66, %s69
    %p78 = scmp.eq.s32.totalorder %s16, 1
    %p79 = por %p77, %p78
    %p80 = scmp.ne.s32.totalorder %s69, %s70
    %p81 = scmp.eq.s32.totalorder %s16, 0
    %p82 = por %p80, %p81
    %p83 = scmp.ne.s32.totalorder %s69, %s70
    %p84 = scmp.eq.s32.totalorder %s17, 1
    %p85 = por %p83, %p84
    %p87 = scmp.ne.s32.totalorder %s70, %s86
    %p88 = scmp.eq.s32.totalorder %s17, 0
    %p89 = por %p87, %p88
    %s90 = ssub.s32 %s19, %s33
    %p91 = scmp.eq.s32.totalorder %s90, 0
    %s93 = sadd.s32 %s92, 1
    %s94 = scalar_select %p91, %s92, %s93
    %p97 = pneg %p91
    %p98 = scmp.eq.s32.totalorder %s11, 1
    %p99 = por %p97, %p98
    %p100 = scmp.ne.s32.totalorder %s92, %s95
    %p101 = scmp.eq.s32.totalorder %s11, 0
    %p102 = por %p100, %p101
    %p103 = scmp.ne.s32.totalorder %s92, %s95
    %p104 = scmp.eq.s32.totalorder %s16, 1
    %p105 = por %p103, %p104
    %p106 = scmp.ne.s32.totalorder %s95, %s96
    %p107 = scmp.eq.s32.totalorder %s16, 0
    %p108 = por %p106, %p107
    %p109 = scmp.ne.s32.totalorder %s95, %s96
    %p110 = scmp.eq.s32.totalorder %s17, 1
    %p111 = por %p109, %p110
    %p113 = scmp.ne.s32.totalorder %s96, %s112
    %p114 = scmp.eq.s32.totalorder %s17, 0
    %p115 = por %p113, %p114
    %s116 = ssub.s32 %s18, %s37
    %p117 = scmp.eq.s32.totalorder %s116, 0
    %s119 = sadd.s32 %s118, 1
    %s120 = scalar_select %p117, %s118, %s119
    %p123 = pneg %p117
    %p124 = scmp.eq.s32.totalorder %s11, 1
    %p125 = por %p123, %p124
    %p126 = scmp.ne.s32.totalorder %s118, %s121
    %p127 = scmp.eq.s32.totalorder %s11, 0
    %p128 = por %p126, %p127
    %p129 = scmp.ne.s32.totalorder %s118, %s121
    %p130 = scmp.eq.s32.totalorder %s16, 1
    %p131 = por %p129, %p130
    %p132 = scmp.ne.s32.totalorder %s121, %s122
    %p133 = scmp.eq.s32.totalorder %s16, 0
    %p134 = por %p132, %p133
    %p135 = scmp.ne.s32.totalorder %s121, %s122
    %p136 = scmp.eq.s32.totalorder %s17, 1
    %p137 = por %p135, %p136
    %p139 = scmp.ne.s32.totalorder %s122, %s138
    %p140 = scmp.eq.s32.totalorder %s17, 0
    %p141 = por %p139, %p140
    %s142 = ssub.s32 %s19, %s33
    %p143 = scmp.eq.s32.totalorder %s142, 0
    %s145 = sadd.s32 %s144, 1
    %s146 = scalar_select %p143, %s144, %s145
    %p149 = pneg %p143
    %p150 = scmp.eq.s32.totalorder %s11, 1
    %p151 = por %p149, %p150
    %p152 = scmp.ne.s32.totalorder %s144, %s147
    %p153 = scmp.eq.s32.totalorder %s11, 0
    %p154 = por %p152, %p153
    %p155 = scmp.ne.s32.totalorder %s144, %s147
    %p156 = scmp.eq.s32.totalorder %s16, 1
    %p157 = por %p155, %p156
    %p158 = scmp.ne.s32.totalorder %s147, %s148
    %p159 = scmp.eq.s32.totalorder %s16, 0
    %p160 = por %p158, %p159
    %p161 = scmp.ne.s32.totalorder %s147, %s148
    %p162 = scmp.eq.s32.totalorder %s17, 1
    %p163 = por %p161, %p162
    %p165 = scmp.ne.s32.totalorder %s148, %s164
    %p166 = scmp.eq.s32.totalorder %s17, 0
    %p167 = por %p165, %p166
    %s168 = ssub.s32 %s18, %s37
    %s169 = ssub.s32 %s20, %s29
    %s170 = sor.u32 %s168, %s169
    %s171 = ssub.s32 %s19, %s33
    %s172 = sor.u32 %s170, %s171
    %p173 = scmp.eq.s32.totalorder %s172, 0
    %s175 = sadd.s32 %s174, 1
    %s176 = scalar_select %p173, %s174, %s175
    %p179 = pneg %p173
    %p180 = scmp.eq.s32.totalorder %s11, 1
    %p181 = por %p179, %p180
    %p182 = scmp.ne.s32.totalorder %s174, %s177
    %p183 = scmp.eq.s32.totalorder %s11, 0
    %p184 = por %p182, %p183
    %p185 = scmp.ne.s32.totalorder %s174, %s177
    %p186 = scmp.eq.s32.totalorder %s16, 1
    %p187 = por %p185, %p186
    %p188 = scmp.ne.s32.totalorder %s177, %s178
    %p189 = scmp.eq.s32.totalorder %s16, 0
    %p190 = por %p188, %p189
    %p191 = scmp.ne.s32.totalorder %s177, %s178
    %p192 = scmp.eq.s32.totalorder %s17, 1
    %p193 = por %p191, %p192
    %p195 = scmp.ne.s32.totalorder %s178, %s194
    %p196 = scmp.eq.s32.totalorder %s17, 0
    %p197 = por %p195, %p196
    %p198 = scmp.le.s32.totalorder 1, %s11
    %p199 = scmp.lt.s32.totalorder %s11, 3
    %p200 = pnand %p198, %p199
    %p201 = pneg %p200
    // Predicated region
    $region9: #{resblock_forward.3} parent=5 // pred_check
      _
    $region10: #{resblock_forward.3} parent=5 // pred_check_branch
      %203 = sbr.rel (%p200) target = $region12
    $region11: #{resblock_forward.3} parent=5 // pred_region
      %s204 = ssub.s32 %s11, 1
      // Predicated region
      $region13: #{resblock_forward.3} parent=11 // pred_check
        %p205 = pneg %p82
      $region14: #{resblock_forward.3} parent=11 // pred_check_branch
        %207 = sbr.rel (%p205) target = $region16
      $region15: #{resblock_forward.3} parent=11 // pred_region
        %p208 = scmp.lt.s32.totalorder %s22, 0
        %s209 = scalar_select %p208, %s22, 0
        %s210 = smul.addr %s209, 4
        %s211 = scalar_lea.vmem %s1, %s210
      $region16: #{resblock_forward.3} parent=11 // pred_fallthru
        _
      // Predicated region
      $region17: #{resblock_forward.3} parent=11 // pred_check
        %p212 = pneg %p108
      $region18: #{resblock_forward.3} parent=11 // pred_check_branch
        %214 = sbr.rel (%p212) target = $region20
      $region19: #{resblock_forward.3} parent=11 // pred_region
        %p215 = scmp.lt.s32.totalorder %s22, 0
        %s216 = scalar_select %p215, %s22, 0
        %s217 = scalar_lea.vmem %s2, %s216
      $region20: #{resblock_forward.3} parent=11 // pred_fallthru
        _
      // Predicated region
      $region21: #{resblock_forward.3} parent=11 // pred_check
        %p218 = pneg %p160
      $region22: #{resblock_forward.3} parent=11 // pred_check_branch
        %220 = sbr.rel (%p218) target = $region24
      $region23: #{resblock_forward.3} parent=11 // pred_region
        %p221 = scmp.lt.s32.totalorder %s22, 0
        %s222 = scalar_select %p221, %s22, 0
        %s223 = smul.addr %s222, 4
        %s224 = scalar_lea.vmem %s4, %s223
      $region24: #{resblock_forward.3} parent=11 // pred_fallthru
        _
    $region12: #{resblock_forward.3} parent=5 // pred_fallthru
      _
    %p225 = scmp.lt.s32.totalorder %s11, 2
    // Predicated region
    $region25: #{resblock_forward.3} parent=5 // pred_check
      %p226 = pneg %p225
    $region26: #{resblock_forward.3} parent=5 // pred_check_branch
      %228 = sbr.rel (%p226) target = $region28
    $region27: #{resblock_forward.3} parent=5 // pred_region
      // Predicated region
      $region29: #{resblock_forward.3} parent=27 // pred_check
        %p229 = pneg %p50
      $region30: #{resblock_forward.3} parent=27 // pred_check_branch
        %231 = sbr.rel (%p229) target = $region32
      $region31: #{resblock_forward.3} parent=27 // pred_region
        %p232 = scmp.lt.s32.totalorder %s18, 1
        %s233 = scalar_select %p232, %s18, 1
        %s234 = smul.addr %s233, 13
        %s235 = smul.addr %s234, 4
        %s236 = scalar_lea.vmem %s0, %s235
      $region32: #{resblock_forward.3} parent=27 // pred_fallthru
        _
      // Predicated region
      $region33: #{resblock_forward.3} parent=27 // pred_check
        %p237 = pneg %p128
      $region34: #{resblock_forward.3} parent=27 // pred_check_branch
        %239 = sbr.rel (%p237) target = $region36
      $region35: #{resblock_forward.3} parent=27 // pred_region
        %p240 = scmp.lt.s32.totalorder %s18, 1
        %s241 = scalar_select %p240, %s18, 1
        %s242 = smul.addr %s241, 10
        %s243 = smul.addr %s242, 4
        %s244 = scalar_lea.vmem %s3, %s243
      $region36: #{resblock_forward.3} parent=27 // pred_fallthru
        _
    $region28: #{resblock_forward.3} parent=5 // pred_fallthru
      _
    %p245 = scmp.le.s32.totalorder 1, %s11
    %p246 = scmp.lt.s32.totalorder %s11, 3
    %p247 = pnand %p245, %p246
    %p248 = pneg %p247
    // Predicated region
    $region37: #{resblock_forward.3} parent=5 // pred_check
      _
    $region38: #{resblock_forward.3} parent=5 // pred_check_branch
      %250 = sbr.rel (%p247) target = $region40
    $region39: #{resblock_forward.3} parent=5 // pred_region
      %s251 = ssub.s32 %s11, 1
      %p252 = scmp.lt.s32.totalorder %s21, 1
      %s253 = scalar_select %p252, %s21, 1
      %s254 = smul.addr %s253, 13
      %s255 = smul.addr %s254, 4
      %s256 = scalar_lea.vmem %s0, %s255
      %p257 = pneg %p56
      %p258 = pneg %p53
      %p259 = scmp.lt.s32.totalorder %s22, 0
      %s260 = scalar_select %p259, %s22, 0
      %s261 = smul.addr %s260, 4
      %s262 = scalar_lea.vmem %s1, %s261
      %p263 = pneg %p82
      %p264 = pneg %p79
      %p265 = scmp.lt.s32.totalorder %s22, 0
      %s266 = scalar_select %p265, %s22, 0
      %s267 = scalar_lea.vmem %s2, %s266
      %p268 = pneg %p108
      %p269 = pneg %p105
      %p270 = scmp.lt.s32.totalorder %s21, 1
      %s271 = scalar_select %p270, %s21, 1
      %s272 = smul.addr %s271, 10
      %s273 = smul.addr %s272, 4
      %s274 = scalar_lea.vmem %s3, %s273
      %p275 = pneg %p134
      %p276 = pneg %p131
      %p277 = scmp.lt.s32.totalorder %s22, 0
      %s278 = scalar_select %p277, %s22, 0
      %s279 = smul.addr %s278, 4
      %s280 = scalar_lea.vmem %s4, %s279
      %p281 = pneg %p160
      %p282 = pneg %p157
      %p283 = pneg %p190
      %p284 = pneg %p187
      %s285 = smul.u32 10, %s23
      %p286 = scmp.lt.s32.totalorder %s21, 1
      %s287 = scalar_select %p286, %s21, 1
      %p288 = scmp.lt.s32.totalorder %s285, 9
      %s289 = scalar_select %p288, %s285, 9
      %p290 = scmp.lt.s32.totalorder %s22, 0
      %s291 = scalar_select %p290, %s22, 0
      %s292 = sadd.s32 %s291, %s289
      %s293 = smul.addr %s287, 10
      %s294 = sadd.s32 %s292, %s293
      %s295 = smul.addr %s294, 8
      %s296 = scalar_lea.vmem %s5, %s295
      %p297 = scmp.lt.s32.totalorder %s21, 1
      %s298 = scalar_select %p297, %s21, 1
      %s299 = smul.addr %s298, 13
      %s300 = smul.addr %s299, 4
      %s301 = scalar_lea.vmem %s0, %s300
      %p302 = scmp.lt.s32.totalorder %s22, 0
      %s303 = scalar_select %p302, %s22, 0
      %s304 = smul.addr %s303, 4
      %s305 = scalar_lea.vmem %s1, %s304
      %p306 = scmp.lt.s32.totalorder %s22, 0
      %s307 = scalar_select %p306, %s22, 0
      %s308 = scalar_lea.vmem %s2, %s307
      %p309 = scmp.lt.s32.totalorder %s21, 1
      %s310 = scalar_select %p309, %s21, 1
      %s311 = smul.addr %s310, 10
      %s312 = smul.addr %s311, 4
      %s313 = scalar_lea.vmem %s3, %s312
      %p314 = scmp.lt.s32.totalorder %s22, 0
      %s315 = scalar_select %p314, %s22, 0
      %s316 = smul.addr %s315, 4
      %s317 = scalar_lea.vmem %s4, %s316
      %s318 = smul.u32 10, %s23
      %p319 = scmp.lt.s32.totalorder %s21, 1
      %s320 = scalar_select %p319, %s21, 1
      %p321 = scmp.lt.s32.totalorder %s318, 9
      %s322 = scalar_select %p321, %s318, 9
      %p323 = scmp.lt.s32.totalorder %s22, 0
      %s324 = scalar_select %p323, %s22, 0
      %s325 = sadd.s32 %s324, %s322
      %s326 = smul.addr %s320, 10
      %s327 = sadd.s32 %s325, %s326
      %s328 = smul.addr %s327, 8
      %s329 = scalar_lea.vmem %s5, %s328
      %s330 = smul.u32 10, %s23
      %s331 = smul.u32 %s23, 80
      %s332 = sshra.s32 %s331, 3
      %s333 = sand.u32 %s331, 7
      %s334 = smul.addr %s332, 4
      %s335 = scalar_lea.vmem %s301, %s334
      %v336 = vld [vmem:[%s335] sm:$0xf]
      %v337 = vld [vmem:[%s335 + $0x4] sm:$0xf]
      %v338 = vld [vmem:[%s335 + $0x8] sm:$0xf]
      %v339 = vld [vmem:[%s335 + $0xc] sm:$0xf]
      %v340 = vld [vmem:[%s335 + $0x10] sm:$0xf]
      %v341 = vld [vmem:[%s335 + $0x14] sm:$0xf]
      %v342 = vld [vmem:[%s335 + $0x18] sm:$0xf]
      %v343 = vld [vmem:[%s335 + $0x1c] sm:$0xf]
      %v344 = vld [vmem:[%s335 + $0x20] sm:$0xf]
      %v345 = vld [vmem:[%s335 + $0x24] sm:$0xf]
      %v346 = vld [vmem:[%s335 + $0x28] sm:$0xf]
      %v347 = vld [vmem:[%s305] sm:$0xf]
      %v348 = vld [vmem:[%s305 + $0x4] sm:$0xf]
      %v349 = vld [vmem:[%s305 + $0x8] sm:$0xf]
      %v350 = vld [vmem:[%s305 + $0xc] sm:$0xf]
      %v351 = vld [vmem:[%s305 + $0x10] sm:$0xf]
      %v352 = vld [vmem:[%s305 + $0x14] sm:$0xf]
      %v353 = vld [vmem:[%s305 + $0x18] sm:$0xf]
      %v354 = vld [vmem:[%s305 + $0x1c] sm:$0xf]
      %v355 = vld [vmem:[%s305 + $0x20] sm:$0xf]
      %v356 = vld [vmem:[%s305 + $0x24] sm:$0xf]
      %v357 = vld [vmem:[%s305 + $0x28] sm:$0xf]
      %v358 = vld [vmem:[%s305 + $0x2c] sm:$0xf]
      %v359 = vld [vmem:[%s305 + $0x30] sm:$0xf]
      %v360 = vld [vmem:[%s305 + $0x34] sm:$0xf]
      %v361 = vld [vmem:[%s305 + $0x38] sm:$0xf]
      %v362 = vld [vmem:[%s305 + $0x3c] sm:$0xf]
      %v374 = vunpack.c.l.b16 %v336
      %v375 = vunpack.c.l.b16 %v337
      %v376 = vunpack.c.l.b16 %v338
      %v377 = vunpack.c.l.b16 %v339
      %v378 = vunpack.c.l.b16 %v340
      %v379 = vunpack.c.l.b16 %v341
      %v380 = vunpack.c.l.b16 %v342
      %v381 = vunpack.c.l.b16 %v343
      %v382 = vunpack.c.l.b16 %v344
      %v383 = vunpack.c.l.b16 %v345
      %v384 = vunpack.c.l.b16 %v346
      %v385 = vpack.c.b16 %v375, %v374
      %v386 = vpack.c.b16 %v377, %v376
      %v387 = vpack.c.b16 %v379, %v378
      %v388 = vpack.c.b16 %v381, %v380
      %v389 = vpack.c.b16 %v383, %v382
      %v390 = vpack.c.b16 %v384, %v384
      %v413 = vunpack.c.l.b16 %v347
      %v414 = vunpack.c.l.b16 %v348
      %v415 = vunpack.c.l.b16 %v349
      %v416 = vunpack.c.l.b16 %v350
      %v417 = vunpack.c.l.b16 %v351
      %v418 = vunpack.c.l.b16 %v352
      %v419 = vunpack.c.l.b16 %v353
      %v420 = vunpack.c.l.b16 %v354
      %v421 = vunpack.c.l.b16 %v355
      %v422 = vunpack.c.l.b16 %v356
      %v423 = vunpack.c.l.b16 %v357
      %v424 = vunpack.c.l.b16 %v358
      %v425 = vunpack.c.l.b16 %v359
      %v426 = vunpack.c.l.b16 %v360
      %v427 = vunpack.c.l.b16 %v361
      %v428 = vunpack.c.l.b16 %v362
      %v429 = vpack.c.b16 %v414, %v413
      %v430 = vpack.c.b16 %v416, %v415
      %v431 = vpack.c.b16 %v418, %v417
      %v432 = vpack.c.b16 %v420, %v419
      %v433 = vpack.c.b16 %v422, %v421
      %v434 = vpack.c.b16 %v424, %v423
      %v435 = vpack.c.b16 %v426, %v425
      %v436 = vpack.c.b16 %v428, %v427
      %445 = vmatpush.bf16.msra.mxu0 %v436
      %446 = vmatpush.bf16.msra.mxu0 %v435
      %447 = vmatpush.bf16.msra.mxu0 %v434
      %448 = vmatpush.bf16.msra.mxu0 %v433
      %449 = vmatpush.bf16.msra.mxu0 %v432
      %450 = vmatpush.bf16.msra.mxu0 %v431
      %451 = vmatpush.bf16.msra.mxu0 %v430
      %452 = vmatpush.bf16.msra.mxu0 %v429
      %453 = vmatmul.bf16.gmra.mxu0 %v385
      %v454 = vpop.f32.mrf.mxu0
      %v455 = vadd.f32 0.0, %v454
      %v456 = vpop.f32.mrf.mxu0
      %v457 = vadd.f32 0.0, %v456
      %458 = vmatmul.bf16.gmra.mxu0 %v386
      %v459 = vpop.f32.mrf.mxu0
      %v460 = vadd.f32 0.0, %v459
      %v461 = vpop.f32.mrf.mxu0
      %v462 = vadd.f32 0.0, %v461
      %463 = vmatmul.bf16.gmra.mxu0 %v387
      %v464 = vpop.f32.mrf.mxu0
      %v465 = vadd.f32 0.0, %v464
      %v466 = vpop.f32.mrf.mxu0
      %v467 = vadd.f32 0.0, %v466
      %468 = vmatmul.bf16.gmra.mxu0 %v388
      %v469 = vpop.f32.mrf.mxu0
      %v470 = vadd.f32 0.0, %v469
      %v471 = vpop.f32.mrf.mxu0
      %v472 = vadd.f32 0.0, %v471
      %473 = vmatmul.bf16.gmra.mxu0 %v389
      %v474 = vpop.f32.mrf.mxu0
      %v475 = vadd.f32 0.0, %v474
      %v476 = vpop.f32.mrf.mxu0
      %v477 = vadd.f32 0.0, %v476
      %478 = vmatmul.bf16.gmra.mxu0 %v390
      %v479 = vpop.f32.mrf.mxu0
      %v480 = vpop.f32.mrf.mxu0
      %481 = vdwg.mxu0
      %s482 = scalar_lea.vmem %s305, 64
      %v483 = vld [vmem:[%s482] sm:$0xf]
      %v484 = vld [vmem:[%s482 + $0x4] sm:$0xf]
      %v485 = vld [vmem:[%s482 + $0x8] sm:$0xf]
      %v486 = vld [vmem:[%s482 + $0xc] sm:$0xf]
      %v487 = vld [vmem:[%s482 + $0x10] sm:$0xf]
      %v488 = vld [vmem:[%s482 + $0x14] sm:$0xf]
      %v489 = vld [vmem:[%s482 + $0x18] sm:$0xf]
      %v490 = vld [vmem:[%s482 + $0x1c] sm:$0xf]
      %v491 = vld [vmem:[%s482 + $0x20] sm:$0xf]
      %v492 = vld [vmem:[%s482 + $0x24] sm:$0xf]
      %v493 = vld [vmem:[%s482 + $0x28] sm:$0xf]
      %v494 = vld [vmem:[%s482 + $0x2c] sm:$0xf]
      %v495 = vld [vmem:[%s482 + $0x30] sm:$0xf]
      %v496 = vld [vmem:[%s482 + $0x34] sm:$0xf]
      %v497 = vld [vmem:[%s482 + $0x38] sm:$0xf]
      %v498 = vld [vmem:[%s482 + $0x3c] sm:$0xf]
      %v515 = vunpack.c.l.b16 %v483
      %v516 = vunpack.c.l.b16 %v484
      %v517 = vunpack.c.l.b16 %v485
      %v518 = vunpack.c.l.b16 %v486
      %v519 = vunpack.c.l.b16 %v487
      %v520 = vunpack.c.l.b16 %v488
      %v521 = vunpack.c.l.b16 %v489
      %v522 = vunpack.c.l.b16 %v490
      %v523 = vunpack.c.l.b16 %v491
      %v524 = vunpack.c.l.b16 %v492
      %v525 = vunpack.c.l.b16 %v493
      %v526 = vunpack.c.l.b16 %v494
      %v527 = vunpack.c.l.b16 %v495
      %v528 = vunpack.c.l.b16 %v496
      %v529 = vunpack.c.l.b16 %v497
      %v530 = vunpack.c.l.b16 %v498
      %v531 = vpack.c.b16 %v516, %v515
      %v532 = vpack.c.b16 %v518, %v517
      %v533 = vpack.c.b16 %v520, %v519
      %v534 = vpack.c.b16 %v522, %v521
      %v535 = vpack.c.b16 %v524, %v523
      %v536 = vpack.c.b16 %v526, %v525
      %v537 = vpack.c.b16 %v528, %v527
      %v538 = vpack.c.b16 %v530, %v529
      %547 = vmatpush.bf16.msra.mxu0 %v538
      %548 = vmatpush.bf16.msra.mxu0 %v537
      %549 = vmatpush.bf16.msra.mxu0 %v536
      %550 = vmatpush.bf16.msra.mxu0 %v535
      %551 = vmatpush.bf16.msra.mxu0 %v534
      %552 = vmatpush.bf16.msra.mxu0 %v533
      %553 = vmatpush.bf16.msra.mxu0 %v532
      %554 = vmatpush.bf16.msra.mxu0 %v531
      %555 = vmatmul.bf16.gmra.mxu0 %v385
      %v556 = vpop.f32.mrf.mxu0
      %v557 = vadd.f32 0.0, %v556
      %v558 = vpop.f32.mrf.mxu0
      %v559 = vadd.f32 0.0, %v558
      %560 = vmatmul.bf16.gmra.mxu0 %v386
      %v561 = vpop.f32.mrf.mxu0
      %v562 = vadd.f32 0.0, %v561
      %v563 = vpop.f32.mrf.mxu0
      %v564 = vadd.f32 0.0, %v563
      %565 = vmatmul.bf16.gmra.mxu0 %v387
      %v566 = vpop.f32.mrf.mxu0
      %v567 = vadd.f32 0.0, %v566
      %v568 = vpop.f32.mrf.mxu0
      %v569 = vadd.f32 0.0, %v568
      %570 = vmatmul.bf16.gmra.mxu0 %v388
      %v571 = vpop.f32.mrf.mxu0
      %v572 = vadd.f32 0.0, %v571
      %v573 = vpop.f32.mrf.mxu0
      %v574 = vadd.f32 0.0, %v573
      %575 = vmatmul.bf16.gmra.mxu0 %v389
      %v576 = vpop.f32.mrf.mxu0
      %v577 = vadd.f32 0.0, %v576
      %v578 = vpop.f32.mrf.mxu0
      %v579 = vadd.f32 0.0, %v578
      %580 = vmatmul.bf16.gmra.mxu0 %v390
      %v581 = vpop.f32.mrf.mxu0
      %v582 = vadd.f32 0.0, %v581
      %v583 = vpop.f32.mrf.mxu0
      %584 = vdwg.mxu0
      %vm596 = vcmask 1046528
      %v597 = vrot.slane %v557, 1
      %v598 = vrot.slane %v559, 1
      %v599 = vsel %vm596, %v597, %v598
      %v600 = vrot.slane %v562, 1
      %v601 = vsel %vm596, %v598, %v600
      %v602 = vrot.slane %v564, 1
      %v603 = vsel %vm596, %v600, %v602
      %v604 = vrot.slane %v567, 1
      %v605 = vsel %vm596, %v602, %v604
      %v606 = vrot.slane %v569, 1
      %v607 = vsel %vm596, %v604, %v606
      %v608 = vrot.slane %v572, 1
      %v609 = vsel %vm596, %v606, %v608
      %v610 = vrot.slane %v574, 1
      %v611 = vsel %vm596, %v608, %v610
      %v612 = vrot.slane %v577, 1
      %v613 = vsel %vm596, %v610, %v612
      %v614 = vrot.slane %v579, 1
      %v615 = vsel %vm596, %v612, %v614
      %v616 = vrot.slane %v582, 1
      %v617 = vsel %vm596, %v614, %v616
      %v628 = vadd.f32 %v455, %v599
      %v629 = vadd.f32 %v457, %v601
      %v630 = vadd.f32 %v460, %v603
      %v631 = vadd.f32 %v462, %v605
      %v632 = vadd.f32 %v465, %v607
      %v633 = vadd.f32 %v467, %v609
      %v634 = vadd.f32 %v470, %v611
      %v635 = vadd.f32 %v472, %v613
      %v636 = vadd.f32 %v475, %v615
      %v637 = vadd.f32 %v477, %v617
      %s638 = scalar_lea.vmem %s305, 128
      %v639 = vld [vmem:[%s638] sm:$0xf]
      %v640 = vld [vmem:[%s638 + $0x4] sm:$0xf]
      %v641 = vld [vmem:[%s638 + $0x8] sm:$0xf]
      %v642 = vld [vmem:[%s638 + $0xc] sm:$0xf]
      %v643 = vld [vmem:[%s638 + $0x10] sm:$0xf]
      %v644 = vld [vmem:[%s638 + $0x14] sm:$0xf]
      %v645 = vld [vmem:[%s638 + $0x18] sm:$0xf]
      %v646 = vld [vmem:[%s638 + $0x1c] sm:$0xf]
      %v647 = vld [vmem:[%s638 + $0x20] sm:$0xf]
      %v648 = vld [vmem:[%s638 + $0x24] sm:$0xf]
      %v649 = vld [vmem:[%s638 + $0x28] sm:$0xf]
      %v650 = vld [vmem:[%s638 + $0x2c] sm:$0xf]
      %v651 = vld [vmem:[%s638 + $0x30] sm:$0xf]
      %v652 = vld [vmem:[%s638 + $0x34] sm:$0xf]
      %v653 = vld [vmem:[%s638 + $0x38] sm:$0xf]
      %v654 = vld [vmem:[%s638 + $0x3c] sm:$0xf]
      %v671 = vunpack.c.l.b16 %v639
      %v672 = vunpack.c.l.b16 %v640
      %v673 = vunpack.c.l.b16 %v641
      %v674 = vunpack.c.l.b16 %v642
      %v675 = vunpack.c.l.b16 %v643
      %v676 = vunpack.c.l.b16 %v644
      %v677 = vunpack.c.l.b16 %v645
      %v678 = vunpack.c.l.b16 %v646
      %v679 = vunpack.c.l.b16 %v647
      %v680 = vunpack.c.l.b16 %v648
      %v681 = vunpack.c.l.b16 %v649
      %v682 = vunpack.c.l.b16 %v650
      %v683 = vunpack.c.l.b16 %v651
      %v684 = vunpack.c.l.b16 %v652
      %v685 = vunpack.c.l.b16 %v653
      %v686 = vunpack.c.l.b16 %v654
      %v687 = vpack.c.b16 %v672, %v671
      %v688 = vpack.c.b16 %v674, %v673
      %v689 = vpack.c.b16 %v676, %v675
      %v690 = vpack.c.b16 %v678, %v677
      %v691 = vpack.c.b16 %v680, %v679
      %v692 = vpack.c.b16 %v682, %v681
      %v693 = vpack.c.b16 %v684, %v683
      %v694 = vpack.c.b16 %v686, %v685
      %703 = vmatpush.bf16.msra.mxu0 %v694
      %704 = vmatpush.bf16.msra.mxu0 %v693
      %705 = vmatpush.bf16.msra.mxu0 %v692
      %706 = vmatpush.bf16.msra.mxu0 %v691
      %707 = vmatpush.bf16.msra.mxu0 %v690
      %708 = vmatpush.bf16.msra.mxu0 %v689
      %709 = vmatpush.bf16.msra.mxu0 %v688
      %710 = vmatpush.bf16.msra.mxu0 %v687
      %711 = vmatmul.bf16.gmra.mxu0 %v385
      %v712 = vpop.f32.mrf.mxu0
      %v713 = vadd.f32 0.0, %v712
      %v714 = vpop.f32.mrf.mxu0
      %v715 = vadd.f32 0.0, %v714
      %716 = vmatmul.bf16.gmra.mxu0 %v386
      %v717 = vpop.f32.mrf.mxu0
      %v718 = vadd.f32 0.0, %v717
      %v719 = vpop.f32.mrf.mxu0
      %v720 = vadd.f32 0.0, %v719
      %721 = vmatmul.bf16.gmra.mxu0 %v387
      %v722 = vpop.f32.mrf.mxu0
      %v723 = vadd.f32 0.0, %v722
      %v724 = vpop.f32.mrf.mxu0
      %v725 = vadd.f32 0.0, %v724
      %726 = vmatmul.bf16.gmra.mxu0 %v388
      %v727 = vpop.f32.mrf.mxu0
      %v728 = vadd.f32 0.0, %v727
      %v729 = vpop.f32.mrf.mxu0
      %v730 = vadd.f32 0.0, %v729
      %731 = vmatmul.bf16.gmra.mxu0 %v389
      %v732 = vpop.f32.mrf.mxu0
      %v733 = vadd.f32 0.0, %v732
      %v734 = vpop.f32.mrf.mxu0
      %v735 = vadd.f32 0.0, %v734
      %736 = vmatmul.bf16.gmra.mxu0 %v390
      %v737 = vpop.f32.mrf.mxu0
      %v738 = vadd.f32 0.0, %v737
      %v739 = vpop.f32.mrf.mxu0
      %740 = vdwg.mxu0
      %vm752 = vcmask 1045504
      %v753 = vrot.slane %v713, 2
      %v754 = vrot.slane %v715, 2
      %v755 = vsel %vm752, %v753, %v754
      %v756 = vrot.slane %v718, 2
      %v757 = vsel %vm752, %v754, %v756
      %v758 = vrot.slane %v720, 2
      %v759 = vsel %vm752, %v756, %v758
      %v760 = vrot.slane %v723, 2
      %v761 = vsel %vm752, %v758, %v760
      %v762 = vrot.slane %v725, 2
      %v763 = vsel %vm752, %v760, %v762
      %v764 = vrot.slane %v728, 2
      %v765 = vsel %vm752, %v762, %v764
      %v766 = vrot.slane %v730, 2
      %v767 = vsel %vm752, %v764, %v766
      %v768 = vrot.slane %v733, 2
      %v769 = vsel %vm752, %v766, %v768
      %v770 = vrot.slane %v735, 2
      %v771 = vsel %vm752, %v768, %v770
      %v772 = vrot.slane %v738, 2
      %v773 = vsel %vm752, %v770, %v772
      %v784 = vadd.f32 %v628, %v755
      %v785 = vadd.f32 %v629, %v757
      %v786 = vadd.f32 %v630, %v759
      %v787 = vadd.f32 %v631, %v761
      %v788 = vadd.f32 %v632, %v763
      %v789 = vadd.f32 %v633, %v765
      %v790 = vadd.f32 %v634, %v767
      %v791 = vadd.f32 %v635, %v769
      %v792 = vadd.f32 %v636, %v771
      %v793 = vadd.f32 %v637, %v773
      %794 = vst [vmem:[#allocation2] sm:$0xff] %v784
      %795 = vst [vmem:[#allocation2 + $0x8] sm:$0xff] %v785
      %796 = vst [vmem:[#allocation2 + $0x10] sm:$0xff] %v786
      %797 = vst [vmem:[#allocation2 + $0x18] sm:$0xff] %v787
      %798 = vst [vmem:[#allocation2 + $0x20] sm:$0xff] %v788
      %799 = vst [vmem:[#allocation2 + $0x28] sm:$0xff] %v789
      %800 = vst [vmem:[#allocation2 + $0x30] sm:$0xff] %v790
      %801 = vst [vmem:[#allocation2 + $0x38] sm:$0xff] %v791
      %802 = vst [vmem:[#allocation2 + $0x40] sm:$0xff] %v792
      %803 = vst [vmem:[#allocation2 + $0x48] sm:$0xff] %v793
      %s804 = sadd.s32 %s331, 8
      %s805 = sshra.s32 %s804, 3
      %s806 = sand.u32 %s804, 7
      %s807 = smul.addr %s805, 4
      %s808 = scalar_lea.vmem %s301, %s807
      %v809 = vld [vmem:[%s808] sm:$0xf]
      %v810 = vld [vmem:[%s808 + $0x4] sm:$0xf]
      %v811 = vld [vmem:[%s808 + $0x8] sm:$0xf]
      %v812 = vld [vmem:[%s808 + $0xc] sm:$0xf]
      %v813 = vld [vmem:[%s808 + $0x10] sm:$0xf]
      %v814 = vld [vmem:[%s808 + $0x14] sm:$0xf]
      %v815 = vld [vmem:[%s808 + $0x18] sm:$0xf]
      %v816 = vld [vmem:[%s808 + $0x1c] sm:$0xf]
      %v817 = vld [vmem:[%s808 + $0x20] sm:$0xf]
      %v818 = vld [vmem:[%s808 + $0x24] sm:$0xf]
      %v819 = vld [vmem:[%s808 + $0x28] sm:$0xf]
      %s820 = scalar_lea.vmem %s305, 192
      %v821 = vld [vmem:[%s820] sm:$0xf]
      %v822 = vld [vmem:[%s820 + $0x4] sm:$0xf]
      %v823 = vld [vmem:[%s820 + $0x8] sm:$0xf]
      %v824 = vld [vmem:[%s820 + $0xc] sm:$0xf]
      %v825 = vld [vmem:[%s820 + $0x10] sm:$0xf]
      %v826 = vld [vmem:[%s820 + $0x14] sm:$0xf]
      %v827 = vld [vmem:[%s820 + $0x18] sm:$0xf]
      %v828 = vld [vmem:[%s820 + $0x1c] sm:$0xf]
      %v829 = vld [vmem:[%s820 + $0x20] sm:$0xf]
      %v830 = vld [vmem:[%s820 + $0x24] sm:$0xf]
      %v831 = vld [vmem:[%s820 + $0x28] sm:$0xf]
      %v832 = vld [vmem:[%s820 + $0x2c] sm:$0xf]
      %v833 = vld [vmem:[%s820 + $0x30] sm:$0xf]
      %v834 = vld [vmem:[%s820 + $0x34] sm:$0xf]
      %v835 = vld [vmem:[%s820 + $0x38] sm:$0xf]
      %v836 = vld [vmem:[%s820 + $0x3c] sm:$0xf]
      %v848 = vunpack.c.l.b16 %v809
      %v849 = vunpack.c.l.b16 %v810
      %v850 = vunpack.c.l.b16 %v811
      %v851 = vunpack.c.l.b16 %v812
      %v852 = vunpack.c.l.b16 %v813
      %v853 = vunpack.c.l.b16 %v814
      %v854 = vunpack.c.l.b16 %v815
      %v855 = vunpack.c.l.b16 %v816
      %v856 = vunpack.c.l.b16 %v817
      %v857 = vunpack.c.l.b16 %v818
      %v858 = vunpack.c.l.b16 %v819
      %v859 = vpack.c.b16 %v849, %v848
      %v860 = vpack.c.b16 %v851, %v850
      %v861 = vpack.c.b16 %v853, %v852
      %v862 = vpack.c.b16 %v855, %v854
      %v863 = vpack.c.b16 %v857, %v856
      %v864 = vpack.c.b16 %v858, %v858
      %v887 = vunpack.c.l.b16 %v821
      %v888 = vunpack.c.l.b16 %v822
      %v889 = vunpack.c.l.b16 %v823
      %v890 = vunpack.c.l.b16 %v824
      %v891 = vunpack.c.l.b16 %v825
      %v892 = vunpack.c.l.b16 %v826
      %v893 = vunpack.c.l.b16 %v827
      %v894 = vunpack.c.l.b16 %v828
      %v895 = vunpack.c.l.b16 %v829
      %v896 = vunpack.c.l.b16 %v830
      %v897 = vunpack.c.l.b16 %v831
      %v898 = vunpack.c.l.b16 %v832
      %v899 = vunpack.c.l.b16 %v833
      %v900 = vunpack.c.l.b16 %v834
      %v901 = vunpack.c.l.b16 %v835
      %v902 = vunpack.c.l.b16 %v836
      %v903 = vpack.c.b16 %v888, %v887
      %v904 = vpack.c.b16 %v890, %v889
      %v905 = vpack.c.b16 %v892, %v891
      %v906 = vpack.c.b16 %v894, %v893
      %v907 = vpack.c.b16 %v896, %v895
      %v908 = vpack.c.b16 %v898, %v897
      %v909 = vpack.c.b16 %v900, %v899
      %v910 = vpack.c.b16 %v902, %v901
      %919 = vmatpush.bf16.msra.mxu0 %v910
      %920 = vmatpush.bf16.msra.mxu0 %v909
      %921 = vmatpush.bf16.msra.mxu0 %v908
      %922 = vmatpush.bf16.msra.mxu0 %v907
      %923 = vmatpush.bf16.msra.mxu0 %v906
      %924 = vmatpush.bf16.msra.mxu0 %v905
      %925 = vmatpush.bf16.msra.mxu0 %v904
      %926 = vmatpush.bf16.msra.mxu0 %v903
      %927 = vmatmul.bf16.gmra.mxu0 %v859
      %v928 = vpop.f32.mrf.mxu0
      %v929 = vadd.f32 0.0, %v928
      %v930 = vpop.f32.mrf.mxu0
      %v931 = vadd.f32 0.0, %v930
      %932 = vmatmul.bf16.gmra.mxu0 %v860
      %v933 = vpop.f32.mrf.mxu0
      %v934 = vadd.f32 0.0, %v933
      %v935 = vpop.f32.mrf.mxu0
      %v936 = vadd.f32 0.0, %v935
      %937 = vmatmul.bf16.gmra.mxu0 %v861
      %v938 = vpop.f32.mrf.mxu0
      %v939 = vadd.f32 0.0, %v938
      %v940 = vpop.f32.mrf.mxu0
      %v941 = vadd.f32 0.0, %v940
      %942 = vmatmul.bf16.gmra.mxu0 %v862
      %v943 = vpop.f32.mrf.mxu0
      %v944 = vadd.f32 0.0, %v943
      %v945 = vpop.f32.mrf.mxu0
      %v946 = vadd.f32 0.0, %v945
      %947 = vmatmul.bf16.gmra.mxu0 %v863
      %v948 = vpop.f32.mrf.mxu0
      %v949 = vadd.f32 0.0, %v948
      %v950 = vpop.f32.mrf.mxu0
      %v951 = vadd.f32 0.0, %v950
      %952 = vmatmul.bf16.gmra.mxu0 %v864
      %v953 = vpop.f32.mrf.mxu0
      %v954 = vadd.f32 0.0, %v953
      %v955 = vpop.f32.mrf.mxu0
      %956 = vdwg.mxu0
      %s957 = scalar_lea.vmem %s305, 256
      %v958 = vld [vmem:[%s957] sm:$0xf]
      %v959 = vld [vmem:[%s957 + $0x4] sm:$0xf]
      %v960 = vld [vmem:[%s957 + $0x8] sm:$0xf]
      %v961 = vld [vmem:[%s957 + $0xc] sm:$0xf]
      %v962 = vld [vmem:[%s957 + $0x10] sm:$0xf]
      %v963 = vld [vmem:[%s957 + $0x14] sm:$0xf]
      %v964 = vld [vmem:[%s957 + $0x18] sm:$0xf]
      %v965 = vld [vmem:[%s957 + $0x1c] sm:$0xf]
      %v966 = vld [vmem:[%s957 + $0x20] sm:$0xf]
      %v967 = vld [vmem:[%s957 + $0x24] sm:$0xf]
      %v968 = vld [vmem:[%s957 + $0x28] sm:$0xf]
      %v969 = vld [vmem:[%s957 + $0x2c] sm:$0xf]
      %v970 = vld [vmem:[%s957 + $0x30] sm:$0xf]
      %v971 = vld [vmem:[%s957 + $0x34] sm:$0xf]
      %v972 = vld [vmem:[%s957 + $0x38] sm:$0xf]
      %v973 = vld [vmem:[%s957 + $0x3c] sm:$0xf]
      %v990 = vunpack.c.l.b16 %v958
      %v991 = vunpack.c.l.b16 %v959
      %v992 = vunpack.c.l.b16 %v960
      %v993 = vunpack.c.l.b16 %v961
      %v994 = vunpack.c.l.b16 %v962
      %v995 = vunpack.c.l.b16 %v963
      %v996 = vunpack.c.l.b16 %v964
      %v997 = vunpack.c.l.b16 %v965
      %v998 = vunpack.c.l.b16 %v966
      %v999 = vunpack.c.l.b16 %v967
      %v1000 = vunpack.c.l.b16 %v968
      %v1001 = vunpack.c.l.b16 %v969
      %v1002 = vunpack.c.l.b16 %v970
      %v1003 = vunpack.c.l.b16 %v971
      %v1004 = vunpack.c.l.b16 %v972
      %v1005 = vunpack.c.l.b16 %v973
      %v1006 = vpack.c.b16 %v991, %v990
      %v1007 = vpack.c.b16 %v993, %v992
      %v1008 = vpack.c.b16 %v995, %v994
      %v1009 = vpack.c.b16 %v997, %v996
      %v1010 = vpack.c.b16 %v999, %v998
      %v1011 = vpack.c.b16 %v1001, %v1000
      %v1012 = vpack.c.b16 %v1003, %v1002
      %v1013 = vpack.c.b16 %v1005, %v1004
      %1022 = vmatpush.bf16.msra.mxu0 %v1013
      %1023 = vmatpush.bf16.msra.mxu0 %v1012
      %1024 = vmatpush.bf16.msra.mxu0 %v1011
      %1025 = vmatpush.bf16.msra.mxu0 %v1010
      %1026 = vmatpush.bf16.msra.mxu0 %v1009
      %1027 = vmatpush.bf16.msra.mxu0 %v1008
      %1028 = vmatpush.bf16.msra.mxu0 %v1007
      %1029 = vmatpush.bf16.msra.mxu0 %v1006
      %1030 = vmatmul.bf16.gmra.mxu0 %v859
      %v1031 = vpop.f32.mrf.mxu0
      %v1032 = vadd.f32 0.0, %v1031
      %v1033 = vpop.f32.mrf.mxu0
      %v1034 = vadd.f32 0.0, %v1033
      %1035 = vmatmul.bf16.gmra.mxu0 %v860
      %v1036 = vpop.f32.mrf.mxu0
      %v1037 = vadd.f32 0.0, %v1036
      %v1038 = vpop.f32.mrf.mxu0
      %v1039 = vadd.f32 0.0, %v1038
      %1040 = vmatmul.bf16.gmra.mxu0 %v861
      %v1041 = vpop.f32.mrf.mxu0
      %v1042 = vadd.f32 0.0, %v1041
      %v1043 = vpop.f32.mrf.mxu0
      %v1044 = vadd.f32 0.0, %v1043
      %1045 = vmatmul.bf16.gmra.mxu0 %v862
      %v1046 = vpop.f32.mrf.mxu0
      %v1047 = vadd.f32 0.0, %v1046
      %v1048 = vpop.f32.mrf.mxu0
      %v1049 = vadd.f32 0.0, %v1048
      %1050 = vmatmul.bf16.gmra.mxu0 %v863
      %v1051 = vpop.f32.mrf.mxu0
      %v1052 = vadd.f32 0.0, %v1051
      %v1053 = vpop.f32.mrf.mxu0
      %v1054 = vadd.f32 0.0, %v1053
      %1055 = vmatmul.bf16.gmra.mxu0 %v864
      %v1056 = vpop.f32.mrf.mxu0
      %v1057 = vadd.f32 0.0, %v1056
      %v1058 = vpop.f32.mrf.mxu0
      %1059 = vdwg.mxu0
      %v1071 = vrot.slane %v1032, 1
      %v1072 = vrot.slane %v1034, 1
      %v1073 = vsel %vm596, %v1071, %v1072
      %v1074 = vrot.slane %v1037, 1
      %v1075 = vsel %vm596, %v1072, %v1074
      %v1076 = vrot.slane %v1039, 1
      %v1077 = vsel %vm596, %v1074, %v1076
      %v1078 = vrot.slane %v1042, 1
      %v1079 = vsel %vm596, %v1076, %v1078
      %v1080 = vrot.slane %v1044, 1
      %v1081 = vsel %vm596, %v1078, %v1080
      %v1082 = vrot.slane %v1047, 1
      %v1083 = vsel %vm596, %v1080, %v1082
      %v1084 = vrot.slane %v1049, 1
      %v1085 = vsel %vm596, %v1082, %v1084
      %v1086 = vrot.slane %v1052, 1
      %v1087 = vsel %vm596, %v1084, %v1086
      %v1088 = vrot.slane %v1054, 1
      %v1089 = vsel %vm596, %v1086, %v1088
      %v1090 = vrot.slane %v1057, 1
      %v1091 = vsel %vm596, %v1088, %v1090
      %v1103 = vadd.f32 %v929, %v1073
      %v1104 = vadd.f32 %v931, %v1075
      %v1105 = vadd.f32 %v934, %v1077
      %v1106 = vadd.f32 %v936, %v1079
      %v1107 = vadd.f32 %v939, %v1081
      %v1108 = vadd.f32 %v941, %v1083
      %v1109 = vadd.f32 %v944, %v1085
      %v1110 = vadd.f32 %v946, %v1087
      %v1111 = vadd.f32 %v949, %v1089
      %v1112 = vadd.f32 %v951, %v1091
      %v1113 = vadd.f32 %v954, %v1090
      %s1114 = scalar_lea.vmem %s305, 320
      %v1115 = vld [vmem:[%s1114] sm:$0xf]
      %v1116 = vld [vmem:[%s1114 + $0x4] sm:$0xf]
      %v1117 = vld [vmem:[%s1114 + $0x8] sm:$0xf]
      %v1118 = vld [vmem:[%s1114 + $0xc] sm:$0xf]
      %v1119 = vld [vmem:[%s1114 + $0x10] sm:$0xf]
      %v1120 = vld [vmem:[%s1114 + $0x14] sm:$0xf]
      %v1121 = vld [vmem:[%s1114 + $0x18] sm:$0xf]
      %v1122 = vld [vmem:[%s1114 + $0x1c] sm:$0xf]
      %v1123 = vld [vmem:[%s1114 + $0x20] sm:$0xf]
      %v1124 = vld [vmem:[%s1114 + $0x24] sm:$0xf]
      %v1125 = vld [vmem:[%s1114 + $0x28] sm:$0xf]
      %v1126 = vld [vmem:[%s1114 + $0x2c] sm:$0xf]
      %v1127 = vld [vmem:[%s1114 + $0x30] sm:$0xf]
      %v1128 = vld [vmem:[%s1114 + $0x34] sm:$0xf]
      %v1129 = vld [vmem:[%s1114 + $0x38] sm:$0xf]
      %v1130 = vld [vmem:[%s1114 + $0x3c] sm:$0xf]
      %v1147 = vunpack.c.l.b16 %v1115
      %v1148 = vunpack.c.l.b16 %v1116
      %v1149 = vunpack.c.l.b16 %v1117
      %v1150 = vunpack.c.l.b16 %v1118
      %v1151 = vunpack.c.l.b16 %v1119
      %v1152 = vunpack.c.l.b16 %v1120
      %v1153 = vunpack.c.l.b16 %v1121
      %v1154 = vunpack.c.l.b16 %v1122
      %v1155 = vunpack.c.l.b16 %v1123
      %v1156 = vunpack.c.l.b16 %v1124
      %v1157 = vunpack.c.l.b16 %v1125
      %v1158 = vunpack.c.l.b16 %v1126
      %v1159 = vunpack.c.l.b16 %v1127
      %v1160 = vunpack.c.l.b16 %v1128
      %v1161 = vunpack.c.l.b16 %v1129
      %v1162 = vunpack.c.l.b16 %v1130
      %v1163 = vpack.c.b16 %v1148, %v1147
      %v1164 = vpack.c.b16 %v1150, %v1149
      %v1165 = vpack.c.b16 %v1152, %v1151
      %v1166 = vpack.c.b16 %v1154, %v1153
      %v1167 = vpack.c.b16 %v1156, %v1155
      %v1168 = vpack.c.b16 %v1158, %v1157
      %v1169 = vpack.c.b16 %v1160, %v1159
      %v1170 = vpack.c.b16 %v1162, %v1161
      %1179 = vmatpush.bf16.msra.mxu0 %v1170
      %1180 = vmatpush.bf16.msra.mxu0 %v1169
      %1181 = vmatpush.bf16.msra.mxu0 %v1168
      %1182 = vmatpush.bf16.msra.mxu0 %v1167
      %1183 = vmatpush.bf16.msra.mxu0 %v1166
      %1184 = vmatpush.bf16.msra.mxu0 %v1165
      %1185 = vmatpush.bf16.msra.mxu0 %v1164
      %1186 = vmatpush.bf16.msra.mxu0 %v1163
      %1187 = vmatmul.bf16.gmra.mxu0 %v859
      %v1188 = vpop.f32.mrf.mxu0
      %v1189 = vadd.f32 0.0, %v1188
      %v1190 = vpop.f32.mrf.mxu0
      %v1191 = vadd.f32 0.0, %v1190
      %1192 = vmatmul.bf16.gmra.mxu0 %v860
      %v1193 = vpop.f32.mrf.mxu0
      %v1194 = vadd.f32 0.0, %v1193
      %v1195 = vpop.f32.mrf.mxu0
      %v1196 = vadd.f32 0.0, %v1195
      %1197 = vmatmul.bf16.gmra.mxu0 %v861
      %v1198 = vpop.f32.mrf.mxu0
      %v1199 = vadd.f32 0.0, %v1198
      %v1200 = vpop.f32.mrf.mxu0
      %v1201 = vadd.f32 0.0, %v1200
      %1202 = vmatmul.bf16.gmra.mxu0 %v862
      %v1203 = vpop.f32.mrf.mxu0
      %v1204 = vadd.f32 0.0, %v1203
      %v1205 = vpop.f32.mrf.mxu0
      %v1206 = vadd.f32 0.0, %v1205
      %1207 = vmatmul.bf16.gmra.mxu0 %v863
      %v1208 = vpop.f32.mrf.mxu0
      %v1209 = vadd.f32 0.0, %v1208
      %v1210 = vpop.f32.mrf.mxu0
      %v1211 = vadd.f32 0.0, %v1210
      %1212 = vmatmul.bf16.gmra.mxu0 %v864
      %v1213 = vpop.f32.mrf.mxu0
      %v1214 = vadd.f32 0.0, %v1213
      %v1215 = vpop.f32.mrf.mxu0
      %1216 = vdwg.mxu0
      %v1228 = vrot.slane %v1189, 2
      %v1229 = vrot.slane %v1191, 2
      %v1230 = vsel %vm752, %v1228, %v1229
      %v1231 = vrot.slane %v1194, 2
      %v1232 = vsel %vm752, %v1229, %v1231
      %v1233 = vrot.slane %v1196, 2
      %v1234 = vsel %vm752, %v1231, %v1233
      %v1235 = vrot.slane %v1199, 2
      %v1236 = vsel %vm752, %v1233, %v1235
      %v1237 = vrot.slane %v1201, 2
      %v1238 = vsel %vm752, %v1235, %v1237
      %v1239 = vrot.slane %v1204, 2
      %v1240 = vsel %vm752, %v1237, %v1239
      %v1241 = vrot.slane %v1206, 2
      %v1242 = vsel %vm752, %v1239, %v1241
      %v1243 = vrot.slane %v1209, 2
      %v1244 = vsel %vm752, %v1241, %v1243
      %v1245 = vrot.slane %v1211, 2
      %v1246 = vsel %vm752, %v1243, %v1245
      %v1247 = vrot.slane %v1214, 2
      %v1248 = vsel %vm752, %v1245, %v1247
      %v1260 = vadd.f32 %v1103, %v1230
      %v1261 = vadd.f32 %v1104, %v1232
      %v1262 = vadd.f32 %v1105, %v1234
      %v1263 = vadd.f32 %v1106, %v1236
      %v1264 = vadd.f32 %v1107, %v1238
      %v1265 = vadd.f32 %v1108, %v1240
      %v1266 = vadd.f32 %v1109, %v1242
      %v1267 = vadd.f32 %v1110, %v1244
      %v1268 = vadd.f32 %v1111, %v1246
      %v1269 = vadd.f32 %v1112, %v1248
      %v1270 = vadd.f32 %v1113, %v1247
      %v1271 = vld [vmem:[#allocation2] sm:$0xff]
      %v1272 = vld [vmem:[#allocation2 + $0x8] sm:$0xff]
      %v1273 = vld [vmem:[#allocation2 + $0x10] sm:$0xff]
      %v1274 = vld [vmem:[#allocation2 + $0x18] sm:$0xff]
      %v1275 = vld [vmem:[#allocation2 + $0x20] sm:$0xff]
      %v1276 = vld [vmem:[#allocation2 + $0x28] sm:$0xff]
      %v1277 = vld [vmem:[#allocation2 + $0x30] sm:$0xff]
      %v1278 = vld [vmem:[#allocation2 + $0x38] sm:$0xff]
      %v1279 = vld [vmem:[#allocation2 + $0x40] sm:$0xff]
      %v1280 = vld [vmem:[#allocation2 + $0x48] sm:$0xff]
      %v1292 = vrot.slane %v1260, 2
      %v1293 = vrot.slane %v1261, 2
      %v1294 = vsel %vm752, %v1292, %v1293
      %v1295 = vrot.slane %v1262, 2
      %v1296 = vsel %vm752, %v1293, %v1295
      %v1297 = vrot.slane %v1263, 2
      %v1298 = vsel %vm752, %v1295, %v1297
      %v1299 = vrot.slane %v1264, 2
      %v1300 = vsel %vm752, %v1297, %v1299
      %v1301 = vrot.slane %v1265, 2
      %v1302 = vsel %vm752, %v1299, %v1301
      %v1303 = vrot.slane %v1266, 2
      %v1304 = vsel %vm752, %v1301, %v1303
      %v1305 = vrot.slane %v1267, 2
      %v1306 = vsel %vm752, %v1303, %v1305
      %v1307 = vrot.slane %v1268, 2
      %v1308 = vsel %vm752, %v1305, %v1307
      %v1309 = vrot.slane %v1269, 2
      %v1310 = vsel %vm752, %v1307, %v1309
      %v1311 = vrot.slane %v1270, 2
      %v1312 = vsel %vm752, %v1309, %v1311
      %v1323 = vadd.f32 %v1271, %v1294
      %v1324 = vadd.f32 %v1272, %v1296
      %v1325 = vadd.f32 %v1273, %v1298
      %v1326 = vadd.f32 %v1274, %v1300
      %v1327 = vadd.f32 %v1275, %v1302
      %v1328 = vadd.f32 %v1276, %v1304
      %v1329 = vadd.f32 %v1277, %v1306
      %v1330 = vadd.f32 %v1278, %v1308
      %v1331 = vadd.f32 %v1279, %v1310
      %v1332 = vadd.f32 %v1280, %v1312
      %1333 = vst [vmem:[#allocation2] sm:$0xff] %v1323
      %1334 = vst [vmem:[#allocation2 + $0x8] sm:$0xff] %v1324
      %1335 = vst [vmem:[#allocation2 + $0x10] sm:$0xff] %v1325
      %1336 = vst [vmem:[#allocation2 + $0x18] sm:$0xff] %v1326
      %1337 = vst [vmem:[#allocation2 + $0x20] sm:$0xff] %v1327
      %1338 = vst [vmem:[#allocation2 + $0x28] sm:$0xff] %v1328
      %1339 = vst [vmem:[#allocation2 + $0x30] sm:$0xff] %v1329
      %1340 = vst [vmem:[#allocation2 + $0x38] sm:$0xff] %v1330
      %1341 = vst [vmem:[#allocation2 + $0x40] sm:$0xff] %v1331
      %1342 = vst [vmem:[#allocation2 + $0x48] sm:$0xff] %v1332
      %s1343 = sadd.s32 %s331, 16
      %s1344 = sshra.s32 %s1343, 3
      %s1345 = sand.u32 %s1343, 7
      %s1346 = smul.addr %s1344, 4
      %s1347 = scalar_lea.vmem %s301, %s1346
      %v1348 = vld [vmem:[%s1347] sm:$0xf]
      %v1349 = vld [vmem:[%s1347 + $0x4] sm:$0xf]
      %v1350 = vld [vmem:[%s1347 + $0x8] sm:$0xf]
      %v1351 = vld [vmem:[%s1347 + $0xc] sm:$0xf]
      %v1352 = vld [vmem:[%s1347 + $0x10] sm:$0xf]
      %v1353 = vld [vmem:[%s1347 + $0x14] sm:$0xf]
      %v1354 = vld [vmem:[%s1347 + $0x18] sm:$0xf]
      %v1355 = vld [vmem:[%s1347 + $0x1c] sm:$0xf]
      %v1356 = vld [vmem:[%s1347 + $0x20] sm:$0xf]
      %v1357 = vld [vmem:[%s1347 + $0x24] sm:$0xf]
      %v1358 = vld [vmem:[%s1347 + $0x28] sm:$0xf]
      %s1359 = scalar_lea.vmem %s305, 384
      %v1360 = vld [vmem:[%s1359] sm:$0xf]
      %v1361 = vld [vmem:[%s1359 + $0x4] sm:$0xf]
      %v1362 = vld [vmem:[%s1359 + $0x8] sm:$0xf]
      %v1363 = vld [vmem:[%s1359 + $0xc] sm:$0xf]
      %v1364 = vld [vmem:[%s1359 + $0x10] sm:$0xf]
      %v1365 = vld [vmem:[%s1359 + $0x14] sm:$0xf]
      %v1366 = vld [vmem:[%s1359 + $0x18] sm:$0xf]
      %v1367 = vld [vmem:[%s1359 + $0x1c] sm:$0xf]
      %v1368 = vld [vmem:[%s1359 + $0x20] sm:$0xf]
      %v1369 = vld [vmem:[%s1359 + $0x24] sm:$0xf]
      %v1370 = vld [vmem:[%s1359 + $0x28] sm:$0xf]
      %v1371 = vld [vmem:[%s1359 + $0x2c] sm:$0xf]
      %v1372 = vld [vmem:[%s1359 + $0x30] sm:$0xf]
      %v1373 = vld [vmem:[%s1359 + $0x34] sm:$0xf]
      %v1374 = vld [vmem:[%s1359 + $0x38] sm:$0xf]
      %v1375 = vld [vmem:[%s1359 + $0x3c] sm:$0xf]
      %v1387 = vunpack.c.l.b16 %v1348
      %v1388 = vunpack.c.l.b16 %v1349
      %v1389 = vunpack.c.l.b16 %v1350
      %v1390 = vunpack.c.l.b16 %v1351
      %v1391 = vunpack.c.l.b16 %v1352
      %v1392 = vunpack.c.l.b16 %v1353
      %v1393 = vunpack.c.l.b16 %v1354
      %v1394 = vunpack.c.l.b16 %v1355
      %v1395 = vunpack.c.l.b16 %v1356
      %v1396 = vunpack.c.l.b16 %v1357
      %v1397 = vunpack.c.l.b16 %v1358
      %v1398 = vpack.c.b16 %v1388, %v1387
      %v1399 = vpack.c.b16 %v1390, %v1389
      %v1400 = vpack.c.b16 %v1392, %v1391
      %v1401 = vpack.c.b16 %v1394, %v1393
      %v1402 = vpack.c.b16 %v1396, %v1395
      %v1403 = vpack.c.b16 %v1397, %v1397
      %v1426 = vunpack.c.l.b16 %v1360
      %v1427 = vunpack.c.l.b16 %v1361
      %v1428 = vunpack.c.l.b16 %v1362
      %v1429 = vunpack.c.l.b16 %v1363
      %v1430 = vunpack.c.l.b16 %v1364
      %v1431 = vunpack.c.l.b16 %v1365
      %v1432 = vunpack.c.l.b16 %v1366
      %v1433 = vunpack.c.l.b16 %v1367
      %v1434 = vunpack.c.l.b16 %v1368
      %v1435 = vunpack.c.l.b16 %v1369
      %v1436 = vunpack.c.l.b16 %v1370
      %v1437 = vunpack.c.l.b16 %v1371
      %v1438 = vunpack.c.l.b16 %v1372
      %v1439 = vunpack.c.l.b16 %v1373
      %v1440 = vunpack.c.l.b16 %v1374
      %v1441 = vunpack.c.l.b16 %v1375
      %v1442 = vpack.c.b16 %v1427, %v1426
      %v1443 = vpack.c.b16 %v1429, %v1428
      %v1444 = vpack.c.b16 %v1431, %v1430
      %v1445 = vpack.c.b16 %v1433, %v1432
      %v1446 = vpack.c.b16 %v1435, %v1434
      %v1447 = vpack.c.b16 %v1437, %v1436
      %v1448 = vpack.c.b16 %v1439, %v1438
      %v1449 = vpack.c.b16 %v1441, %v1440
      %1458 = vmatpush.bf16.msra.mxu0 %v1449
      %1459 = vmatpush.bf16.msra.mxu0 %v1448
      %1460 = vmatpush.bf16.msra.mxu0 %v1447
      %1461 = vmatpush.bf16.msra.mxu0 %v1446
      %1462 = vmatpush.bf16.msra.mxu0 %v1445
      %1463 = vmatpush.bf16.msra.mxu0 %v1444
      %1464 = vmatpush.bf16.msra.mxu0 %v1443
      %1465 = vmatpush.bf16.msra.mxu0 %v1442
      %1466 = vmatmul.bf16.gmra.mxu0 %v1398
      %v1467 = vpop.f32.mrf.mxu0
      %v1468 = vadd.f32 0.0, %v1467
      %v1469 = vpop.f32.mrf.mxu0
      %v1470 = vadd.f32 0.0, %v1469
      %1471 = vmatmul.bf16.gmra.mxu0 %v1399
      %v1472 = vpop.f32.mrf.mxu0
      %v1473 = vadd.f32 0.0, %v1472
      %v1474 = vpop.f32.mrf.mxu0
      %v1475 = vadd.f32 0.0, %v1474
      %1476 = vmatmul.bf16.gmra.mxu0 %v1400
      %v1477 = vpop.f32.mrf.mxu0
      %v1478 = vadd.f32 0.0, %v1477
      %v1479 = vpop.f32.mrf.mxu0
      %v1480 = vadd.f32 0.0, %v1479
      %1481 = vmatmul.bf16.gmra.mxu0 %v1401
      %v1482 = vpop.f32.mrf.mxu0
      %v1483 = vadd.f32 0.0, %v1482
      %v1484 = vpop.f32.mrf.mxu0
      %v1485 = vadd.f32 0.0, %v1484
      %1486 = vmatmul.bf16.gmra.mxu0 %v1402
      %v1487 = vpop.f32.mrf.mxu0
      %v1488 = vadd.f32 0.0, %v1487
      %v1489 = vpop.f32.mrf.mxu0
      %v1490 = vadd.f32 0.0, %v1489
      %1491 = vmatmul.bf16.gmra.mxu0 %v1403
      %v1492 = vpop.f32.mrf.mxu0
      %v1493 = vadd.f32 0.0, %v1492
      %v1494 = vpop.f32.mrf.mxu0
      %1495 = vdwg.mxu0
      %s1496 = scalar_lea.vmem %s305, 448
      %v1497 = vld [vmem:[%s1496] sm:$0xf]
      %v1498 = vld [vmem:[%s1496 + $0x4] sm:$0xf]
      %v1499 = vld [vmem:[%s1496 + $0x8] sm:$0xf]
      %v1500 = vld [vmem:[%s1496 + $0xc] sm:$0xf]
      %v1501 = vld [vmem:[%s1496 + $0x10] sm:$0xf]
      %v1502 = vld [vmem:[%s1496 + $0x14] sm:$0xf]
      %v1503 = vld [vmem:[%s1496 + $0x18] sm:$0xf]
      %v1504 = vld [vmem:[%s1496 + $0x1c] sm:$0xf]
      %v1505 = vld [vmem:[%s1496 + $0x20] sm:$0xf]
      %v1506 = vld [vmem:[%s1496 + $0x24] sm:$0xf]
      %v1507 = vld [vmem:[%s1496 + $0x28] sm:$0xf]
      %v1508 = vld [vmem:[%s1496 + $0x2c] sm:$0xf]
      %v1509 = vld [vmem:[%s1496 + $0x30] sm:$0xf]
      %v1510 = vld [vmem:[%s1496 + $0x34] sm:$0xf]
      %v1511 = vld [vmem:[%s1496 + $0x38] sm:$0xf]
      %v1512 = vld [vmem:[%s1496 + $0x3c] sm:$0xf]
      %v1529 = vunpack.c.l.b16 %v1497
      %v1530 = vunpack.c.l.b16 %v1498
      %v1531 = vunpack.c.l.b16 %v1499
      %v1532 = vunpack.c.l.b16 %v1500
      %v1533 = vunpack.c.l.b16 %v1501
      %v1534 = vunpack.c.l.b16 %v1502
      %v1535 = vunpack.c.l.b16 %v1503
      %v1536 = vunpack.c.l.b16 %v1504
      %v1537 = vunpack.c.l.b16 %v1505
      %v1538 = vunpack.c.l.b16 %v1506
      %v1539 = vunpack.c.l.b16 %v1507
      %v1540 = vunpack.c.l.b16 %v1508
      %v1541 = vunpack.c.l.b16 %v1509
      %v1542 = vunpack.c.l.b16 %v1510
      %v1543 = vunpack.c.l.b16 %v1511
      %v1544 = vunpack.c.l.b16 %v1512
      %v1545 = vpack.c.b16 %v1530, %v1529
      %v1546 = vpack.c.b16 %v1532, %v1531
      %v1547 = vpack.c.b16 %v1534, %v1533
      %v1548 = vpack.c.b16 %v1536, %v1535
      %v1549 = vpack.c.b16 %v1538, %v1537
      %v1550 = vpack.c.b16 %v1540, %v1539
      %v1551 = vpack.c.b16 %v1542, %v1541
      %v1552 = vpack.c.b16 %v1544, %v1543
      %1561 = vmatpush.bf16.msra.mxu0 %v1552
      %1562 = vmatpush.bf16.msra.mxu0 %v1551
      %1563 = vmatpush.bf16.msra.mxu0 %v1550
      %1564 = vmatpush.bf16.msra.mxu0 %v1549
      %1565 = vmatpush.bf16.msra.mxu0 %v1548
      %1566 = vmatpush.bf16.msra.mxu0 %v1547
      %1567 = vmatpush.bf16.msra.mxu0 %v1546
      %1568 = vmatpush.bf16.msra.mxu0 %v1545
      %1569 = vmatmul.bf16.gmra.mxu0 %v1398
      %v1570 = vpop.f32.mrf.mxu0
      %v1571 = vadd.f32 0.0, %v1570
      %v1572 = vpop.f32.mrf.mxu0
      %v1573 = vadd.f32 0.0, %v1572
      %1574 = vmatmul.bf16.gmra.mxu0 %v1399
      %v1575 = vpop.f32.mrf.mxu0
      %v1576 = vadd.f32 0.0, %v1575
      %v1577 = vpop.f32.mrf.mxu0
      %v1578 = vadd.f32 0.0, %v1577
      %1579 = vmatmul.bf16.gmra.mxu0 %v1400
      %v1580 = vpop.f32.mrf.mxu0
      %v1581 = vadd.f32 0.0, %v1580
      %v1582 = vpop.f32.mrf.mxu0
      %v1583 = vadd.f32 0.0, %v1582
      %1584 = vmatmul.bf16.gmra.mxu0 %v1401
      %v1585 = vpop.f32.mrf.mxu0
      %v1586 = vadd.f32 0.0, %v1585
      %v1587 = vpop.f32.mrf.mxu0
      %v1588 = vadd.f32 0.0, %v1587
      %1589 = vmatmul.bf16.gmra.mxu0 %v1402
      %v1590 = vpop.f32.mrf.mxu0
      %v1591 = vadd.f32 0.0, %v1590
      %v1592 = vpop.f32.mrf.mxu0
      %v1593 = vadd.f32 0.0, %v1592
      %1594 = vmatmul.bf16.gmra.mxu0 %v1403
      %v1595 = vpop.f32.mrf.mxu0
      %v1596 = vadd.f32 0.0, %v1595
      %v1597 = vpop.f32.mrf.mxu0
      %1598 = vdwg.mxu0
      %v1610 = vrot.slane %v1571, 1
      %v1611 = vrot.slane %v1573, 1
      %v1612 = vsel %vm596, %v1610, %v1611
      %v1613 = vrot.slane %v1576, 1
      %v1614 = vsel %vm596, %v1611, %v1613
      %v1615 = vrot.slane %v1578, 1
      %v1616 = vsel %vm596, %v1613, %v1615
      %v1617 = vrot.slane %v1581, 1
      %v1618 = vsel %vm596, %v1615, %v1617
      %v1619 = vrot.slane %v1583, 1
      %v1620 = vsel %vm596, %v1617, %v1619
      %v1621 = vrot.slane %v1586, 1
      %v1622 = vsel %vm596, %v1619, %v1621
      %v1623 = vrot.slane %v1588, 1
      %v1624 = vsel %vm596, %v1621, %v1623
      %v1625 = vrot.slane %v1591, 1
      %v1626 = vsel %vm596, %v1623, %v1625
      %v1627 = vrot.slane %v1593, 1
      %v1628 = vsel %vm596, %v1625, %v1627
      %v1629 = vrot.slane %v1596, 1
      %v1630 = vsel %vm596, %v1627, %v1629
      %v1642 = vadd.f32 %v1468, %v1612
      %v1643 = vadd.f32 %v1470, %v1614
      %v1644 = vadd.f32 %v1473, %v1616
      %v1645 = vadd.f32 %v1475, %v1618
      %v1646 = vadd.f32 %v1478, %v1620
      %v1647 = vadd.f32 %v1480, %v1622
      %v1648 = vadd.f32 %v1483, %v1624
      %v1649 = vadd.f32 %v1485, %v1626
      %v1650 = vadd.f32 %v1488, %v1628
      %v1651 = vadd.f32 %v1490, %v1630
      %v1652 = vadd.f32 %v1493, %v1629
      %s1653 = scalar_lea.vmem %s305, 512
      %v1654 = vld [vmem:[%s1653] sm:$0xf]
      %v1655 = vld [vmem:[%s1653 + $0x4] sm:$0xf]
      %v1656 = vld [vmem:[%s1653 + $0x8] sm:$0xf]
      %v1657 = vld [vmem:[%s1653 + $0xc] sm:$0xf]
      %v1658 = vld [vmem:[%s1653 + $0x10] sm:$0xf]
      %v1659 = vld [vmem:[%s1653 + $0x14] sm:$0xf]
      %v1660 = vld [vmem:[%s1653 + $0x18] sm:$0xf]
      %v1661 = vld [vmem:[%s1653 + $0x1c] sm:$0xf]
      %v1662 = vld [vmem:[%s1653 + $0x20] sm:$0xf]
      %v1663 = vld [vmem:[%s1653 + $0x24] sm:$0xf]
      %v1664 = vld [vmem:[%s1653 + $0x28] sm:$0xf]
      %v1665 = vld [vmem:[%s1653 + $0x2c] sm:$0xf]
      %v1666 = vld [vmem:[%s1653 + $0x30] sm:$0xf]
      %v1667 = vld [vmem:[%s1653 + $0x34] sm:$0xf]
      %v1668 = vld [vmem:[%s1653 + $0x38] sm:$0xf]
      %v1669 = vld [vmem:[%s1653 + $0x3c] sm:$0xf]
      %v1686 = vunpack.c.l.b16 %v1654
      %v1687 = vunpack.c.l.b16 %v1655
      %v1688 = vunpack.c.l.b16 %v1656
      %v1689 = vunpack.c.l.b16 %v1657
      %v1690 = vunpack.c.l.b16 %v1658
      %v1691 = vunpack.c.l.b16 %v1659
      %v1692 = vunpack.c.l.b16 %v1660
      %v1693 = vunpack.c.l.b16 %v1661
      %v1694 = vunpack.c.l.b16 %v1662
      %v1695 = vunpack.c.l.b16 %v1663
      %v1696 = vunpack.c.l.b16 %v1664
      %v1697 = vunpack.c.l.b16 %v1665
      %v1698 = vunpack.c.l.b16 %v1666
      %v1699 = vunpack.c.l.b16 %v1667
      %v1700 = vunpack.c.l.b16 %v1668
      %v1701 = vunpack.c.l.b16 %v1669
      %v1702 = vpack.c.b16 %v1687, %v1686
      %v1703 = vpack.c.b16 %v1689, %v1688
      %v1704 = vpack.c.b16 %v1691, %v1690
      %v1705 = vpack.c.b16 %v1693, %v1692
      %v1706 = vpack.c.b16 %v1695, %v1694
      %v1707 = vpack.c.b16 %v1697, %v1696
      %v1708 = vpack.c.b16 %v1699, %v1698
      %v1709 = vpack.c.b16 %v1701, %v1700
      %1718 = vmatpush.bf16.msra.mxu0 %v1709
      %1719 = vmatpush.bf16.msra.mxu0 %v1708
      %1720 = vmatpush.bf16.msra.mxu0 %v1707
      %1721 = vmatpush.bf16.msra.mxu0 %v1706
      %1722 = vmatpush.bf16.msra.mxu0 %v1705
      %1723 = vmatpush.bf16.msra.mxu0 %v1704
      %1724 = vmatpush.bf16.msra.mxu0 %v1703
      %1725 = vmatpush.bf16.msra.mxu0 %v1702
      %1726 = vmatmul.bf16.gmra.mxu0 %v1398
      %v1727 = vpop.f32.mrf.mxu0
      %v1728 = vadd.f32 0.0, %v1727
      %v1729 = vpop.f32.mrf.mxu0
      %v1730 = vadd.f32 0.0, %v1729
      %1731 = vmatmul.bf16.gmra.mxu0 %v1399
      %v1732 = vpop.f32.mrf.mxu0
      %v1733 = vadd.f32 0.0, %v1732
      %v1734 = vpop.f32.mrf.mxu0
      %v1735 = vadd.f32 0.0, %v1734
      %1736 = vmatmul.bf16.gmra.mxu0 %v1400
      %v1737 = vpop.f32.mrf.mxu0
      %v1738 = vadd.f32 0.0, %v1737
      %v1739 = vpop.f32.mrf.mxu0
      %v1740 = vadd.f32 0.0, %v1739
      %1741 = vmatmul.bf16.gmra.mxu0 %v1401
      %v1742 = vpop.f32.mrf.mxu0
      %v1743 = vadd.f32 0.0, %v1742
      %v1744 = vpop.f32.mrf.mxu0
      %v1745 = vadd.f32 0.0, %v1744
      %1746 = vmatmul.bf16.gmra.mxu0 %v1402
      %v1747 = vpop.f32.mrf.mxu0
      %v1748 = vadd.f32 0.0, %v1747
      %v1749 = vpop.f32.mrf.mxu0
      %v1750 = vadd.f32 0.0, %v1749
      %1751 = vmatmul.bf16.gmra.mxu0 %v1403
      %v1752 = vpop.f32.mrf.mxu0
      %v1753 = vadd.f32 0.0, %v1752
      %v1754 = vpop.f32.mrf.mxu0
      %1755 = vdwg.mxu0
      %v1767 = vrot.slane %v1728, 2
      %v1768 = vrot.slane %v1730, 2
      %v1769 = vsel %vm752, %v1767, %v1768
      %v1770 = vrot.slane %v1733, 2
      %v1771 = vsel %vm752, %v1768, %v1770
      %v1772 = vrot.slane %v1735, 2
      %v1773 = vsel %vm752, %v1770, %v1772
      %v1774 = vrot.slane %v1738, 2
      %v1775 = vsel %vm752, %v1772, %v1774
      %v1776 = vrot.slane %v1740, 2
      %v1777 = vsel %vm752, %v1774, %v1776
      %v1778 = vrot.slane %v1743, 2
      %v1779 = vsel %vm752, %v1776, %v1778
      %v1780 = vrot.slane %v1745, 2
      %v1781 = vsel %vm752, %v1778, %v1780
      %v1782 = vrot.slane %v1748, 2
      %v1783 = vsel %vm752, %v1780, %v1782
      %v1784 = vrot.slane %v1750, 2
      %v1785 = vsel %vm752, %v1782, %v1784
      %v1786 = vrot.slane %v1753, 2
      %v1787 = vsel %vm752, %v1784, %v1786
      %v1799 = vadd.f32 %v1642, %v1769
      %v1800 = vadd.f32 %v1643, %v1771
      %v1801 = vadd.f32 %v1644, %v1773
      %v1802 = vadd.f32 %v1645, %v1775
      %v1803 = vadd.f32 %v1646, %v1777
      %v1804 = vadd.f32 %v1647, %v1779
      %v1805 = vadd.f32 %v1648, %v1781
      %v1806 = vadd.f32 %v1649, %v1783
      %v1807 = vadd.f32 %v1650, %v1785
      %v1808 = vadd.f32 %v1651, %v1787
      %v1809 = vadd.f32 %v1652, %v1786
      %v1810 = vld [vmem:[#allocation2] sm:$0xff]
      %v1811 = vld [vmem:[#allocation2 + $0x8] sm:$0xff]
      %v1812 = vld [vmem:[#allocation2 + $0x10] sm:$0xff]
      %v1813 = vld [vmem:[#allocation2 + $0x18] sm:$0xff]
      %v1814 = vld [vmem:[#allocation2 + $0x20] sm:$0xff]
      %v1815 = vld [vmem:[#allocation2 + $0x28] sm:$0xff]
      %v1816 = vld [vmem:[#allocation2 + $0x30] sm:$0xff]
      %v1817 = vld [vmem:[#allocation2 + $0x38] sm:$0xff]
      %v1818 = vld [vmem:[#allocation2 + $0x40] sm:$0xff]
      %v1819 = vld [vmem:[#allocation2 + $0x48] sm:$0xff]
      %vm1831 = vcmask 1043456
      %v1832 = vrot.slane %v1799, 4
      %v1833 = vrot.slane %v1800, 4
      %v1834 = vsel %vm1831, %v1832, %v1833
      %v1835 = vrot.slane %v1801, 4
      %v1836 = vsel %vm1831, %v1833, %v1835
      %v1837 = vrot.slane %v1802, 4
      %v1838 = vsel %vm1831, %v1835, %v1837
      %v1839 = vrot.slane %v1803, 4
      %v1840 = vsel %vm1831, %v1837, %v1839
      %v1841 = vrot.slane %v1804, 4
      %v1842 = vsel %vm1831, %v1839, %v1841
      %v1843 = vrot.slane %v1805, 4
      %v1844 = vsel %vm1831, %v1841, %v1843
      %v1845 = vrot.slane %v1806, 4
      %v1846 = vsel %vm1831, %v1843, %v1845
      %v1847 = vrot.slane %v1807, 4
      %v1848 = vsel %vm1831, %v1845, %v1847
      %v1849 = vrot.slane %v1808, 4
      %v1850 = vsel %vm1831, %v1847, %v1849
      %v1851 = vrot.slane %v1809, 4
      %v1852 = vsel %vm1831, %v1849, %v1851
      %v1863 = vadd.f32 %v1810, %v1834
      %v1864 = vadd.f32 %v1811, %v1836
      %v1865 = vadd.f32 %v1812, %v1838
      %v1866 = vadd.f32 %v1813, %v1840
      %v1867 = vadd.f32 %v1814, %v1842
      %v1868 = vadd.f32 %v1815, %v1844
      %v1869 = vadd.f32 %v1816, %v1846
      %v1870 = vadd.f32 %v1817, %v1848
      %v1871 = vadd.f32 %v1818, %v1850
      %v1872 = vadd.f32 %v1819, %v1852
      %1873 = vst [vmem:[#allocation2] sm:$0xff] %v1863
      %1874 = vst [vmem:[#allocation2 + $0x8] sm:$0xff] %v1864
      %1875 = vst [vmem:[#allocation2 + $0x10] sm:$0xff] %v1865
      %1876 = vst [vmem:[#allocation2 + $0x18] sm:$0xff] %v1866
      %1877 = vst [vmem:[#allocation2 + $0x20] sm:$0xff] %v1867
      %1878 = vst [vmem:[#allocation2 + $0x28] sm:$0xff] %v1868
      %1879 = vst [vmem:[#allocation2 + $0x30] sm:$0xff] %v1869
      %1880 = vst [vmem:[#allocation2 + $0x38] sm:$0xff] %v1870
      %1881 = vst [vmem:[#allocation2 + $0x40] sm:$0xff] %v1871
      %1882 = vst [vmem:[#allocation2 + $0x48] sm:$0xff] %v1872
      %v1883 = vld [vmem:[#allocation2] sm:$0xff]
      %v1884 = vld [vmem:[#allocation2 + $0x8] sm:$0xff]
      %v1885 = vld [vmem:[#allocation2 + $0x10] sm:$0xff]
      %v1886 = vld [vmem:[#allocation2 + $0x18] sm:$0xff]
      %v1887 = vld [vmem:[#allocation2 + $0x20] sm:$0xff]
      %v1888 = vld [vmem:[#allocation2 + $0x28] sm:$0xff]
      %v1889 = vld [vmem:[#allocation2 + $0x30] sm:$0xff]
      %v1890 = vld [vmem:[#allocation2 + $0x38] sm:$0xff]
      %v1891 = vld [vmem:[#allocation2 + $0x40] sm:$0xff]
      %v1892 = vld [vmem:[#allocation2 + $0x48] sm:$0xff]
      %v1893 = vld [vmem:[%s308] sm:$0x1]
      %v1895 = vperm.slane %v1893, 0
      %v1897 = vadd.f32 %v1883, %v1895
      %v1898 = vadd.f32 %v1884, %v1895
      %v1899 = vadd.f32 %v1885, %v1895
      %v1900 = vadd.f32 %v1886, %v1895
      %v1901 = vadd.f32 %v1887, %v1895
      %v1902 = vadd.f32 %v1888, %v1895
      %v1903 = vadd.f32 %v1889, %v1895
      %v1904 = vadd.f32 %v1890, %v1895
      %v1905 = vadd.f32 %v1891, %v1895
      %v1906 = vadd.f32 %v1892, %v1895
      %s1907 = smul.addr %s332, 4
      %s1908 = scalar_lea.vmem %s313, %s1907
      %v1909 = vld [vmem:[%s1908] sm:$0xf]
      %v1910 = vld [vmem:[%s1908 + $0x4] sm:$0xf]
      %v1911 = vld [vmem:[%s1908 + $0x8] sm:$0xf]
      %v1912 = vld [vmem:[%s1908 + $0xc] sm:$0xf]
      %v1913 = vld [vmem:[%s1908 + $0x10] sm:$0xf]
      %v1914 = vld [vmem:[%s1908 + $0x14] sm:$0xf]
      %v1915 = vld [vmem:[%s1908 + $0x18] sm:$0xf]
      %v1916 = vld [vmem:[%s1908 + $0x1c] sm:$0xf]
      %v1917 = vld [vmem:[%s1908 + $0x20] sm:$0xf]
      %v1918 = vld [vmem:[%s1908 + $0x24] sm:$0xf]
      %v1919 = vld [vmem:[%s317] sm:$0xf]
      %v1920 = vld [vmem:[%s317 + $0x4] sm:$0xf]
      %v1921 = vld [vmem:[%s317 + $0x8] sm:$0xf]
      %v1922 = vld [vmem:[%s317 + $0xc] sm:$0xf]
      %v1923 = vld [vmem:[%s317 + $0x10] sm:$0xf]
      %v1924 = vld [vmem:[%s317 + $0x14] sm:$0xf]
      %v1925 = vld [vmem:[%s317 + $0x18] sm:$0xf]
      %v1926 = vld [vmem:[%s317 + $0x1c] sm:$0xf]
      %v1927 = vld [vmem:[%s317 + $0x20] sm:$0xf]
      %v1928 = vld [vmem:[%s317 + $0x24] sm:$0xf]
      %v1929 = vld [vmem:[%s317 + $0x28] sm:$0xf]
      %v1930 = vld [vmem:[%s317 + $0x2c] sm:$0xf]
      %v1931 = vld [vmem:[%s317 + $0x30] sm:$0xf]
      %v1932 = vld [vmem:[%s317 + $0x34] sm:$0xf]
      %v1933 = vld [vmem:[%s317 + $0x38] sm:$0xf]
      %v1934 = vld [vmem:[%s317 + $0x3c] sm:$0xf]
      %v1945 = vunpack.c.l.b16 %v1909
      %v1946 = vunpack.c.l.b16 %v1910
      %v1947 = vunpack.c.l.b16 %v1911
      %v1948 = vunpack.c.l.b16 %v1912
      %v1949 = vunpack.c.l.b16 %v1913
      %v1950 = vunpack.c.l.b16 %v1914
      %v1951 = vunpack.c.l.b16 %v1915
      %v1952 = vunpack.c.l.b16 %v1916
      %v1953 = vunpack.c.l.b16 %v1917
      %v1954 = vunpack.c.l.b16 %v1918
      %v1955 = vpack.c.b16 %v1946, %v1945
      %v1956 = vpack.c.b16 %v1948, %v1947
      %v1957 = vpack.c.b16 %v1950, %v1949
      %v1958 = vpack.c.b16 %v1952, %v1951
      %v1959 = vpack.c.b16 %v1954, %v1953
      %v1981 = vunpack.c.l.b16 %v1919
      %v1982 = vunpack.c.l.b16 %v1920
      %v1983 = vunpack.c.l.b16 %v1921
      %v1984 = vunpack.c.l.b16 %v1922
      %v1985 = vunpack.c.l.b16 %v1923
      %v1986 = vunpack.c.l.b16 %v1924
      %v1987 = vunpack.c.l.b16 %v1925
      %v1988 = vunpack.c.l.b16 %v1926
      %v1989 = vunpack.c.l.b16 %v1927
      %v1990 = vunpack.c.l.b16 %v1928
      %v1991 = vunpack.c.l.b16 %v1929
      %v1992 = vunpack.c.l.b16 %v1930
      %v1993 = vunpack.c.l.b16 %v1931
      %v1994 = vunpack.c.l.b16 %v1932
      %v1995 = vunpack.c.l.b16 %v1933
      %v1996 = vunpack.c.l.b16 %v1934
      %v1997 = vpack.c.b16 %v1982, %v1981
      %v1998 = vpack.c.b16 %v1984, %v1983
      %v1999 = vpack.c.b16 %v1986, %v1985
      %v2000 = vpack.c.b16 %v1988, %v1987
      %v2001 = vpack.c.b16 %v1990, %v1989
      %v2002 = vpack.c.b16 %v1992, %v1991
      %v2003 = vpack.c.b16 %v1994, %v1993
      %v2004 = vpack.c.b16 %v1996, %v1995
      %2013 = vmatpush.bf16.msra.mxu0 %v2004
      %2014 = vmatpush.bf16.msra.mxu0 %v2003
      %2015 = vmatpush.bf16.msra.mxu0 %v2002
      %2016 = vmatpush.bf16.msra.mxu0 %v2001
      %2017 = vmatpush.bf16.msra.mxu0 %v2000
      %2018 = vmatpush.bf16.msra.mxu0 %v1999
      %2019 = vmatpush.bf16.msra.mxu0 %v1998
      %2020 = vmatpush.bf16.msra.mxu0 %v1997
      %2021 = vmatmul.bf16.gmra.mxu0 %v1955
      %v2022 = vpop.f32.mrf.mxu0
      %v2023 = vadd.f32 0.0, %v2022
      %v2024 = vpop.f32.mrf.mxu0
      %v2025 = vadd.f32 0.0, %v2024
      %2026 = vmatmul.bf16.gmra.mxu0 %v1956
      %v2027 = vpop.f32.mrf.mxu0
      %v2028 = vadd.f32 0.0, %v2027
      %v2029 = vpop.f32.mrf.mxu0
      %v2030 = vadd.f32 0.0, %v2029
      %2031 = vmatmul.bf16.gmra.mxu0 %v1957
      %v2032 = vpop.f32.mrf.mxu0
      %v2033 = vadd.f32 0.0, %v2032
      %v2034 = vpop.f32.mrf.mxu0
      %v2035 = vadd.f32 0.0, %v2034
      %2036 = vmatmul.bf16.gmra.mxu0 %v1958
      %v2037 = vpop.f32.mrf.mxu0
      %v2038 = vadd.f32 0.0, %v2037
      %v2039 = vpop.f32.mrf.mxu0
      %v2040 = vadd.f32 0.0, %v2039
      %2041 = vmatmul.bf16.gmra.mxu0 %v1959
      %v2042 = vpop.f32.mrf.mxu0
      %v2043 = vadd.f32 0.0, %v2042
      %v2044 = vpop.f32.mrf.mxu0
      %v2045 = vadd.f32 0.0, %v2044
      %2046 = vdwg.mxu0
      %v2047 = vadd.f32 %v1897, %v2023
      %v2048 = vadd.f32 %v1898, %v2025
      %v2049 = vadd.f32 %v1899, %v2028
      %v2050 = vadd.f32 %v1900, %v2030
      %v2051 = vadd.f32 %v1901, %v2033
      %v2052 = vadd.f32 %v1902, %v2035
      %v2053 = vadd.f32 %v1903, %v2038
      %v2054 = vadd.f32 %v1904, %v2040
      %v2055 = vadd.f32 %v1905, %v2043
      %v2056 = vadd.f32 %v1906, %v2045
      %v2057 = vmax.f32 %v2047, 0.0
      %v2058 = vmax.f32 %v2048, 0.0
      %v2059 = vmax.f32 %v2049, 0.0
      %v2060 = vmax.f32 %v2050, 0.0
      %v2061 = vmax.f32 %v2051, 0.0
      %v2062 = vmax.f32 %v2052, 0.0
      %v2063 = vmax.f32 %v2053, 0.0
      %v2064 = vmax.f32 %v2054, 0.0
      %v2065 = vmax.f32 %v2055, 0.0
      %v2066 = vmax.f32 %v2056, 0.0
      %2067 = vst [vmem:[%s329] sm:$0xff] %v2057
      %2068 = vst [vmem:[%s329 + $0x8] sm:$0xff] %v2058
      %2069 = vst [vmem:[%s329 + $0x10] sm:$0xff] %v2059
      %2070 = vst [vmem:[%s329 + $0x18] sm:$0xff] %v2060
      %2071 = vst [vmem:[%s329 + $0x20] sm:$0xff] %v2061
      %2072 = vst [vmem:[%s329 + $0x28] sm:$0xff] %v2062
      %2073 = vst [vmem:[%s329 + $0x30] sm:$0xff] %v2063
      %2074 = vst [vmem:[%s329 + $0x38] sm:$0xff] %v2064
      %2075 = vst [vmem:[%s329 + $0x40] sm:$0xff] %v2065
      %2076 = vst [vmem:[%s329 + $0x48] sm:$0xff] %v2066
      %s2077 = smul.u32 10, %s23
      %p2078 = scmp.lt.s32.totalorder %s21, 1
      %s2079 = scalar_select %p2078, %s21, 1
      %p2080 = scmp.lt.s32.totalorder %s2077, 9
      %s2081 = scalar_select %p2080, %s2077, 9
      %p2082 = scmp.lt.s32.totalorder %s22, 0
      %s2083 = scalar_select %p2082, %s22, 0
      %s2084 = sadd.s32 %s2083, %s2081
      %s2085 = smul.addr %s2079, 10
      %s2086 = sadd.s32 %s2084, %s2085
      %s2087 = smul.addr %s2086, 8
      %s2088 = scalar_lea.vmem %s5, %s2087
      // Predicated region
      $region41: #{resblock_forward.3} parent=39 // pred_check
        %p2089 = pneg %p187
      $region42: #{resblock_forward.3} parent=39 // pred_check_branch
        %2091 = sbr.rel (%p2089) target = $region44
      $region43: #{resblock_forward.3} parent=39 // pred_region
        %s2092 = smul.u32 10, %s23
      $region44: #{resblock_forward.3} parent=39 // pred_fallthru
        _
    $region40: #{resblock_forward.3} parent=5 // pred_fallthru
      _
    %p2093 = scmp.le.s32.totalorder 2, %s11
    // Predicated region
    $region45: #{resblock_forward.3} parent=5 // pred_check
      %p2094 = pneg %p2093
    $region46: #{resblock_forward.3} parent=5 // pred_check_branch
      %2096 = sbr.rel (%p2094) target = $region48
    $region47: #{resblock_forward.3} parent=5 // pred_region
      %s2097 = ssub.s32 %s11, 2
      // Predicated region
      $region49: #{resblock_forward.3} parent=47 // pred_check
        %p2098 = pneg %p193
      $region50: #{resblock_forward.3} parent=47 // pred_check_branch
        %2100 = sbr.rel (%p2098) target = $region52
      $region51: #{resblock_forward.3} parent=47 // pred_region
        %s2101 = smul.u32 10, %s26
        %p2102 = scmp.lt.s32.totalorder %s24, 1
        %s2103 = scalar_select %p2102, %s24, 1
        %p2104 = scmp.lt.s32.totalorder %s2101, 9
        %s2105 = scalar_select %p2104, %s2101, 9
        %p2106 = scmp.lt.s32.totalorder %s25, 0
        %s2107 = scalar_select %p2106, %s25, 0
        %s2108 = sadd.s32 %s2107, %s2105
        %s2109 = smul.addr %s2103, 10
        %s2110 = sadd.s32 %s2108, %s2109
        %s2111 = smul.addr %s2110, 8
        %s2112 = scalar_lea.vmem %s5, %s2111
      $region52: #{resblock_forward.3} parent=47 // pred_fallthru
        _
    $region48: #{resblock_forward.3} parent=5 // pred_fallthru
      _
  $region6: #{resblock_forward.3} parent=0 // loop_footer
    %s15 = sadd.s32 1, %s11
  $region7: #{resblock_forward.3} parent=0 // loop_footer_branch
    %10 = sbr.rel target = $region3
  $region8: #{resblock_forward.3} parent=0 // loop_exit
    _

</llo_original>
